<compile_context>
chip_gen: v6e
topology: v6e:2x2x1
jax: 0.10.0
libtpu: 0.0.40
codegen_flags: <defaults>
</compile_context>

<pallas_src>
import math

import jax
import jax.numpy as jnp
from jax import lax
from jax.experimental import pallas as pl
from jax.experimental.pallas import tpu as pltpu


def make_mha_kernel(emb_size: int, num_heads: int, block_q: int, compute_dtype):
    D = emb_size // num_heads
    inv_scale = 1.0 / (emb_size ** 0.5)  # ViT-style sqrt(emb_size), NOT sqrt(head_dim)

    def kernel(x_ref, wq_ref, bq_ref, wk_ref, bk_ref, wv_ref, bv_ref,
               wo_ref, bo_ref, o_ref, k_scr, v_scr):
        bblk, n, e = x_ref.shape
        tq = block_q
        qi = pl.program_id(1)
        cdt = compute_dtype  # MXU operand dtype (bf16-friendly); accumulation stays f32

        nt = (((1,), (1,)), ((), ()))  # contract last dims of both: y = x @ W_h.T

        # ---- K/V projection: once per batch-block, cached across Q-tiles. ----
        @pl.when(qi == 0)
        def _project_kv():
            xkv2 = x_ref[...].reshape(bblk * n, e)

            def fill(h, carry):
                row0 = pl.multiple_of(h * D, D)
                k_h = lax.dot_general(xkv2, wk_ref[pl.ds(row0, D), :], nt,
                                      preferred_element_type=jnp.float32)
                k_h = k_h + bk_ref[h].astype(jnp.float32)
                v_h = lax.dot_general(xkv2, wv_ref[pl.ds(row0, D), :], nt,
                                      preferred_element_type=jnp.float32)
                v_h = v_h + bv_ref[h].astype(jnp.float32)
                k_scr[h] = k_h.astype(cdt).reshape(bblk, n, D)
                v_scr[h] = v_h.astype(cdt).reshape(bblk, n, D)
                return carry

            lax.fori_loop(0, num_heads, fill, 0, unroll=True)

        # ---- Q rows of this tile, sliced from the single x block. ----
        q0 = pl.multiple_of(qi * tq, tq)
        xq2 = x_ref[:, pl.ds(q0, tq), :].reshape(bblk * tq, e)

        # ---- All H heads per grid step; per-head out-projections accumulate
        #      in f32 registers and are written once. ----
        def head_body(h, acc):
            row0 = pl.multiple_of(h * D, D)
            q_h = lax.dot_general(xq2, wq_ref[pl.ds(row0, D), :], nt,
                                  preferred_element_type=jnp.float32)
            # fold the 1/sqrt(E) softmax scale into Q (D-wide, not (N,N)-wide)
            q_h = (q_h + bq_ref[h].astype(jnp.float32)) * inv_scale
            q_h = q_h.astype(cdt).reshape(bblk, tq, D)
            k_h = k_scr[h]
            v_h = v_scr[h]

            # energy = einsum('bhqd,bhkd->bhqk') for this head (no k.T materialized)
            energy = jnp.einsum("bqd,bkd->bqk", q_h, k_h,
                                preferred_element_type=jnp.float32)
            # Exact softmax in f32 (the approx EUP reciprocal was the numerics bug).
            # TODO(synk): optional bf16 exp path on v6e/v7x (~2x EUP) relaxes numerics.
            m = jnp.max(energy, axis=-1, keepdims=True)
            p = jnp.exp(energy - m)
            att = p / jnp.sum(p, axis=-1, keepdims=True)

            out_h = jnp.einsum("bqk,bkd->bqd", att.astype(cdt), v_h,
                               preferred_element_type=jnp.float32)
            proj_h = lax.dot_general(out_h.astype(cdt).reshape(bblk * tq, D),
                                     wo_ref[pl.ds(row0, D), :],
                                     (((1,), (0,)), ((), ())),
                                     preferred_element_type=jnp.float32)
            return acc + proj_h

        acc0 = jnp.zeros((bblk * tq, e), jnp.float32)
        acc = lax.fori_loop(0, num_heads, head_body, acc0, unroll=True)

        y = acc + bo_ref[...].astype(jnp.float32)
        o_ref[...] = y.reshape(bblk, tq, e).astype(o_ref.dtype)

    return kernel


def multi_head_attention(x, params, *, num_heads, block_b=None, block_q=None):
    """x: (B, N, E).  params: wq/wk/wv (out,in), wo (in,out), biases (E,)."""
    B, N, E = x.shape
    H = num_heads
    assert E % H == 0
    D = E // H

    itemsize = jnp.dtype(x.dtype).itemsize
    sub = {4: 8, 2: 16, 1: 32}.get(itemsize, 8)  # sublane packing per dtype

    # Defaults keep >= 2 "parallel" grid iterations so both v7x TCs get work.
    BBLK = (1 if B > 1 else B) if block_b is None else block_b
    TQ = N if block_q is None else block_q
    assert B % BBLK == 0 and N % TQ == 0
    assert N % sub == 0 and TQ % sub == 0, "seq / Q-tile must match sublane packing"
    assert D % 8 == 0, "head_dim must be a multiple of 8 for aligned weight-row slices"

    # Biases reshaped so each ref is one full, VMEM-resident block.
    bq = params["bq"].reshape(H, 1, D)
    bk = params["bk"].reshape(H, 1, D)
    bv = params["bv"].reshape(H, 1, D)
    bo = params["bo"].reshape(1, E)

    kernel = make_mha_kernel(E, H, TQ, x.dtype)
    grid = (B // BBLK, N // TQ)

    # Full (E,E) weight blocks with constant index maps: fetched exactly once.
    # TODO(synk): for very large E (4*E^2*itemsize ~ VMEM budget), fall back to
    # per-head streamed (D, E) weight blocks.
    w_spec = pl.BlockSpec((E, E), lambda bi, qi: (0, 0))
    b_spec = pl.BlockSpec((H, 1, D), lambda bi, qi: (0, 0, 0))
    bo_spec = pl.BlockSpec((1, E), lambda bi, qi: (0, 0))
    x_spec = pl.BlockSpec((BBLK, N, E), lambda bi, qi: (bi, 0, 0))  # x passed once
    o_spec = pl.BlockSpec((BBLK, TQ, E), lambda bi, qi: (bi, qi, 0))

    # VMEM limit per generation (v5e/v6e: 128 MiB physical, v7x: 64 MiB).
    try:
        vmem_cap = pltpu.get_tpu_info().vmem_capacity_bytes
    except Exception:
        vmem_cap = 64 * 1024 * 1024
    vmem_limit = min(int(0.75 * vmem_cap), 96 * 1024 * 1024)

    flops = 8 * B * N * E * E + 4 * B * N * N * E
    transcendentals = B * H * N * N
    bytes_accessed = (2 * B * N * E + 4 * E * E + 6 * E) * itemsize

    return pl.pallas_call(
        kernel,
        out_shape=jax.ShapeDtypeStruct((B, N, E), x.dtype),
        grid_spec=pltpu.PrefetchScalarGridSpec(
            num_scalar_prefetch=0,
            grid=grid,
            in_specs=[
                x_spec,
                w_spec, b_spec,   # Wq, bq
                w_spec, b_spec,   # Wk, bk
                w_spec, b_spec,   # Wv, bv
                w_spec, bo_spec,  # Wo, bo
            ],
            out_specs=o_spec,
            scratch_shapes=[
                pltpu.VMEM((H, BBLK, N, D), x.dtype),  # cached projected K per head
                pltpu.VMEM((H, BBLK, N, D), x.dtype),  # cached projected V per head
            ],
        ),
        compiler_params=pltpu.CompilerParams(
            dimension_semantics=("parallel", "arbitrary"),
            vmem_limit_bytes=vmem_limit,
        ),
        cost_estimate=pl.CostEstimate(
            flops=flops,
            transcendentals=transcendentals,
            bytes_accessed=bytes_accessed,
        ),
    )(x,
      params["wq"], bq,
      params["wk"], bk,
      params["wv"], bv,
      params["wo"], bo)


def reference_mha(x, params, *, num_heads):
    """Pure-JAX reference matching the PyTorch forward (mask=None, eval mode)."""
    B, N, E = x.shape
    D = E // num_heads

    def split_heads(t):  # (B, N, E) -> (B, H, N, D)
        return t.reshape(B, N, num_heads, D).transpose(0, 2, 1, 3)

    q = split_heads(x @ params["wq"].T + params["bq"])
    k = split_heads(x @ params["wk"].T + params["bk"])
    v = split_heads(x @ params["wv"].T + params["bv"])

    energy = jnp.einsum("bhqd,bhkd->bhqk", q, k)
    att = jax.nn.softmax(energy / (E ** 0.5), axis=-1)
    out = jnp.einsum("bhal,bhlv->bhav", att, v)
    out = out.transpose(0, 2, 1, 3).reshape(B, N, E)
    return out @ params["wo"] + params["bo"]


def init_params(key, emb_size):
    keys = jax.random.split(key, 8)
    scale = 1.0 / math.sqrt(emb_size)
    p = {}
    for i, n in enumerate(["q", "k", "v", "o"]):
        p[f"w{n}"] = (jax.random.normal(keys[2 * i], (emb_size, emb_size),
                                        jnp.float32) * scale)
        p[f"b{n}"] = (jax.random.normal(keys[2 * i + 1], (emb_size,),
                                        jnp.float32) * scale)
    return p


if __name__ == "__main__":
    B, N, E, H = 4, 16, 32, 4          # batch, seq, emb_size, num_heads (head_dim=8)
    key = jax.random.PRNGKey(0)
    kx, kp = jax.random.split(key)

    x = jax.random.normal(kx, (B, N, E), jnp.float32)
    params = init_params(kp, E)

    # grid = (2 batch-blocks, 2 Q-tiles); exercises the cached-K/V reuse path.
    out = multi_head_attention(x, params, num_heads=H, block_b=2, block_q=8)
    out = jax.block_until_ready(out)

    ref = reference_mha(x, params, num_heads=H)
    assert out.shape == (B, N, E)
    err = float(jnp.max(jnp.abs(out - ref)))
    assert jnp.allclose(out, ref, atol=2e-3, rtol=2e-3), err

    print("KERNEL_OK")
</pallas_src>

<mosaic_0001>
module attributes {stable_mosaic.version = 11 : i64} {
  func.func @kernel(%arg0: i32, %arg1: i32, %arg2: memref<2x16x32xf32, #tpu.memory_space<vmem>>, %arg3: memref<32x32xf32, #tpu.memory_space<vmem>>, %arg4: memref<4x1x8xf32, #tpu.memory_space<vmem>>, %arg5: memref<32x32xf32, #tpu.memory_space<vmem>>, %arg6: memref<4x1x8xf32, #tpu.memory_space<vmem>>, %arg7: memref<32x32xf32, #tpu.memory_space<vmem>>, %arg8: memref<4x1x8xf32, #tpu.memory_space<vmem>>, %arg9: memref<32x32xf32, #tpu.memory_space<vmem>>, %arg10: memref<1x32xf32, #tpu.memory_space<vmem>>, %arg11: memref<2x8x32xf32, #tpu.memory_space<vmem>>, %arg12: memref<4x2x16x8xf32, #tpu.memory_space<vmem>>, %arg13: memref<4x2x16x8xf32, #tpu.memory_space<vmem>>) attributes {dimension_semantics = [#tpu.dimension_semantics<parallel>, #tpu.dimension_semantics<arbitrary>], iteration_bounds = array<i64: 2, 2>, scalar_prefetch = 0 : i64, scratch_operands = 2 : i64, tpu.core_type = #tpu.core_type<tc>, window_params = [{transform_indices = @transform_0, window_bounds = array<i64: 2, 16, 32>}, {pipeline_mode = #tpu.pipeline_mode<synchronous>, transform_indices = @transform_1, window_bounds = array<i64: 32, 32>}, {pipeline_mode = #tpu.pipeline_mode<synchronous>, transform_indices = @transform_2, window_bounds = array<i64: 4, 1, 8>}, {pipeline_mode = #tpu.pipeline_mode<synchronous>, transform_indices = @transform_3, window_bounds = array<i64: 32, 32>}, {pipeline_mode = #tpu.pipeline_mode<synchronous>, transform_indices = @transform_4, window_bounds = array<i64: 4, 1, 8>}, {pipeline_mode = #tpu.pipeline_mode<synchronous>, transform_indices = @transform_5, window_bounds = array<i64: 32, 32>}, {pipeline_mode = #tpu.pipeline_mode<synchronous>, transform_indices = @transform_6, window_bounds = array<i64: 4, 1, 8>}, {pipeline_mode = #tpu.pipeline_mode<synchronous>, transform_indices = @transform_7, window_bounds = array<i64: 32, 32>}, {pipeline_mode = #tpu.pipeline_mode<synchronous>, transform_indices = @transform_8, window_bounds = array<i64: 1, 32>}, {transform_indices = @transform_9, window_bounds = array<i64: 2, 8, 32>}]} {
    %c0_i32 = arith.constant 0 : i32
    %0 = arith.cmpi eq, %arg1, %c0_i32 : i32
    %1 = arith.extui %0 : i1 to i32
    %c0_i32_0 = arith.constant 0 : i32
    %2 = arith.cmpi ne, %1, %c0_i32_0 : i32
    scf.if %2 {
      %c0_80 = arith.constant 0 : index
      %c0_81 = arith.constant 0 : index
      %c0_82 = arith.constant 0 : index
      %154 = vector.load %arg2[%c0_80, %c0_81, %c0_82] : memref<2x16x32xf32, #tpu.memory_space<vmem>>, vector<2x16x32xf32>
      %155 = vector.shape_cast %154 : vector<2x16x32xf32> to vector<32x32xf32>
      %c0_i32_83 = arith.constant 0 : i32
      %c8_i32_84 = arith.constant 8 : i32
      %156 = arith.muli %c0_i32_83, %c8_i32_84 : i32
      %157 = tpu.assume_multiple %156, 8 : i32
      %158 = arith.index_cast %157 : i32 to index
      %c0_85 = arith.constant 0 : index
      %159 = vector.load %arg5[%158, %c0_85] : memref<32x32xf32, #tpu.memory_space<vmem>>, vector<8x32xf32>
      %cst_86 = arith.constant dense<0.000000e+00> : vector<32x8xf32>
      %160 = tpu.matmul %155, %159, %cst_86 {dimension_numbers = #tpu.dot_dimension_numbers<[1], [1], [0], [0], [0, 0, 1, 0], [], []>} : vector<32x32xf32>, vector<8x32xf32>, vector<32x8xf32> -> vector<32x8xf32>
      %161 = arith.index_cast %c0_i32_83 : i32 to index
      %c0_87 = arith.constant 0 : index
      %c0_88 = arith.constant 0 : index
      %162 = vector.load %arg6[%161, %c0_87, %c0_88] : memref<4x1x8xf32, #tpu.memory_space<vmem>>, vector<1x1x8xf32>
      %163 = vector.shape_cast %162 : vector<1x1x8xf32> to vector<1x8xf32>
      %164 = vector.broadcast %163 : vector<1x8xf32> to vector<32x8xf32>
      %165 = arith.addf %160, %164 : vector<32x8xf32>
      %166 = arith.index_cast %157 : i32 to index
      %c0_89 = arith.constant 0 : index
      %167 = vector.load %arg7[%166, %c0_89] : memref<32x32xf32, #tpu.memory_space<vmem>>, vector<8x32xf32>
      %cst_90 = arith.constant dense<0.000000e+00> : vector<32x8xf32>
      %168 = tpu.matmul %155, %167, %cst_90 {dimension_numbers = #tpu.dot_dimension_numbers<[1], [1], [0], [0], [0, 0, 1, 0], [], []>} : vector<32x32xf32>, vector<8x32xf32>, vector<32x8xf32> -> vector<32x8xf32>
      %169 = arith.index_cast %c0_i32_83 : i32 to index
      %c0_91 = arith.constant 0 : index
      %c0_92 = arith.constant 0 : index
      %170 = vector.load %arg8[%169, %c0_91, %c0_92] : memref<4x1x8xf32, #tpu.memory_space<vmem>>, vector<1x1x8xf32>
      %171 = vector.shape_cast %170 : vector<1x1x8xf32> to vector<1x8xf32>
      %172 = vector.broadcast %171 : vector<1x8xf32> to vector<32x8xf32>
      %173 = arith.addf %168, %172 : vector<32x8xf32>
      %174 = vector.shape_cast %165 : vector<32x8xf32> to vector<2x16x8xf32>
      %175 = arith.index_cast %c0_i32_83 : i32 to index
      %c0_93 = arith.constant 0 : index
      %c0_94 = arith.constant 0 : index
      %c0_95 = arith.constant 0 : index
      %176 = vector.load %arg12[%175, %c0_93, %c0_94, %c0_95] : memref<4x2x16x8xf32, #tpu.memory_space<vmem>>, vector<1x2x16x8xf32>
      %177 = vector.shape_cast %176 : vector<1x2x16x8xf32> to vector<2x16x8xf32>
      %178 = vector.shape_cast %174 : vector<2x16x8xf32> to vector<1x2x16x8xf32>
      tpu.vector_store %arg12[%175, %c0_93, %c0_94, %c0_95], %178 {strides = array<i32>} : memref<4x2x16x8xf32, #tpu.memory_space<vmem>>, vector<1x2x16x8xf32>,
      %179 = vector.shape_cast %173 : vector<32x8xf32> to vector<2x16x8xf32>
      %180 = arith.index_cast %c0_i32_83 : i32 to index
      %c0_96 = arith.constant 0 : index
      %c0_97 = arith.constant 0 : index
      %c0_98 = arith.constant 0 : index
      %181 = vector.load %arg13[%180, %c0_96, %c0_97, %c0_98] : memref<4x2x16x8xf32, #tpu.memory_space<vmem>>, vector<1x2x16x8xf32>
      %182 = vector.shape_cast %181 : vector<1x2x16x8xf32> to vector<2x16x8xf32>
      %183 = vector.shape_cast %179 : vector<2x16x8xf32> to vector<1x2x16x8xf32>
      tpu.vector_store %arg13[%180, %c0_96, %c0_97, %c0_98], %183 {strides = array<i32>} : memref<4x2x16x8xf32, #tpu.memory_space<vmem>>, vector<1x2x16x8xf32>,
      %c1_i32_99 = arith.constant 1 : i32
      %c8_i32_100 = arith.constant 8 : i32
      %184 = arith.muli %c1_i32_99, %c8_i32_100 : i32
      %185 = tpu.assume_multiple %184, 8 : i32
      %186 = arith.index_cast %185 : i32 to index
      %c0_101 = arith.constant 0 : index
      %187 = vector.load %arg5[%186, %c0_101] : memref<32x32xf32, #tpu.memory_space<vmem>>, vector<8x32xf32>
      %cst_102 = arith.constant dense<0.000000e+00> : vector<32x8xf32>
      %188 = tpu.matmul %155, %187, %cst_102 {dimension_numbers = #tpu.dot_dimension_numbers<[1], [1], [0], [0], [0, 0, 1, 0], [], []>} : vector<32x32xf32>, vector<8x32xf32>, vector<32x8xf32> -> vector<32x8xf32>
      %189 = arith.index_cast %c1_i32_99 : i32 to index
      %c0_103 = arith.constant 0 : index
      %c0_104 = arith.constant 0 : index
      %190 = vector.load %arg6[%189, %c0_103, %c0_104] : memref<4x1x8xf32, #tpu.memory_space<vmem>>, vector<1x1x8xf32>
      %191 = vector.shape_cast %190 : vector<1x1x8xf32> to vector<1x8xf32>
      %192 = vector.broadcast %191 : vector<1x8xf32> to vector<32x8xf32>
      %193 = arith.addf %188, %192 : vector<32x8xf32>
      %194 = arith.index_cast %185 : i32 to index
      %c0_105 = arith.constant 0 : index
      %195 = vector.load %arg7[%194, %c0_105] : memref<32x32xf32, #tpu.memory_space<vmem>>, vector<8x32xf32>
      %cst_106 = arith.constant dense<0.000000e+00> : vector<32x8xf32>
      %196 = tpu.matmul %155, %195, %cst_106 {dimension_numbers = #tpu.dot_dimension_numbers<[1], [1], [0], [0], [0, 0, 1, 0], [], []>} : vector<32x32xf32>, vector<8x32xf32>, vector<32x8xf32> -> vector<32x8xf32>
      %197 = arith.index_cast %c1_i32_99 : i32 to index
      %c0_107 = arith.constant 0 : index
      %c0_108 = arith.constant 0 : index
      %198 = vector.load %arg8[%197, %c0_107, %c0_108] : memref<4x1x8xf32, #tpu.memory_space<vmem>>, vector<1x1x8xf32>
      %199 = vector.shape_cast %198 : vector<1x1x8xf32> to vector<1x8xf32>
      %200 = vector.broadcast %199 : vector<1x8xf32> to vector<32x8xf32>
      %201 = arith.addf %196, %200 : vector<32x8xf32>
      %202 = vector.shape_cast %193 : vector<32x8xf32> to vector<2x16x8xf32>
      %203 = arith.index_cast %c1_i32_99 : i32 to index
      %c0_109 = arith.constant 0 : index
      %c0_110 = arith.constant 0 : index
      %c0_111 = arith.constant 0 : index
      %204 = vector.load %arg12[%203, %c0_109, %c0_110, %c0_111] : memref<4x2x16x8xf32, #tpu.memory_space<vmem>>, vector<1x2x16x8xf32>
      %205 = vector.shape_cast %204 : vector<1x2x16x8xf32> to vector<2x16x8xf32>
      %206 = vector.shape_cast %202 : vector<2x16x8xf32> to vector<1x2x16x8xf32>
      tpu.vector_store %arg12[%203, %c0_109, %c0_110, %c0_111], %206 {strides = array<i32>} : memref<4x2x16x8xf32, #tpu.memory_space<vmem>>, vector<1x2x16x8xf32>,
      %207 = vector.shape_cast %201 : vector<32x8xf32> to vector<2x16x8xf32>
      %208 = arith.index_cast %c1_i32_99 : i32 to index
      %c0_112 = arith.constant 0 : index
      %c0_113 = arith.constant 0 : index
      %c0_114 = arith.constant 0 : index
      %209 = vector.load %arg13[%208, %c0_112, %c0_113, %c0_114] : memref<4x2x16x8xf32, #tpu.memory_space<vmem>>, vector<1x2x16x8xf32>
      %210 = vector.shape_cast %209 : vector<1x2x16x8xf32> to vector<2x16x8xf32>
      %211 = vector.shape_cast %207 : vector<2x16x8xf32> to vector<1x2x16x8xf32>
      tpu.vector_store %arg13[%208, %c0_112, %c0_113, %c0_114], %211 {strides = array<i32>} : memref<4x2x16x8xf32, #tpu.memory_space<vmem>>, vector<1x2x16x8xf32>,
      %c2_i32_115 = arith.constant 2 : i32
      %c8_i32_116 = arith.constant 8 : i32
      %212 = arith.muli %c2_i32_115, %c8_i32_116 : i32
      %213 = tpu.assume_multiple %212, 8 : i32
      %214 = arith.index_cast %213 : i32 to index
      %c0_117 = arith.constant 0 : index
      %215 = vector.load %arg5[%214, %c0_117] : memref<32x32xf32, #tpu.memory_space<vmem>>, vector<8x32xf32>
      %cst_118 = arith.constant dense<0.000000e+00> : vector<32x8xf32>
      %216 = tpu.matmul %155, %215, %cst_118 {dimension_numbers = #tpu.dot_dimension_numbers<[1], [1], [0], [0], [0, 0, 1, 0], [], []>} : vector<32x32xf32>, vector<8x32xf32>, vector<32x8xf32> -> vector<32x8xf32>
      %217 = arith.index_cast %c2_i32_115 : i32 to index
      %c0_119 = arith.constant 0 : index
      %c0_120 = arith.constant 0 : index
      %218 = vector.load %arg6[%217, %c0_119, %c0_120] : memref<4x1x8xf32, #tpu.memory_space<vmem>>, vector<1x1x8xf32>
      %219 = vector.shape_cast %218 : vector<1x1x8xf32> to vector<1x8xf32>
      %220 = vector.broadcast %219 : vector<1x8xf32> to vector<32x8xf32>
      %221 = arith.addf %216, %220 : vector<32x8xf32>
      %222 = arith.index_cast %213 : i32 to index
      %c0_121 = arith.constant 0 : index
      %223 = vector.load %arg7[%222, %c0_121] : memref<32x32xf32, #tpu.memory_space<vmem>>, vector<8x32xf32>
      %cst_122 = arith.constant dense<0.000000e+00> : vector<32x8xf32>
      %224 = tpu.matmul %155, %223, %cst_122 {dimension_numbers = #tpu.dot_dimension_numbers<[1], [1], [0], [0], [0, 0, 1, 0], [], []>} : vector<32x32xf32>, vector<8x32xf32>, vector<32x8xf32> -> vector<32x8xf32>
      %225 = arith.index_cast %c2_i32_115 : i32 to index
      %c0_123 = arith.constant 0 : index
      %c0_124 = arith.constant 0 : index
      %226 = vector.load %arg8[%225, %c0_123, %c0_124] : memref<4x1x8xf32, #tpu.memory_space<vmem>>, vector<1x1x8xf32>
      %227 = vector.shape_cast %226 : vector<1x1x8xf32> to vector<1x8xf32>
      %228 = vector.broadcast %227 : vector<1x8xf32> to vector<32x8xf32>
      %229 = arith.addf %224, %228 : vector<32x8xf32>
      %230 = vector.shape_cast %221 : vector<32x8xf32> to vector<2x16x8xf32>
      %231 = arith.index_cast %c2_i32_115 : i32 to index
      %c0_125 = arith.constant 0 : index
      %c0_126 = arith.constant 0 : index
      %c0_127 = arith.constant 0 : index
      %232 = vector.load %arg12[%231, %c0_125, %c0_126, %c0_127] : memref<4x2x16x8xf32, #tpu.memory_space<vmem>>, vector<1x2x16x8xf32>
      %233 = vector.shape_cast %232 : vector<1x2x16x8xf32> to vector<2x16x8xf32>
      %234 = vector.shape_cast %230 : vector<2x16x8xf32> to vector<1x2x16x8xf32>
      tpu.vector_store %arg12[%231, %c0_125, %c0_126, %c0_127], %234 {strides = array<i32>} : memref<4x2x16x8xf32, #tpu.memory_space<vmem>>, vector<1x2x16x8xf32>,
      %235 = vector.shape_cast %229 : vector<32x8xf32> to vector<2x16x8xf32>
      %236 = arith.index_cast %c2_i32_115 : i32 to index
      %c0_128 = arith.constant 0 : index
      %c0_129 = arith.constant 0 : index
      %c0_130 = arith.constant 0 : index
      %237 = vector.load %arg13[%236, %c0_128, %c0_129, %c0_130] : memref<4x2x16x8xf32, #tpu.memory_space<vmem>>, vector<1x2x16x8xf32>
      %238 = vector.shape_cast %237 : vector<1x2x16x8xf32> to vector<2x16x8xf32>
      %239 = vector.shape_cast %235 : vector<2x16x8xf32> to vector<1x2x16x8xf32>
      tpu.vector_store %arg13[%236, %c0_128, %c0_129, %c0_130], %239 {strides = array<i32>} : memref<4x2x16x8xf32, #tpu.memory_space<vmem>>, vector<1x2x16x8xf32>,
      %c3_i32_131 = arith.constant 3 : i32
      %c8_i32_132 = arith.constant 8 : i32
      %240 = arith.muli %c3_i32_131, %c8_i32_132 : i32
      %241 = tpu.assume_multiple %240, 8 : i32
      %242 = arith.index_cast %241 : i32 to index
      %c0_133 = arith.constant 0 : index
      %243 = vector.load %arg5[%242, %c0_133] : memref<32x32xf32, #tpu.memory_space<vmem>>, vector<8x32xf32>
      %cst_134 = arith.constant dense<0.000000e+00> : vector<32x8xf32>
      %244 = tpu.matmul %155, %243, %cst_134 {dimension_numbers = #tpu.dot_dimension_numbers<[1], [1], [0], [0], [0, 0, 1, 0], [], []>} : vector<32x32xf32>, vector<8x32xf32>, vector<32x8xf32> -> vector<32x8xf32>
      %245 = arith.index_cast %c3_i32_131 : i32 to index
      %c0_135 = arith.constant 0 : index
      %c0_136 = arith.constant 0 : index
      %246 = vector.load %arg6[%245, %c0_135, %c0_136] : memref<4x1x8xf32, #tpu.memory_space<vmem>>, vector<1x1x8xf32>
      %247 = vector.shape_cast %246 : vector<1x1x8xf32> to vector<1x8xf32>
      %248 = vector.broadcast %247 : vector<1x8xf32> to vector<32x8xf32>
      %249 = arith.addf %244, %248 : vector<32x8xf32>
      %250 = arith.index_cast %241 : i32 to index
      %c0_137 = arith.constant 0 : index
      %251 = vector.load %arg7[%250, %c0_137] : memref<32x32xf32, #tpu.memory_space<vmem>>, vector<8x32xf32>
      %cst_138 = arith.constant dense<0.000000e+00> : vector<32x8xf32>
      %252 = tpu.matmul %155, %251, %cst_138 {dimension_numbers = #tpu.dot_dimension_numbers<[1], [1], [0], [0], [0, 0, 1, 0], [], []>} : vector<32x32xf32>, vector<8x32xf32>, vector<32x8xf32> -> vector<32x8xf32>
      %253 = arith.index_cast %c3_i32_131 : i32 to index
      %c0_139 = arith.constant 0 : index
      %c0_140 = arith.constant 0 : index
      %254 = vector.load %arg8[%253, %c0_139, %c0_140] : memref<4x1x8xf32, #tpu.memory_space<vmem>>, vector<1x1x8xf32>
      %255 = vector.shape_cast %254 : vector<1x1x8xf32> to vector<1x8xf32>
      %256 = vector.broadcast %255 : vector<1x8xf32> to vector<32x8xf32>
      %257 = arith.addf %252, %256 : vector<32x8xf32>
      %258 = vector.shape_cast %249 : vector<32x8xf32> to vector<2x16x8xf32>
      %259 = arith.index_cast %c3_i32_131 : i32 to index
      %c0_141 = arith.constant 0 : index
      %c0_142 = arith.constant 0 : index
      %c0_143 = arith.constant 0 : index
      %260 = vector.load %arg12[%259, %c0_141, %c0_142, %c0_143] : memref<4x2x16x8xf32, #tpu.memory_space<vmem>>, vector<1x2x16x8xf32>
      %261 = vector.shape_cast %260 : vector<1x2x16x8xf32> to vector<2x16x8xf32>
      %262 = vector.shape_cast %258 : vector<2x16x8xf32> to vector<1x2x16x8xf32>
      tpu.vector_store %arg12[%259, %c0_141, %c0_142, %c0_143], %262 {strides = array<i32>} : memref<4x2x16x8xf32, #tpu.memory_space<vmem>>, vector<1x2x16x8xf32>,
      %263 = vector.shape_cast %257 : vector<32x8xf32> to vector<2x16x8xf32>
      %264 = arith.index_cast %c3_i32_131 : i32 to index
      %c0_144 = arith.constant 0 : index
      %c0_145 = arith.constant 0 : index
      %c0_146 = arith.constant 0 : index
      %265 = vector.load %arg13[%264, %c0_144, %c0_145, %c0_146] : memref<4x2x16x8xf32, #tpu.memory_space<vmem>>, vector<1x2x16x8xf32>
      %266 = vector.shape_cast %265 : vector<1x2x16x8xf32> to vector<2x16x8xf32>
      %267 = vector.shape_cast %263 : vector<2x16x8xf32> to vector<1x2x16x8xf32>
      tpu.vector_store %arg13[%264, %c0_144, %c0_145, %c0_146], %267 {strides = array<i32>} : memref<4x2x16x8xf32, #tpu.memory_space<vmem>>, vector<1x2x16x8xf32>,
      %c4_i32_147 = arith.constant 4 : i32
    } else {
    }
    %c8_i32 = arith.constant 8 : i32
    %3 = arith.muli %arg1, %c8_i32 : i32
    %4 = tpu.assume_multiple %3, 8 : i32
    %c0 = arith.constant 0 : index
    %5 = arith.index_cast %4 : i32 to index
    %c0_1 = arith.constant 0 : index
    %6 = vector.load %arg2[%c0, %5, %c0_1] : memref<2x16x32xf32, #tpu.memory_space<vmem>>, vector<2x8x32xf32>
    %7 = vector.shape_cast %6 : vector<2x8x32xf32> to vector<16x32xf32>
    %cst = arith.constant 0.000000e+00 : f32
    %8 = vector.broadcast %cst : f32 to vector<16x32xf32>
    %c0_i32_2 = arith.constant 0 : i32
    %c8_i32_3 = arith.constant 8 : i32
    %9 = arith.muli %c0_i32_2, %c8_i32_3 : i32
    %10 = tpu.assume_multiple %9, 8 : i32
    %11 = arith.index_cast %10 : i32 to index
    %c0_4 = arith.constant 0 : index
    %12 = vector.load %arg3[%11, %c0_4] : memref<32x32xf32, #tpu.memory_space<vmem>>, vector<8x32xf32>
    %cst_5 = arith.constant dense<0.000000e+00> : vector<16x8xf32>
    %13 = tpu.matmul %7, %12, %cst_5 {dimension_numbers = #tpu.dot_dimension_numbers<[1], [1], [0], [0], [0, 0, 1, 0], [], []>} : vector<16x32xf32>, vector<8x32xf32>, vector<16x8xf32> -> vector<16x8xf32>
    %14 = arith.index_cast %c0_i32_2 : i32 to index
    %c0_6 = arith.constant 0 : index
    %c0_7 = arith.constant 0 : index
    %15 = vector.load %arg4[%14, %c0_6, %c0_7] : memref<4x1x8xf32, #tpu.memory_space<vmem>>, vector<1x1x8xf32>
    %16 = vector.shape_cast %15 : vector<1x1x8xf32> to vector<1x8xf32>
    %17 = vector.broadcast %16 : vector<1x8xf32> to vector<16x8xf32>
    %18 = arith.addf %13, %17 : vector<16x8xf32>
    %cst_8 = arith.constant 0.176776692 : f32
    %19 = vector.broadcast %cst_8 : f32 to vector<16x8xf32>
    %20 = arith.mulf %18, %19 : vector<16x8xf32>
    %21 = vector.shape_cast %20 : vector<16x8xf32> to vector<2x8x8xf32>
    %22 = arith.index_cast %c0_i32_2 : i32 to index
    %c0_9 = arith.constant 0 : index
    %c0_10 = arith.constant 0 : index
    %c0_11 = arith.constant 0 : index
    %23 = vector.load %arg12[%22, %c0_9, %c0_10, %c0_11] : memref<4x2x16x8xf32, #tpu.memory_space<vmem>>, vector<1x2x16x8xf32>
    %24 = vector.shape_cast %23 : vector<1x2x16x8xf32> to vector<2x16x8xf32>
    %25 = arith.index_cast %c0_i32_2 : i32 to index
    %c0_12 = arith.constant 0 : index
    %c0_13 = arith.constant 0 : index
    %c0_14 = arith.constant 0 : index
    %26 = vector.load %arg13[%25, %c0_12, %c0_13, %c0_14] : memref<4x2x16x8xf32, #tpu.memory_space<vmem>>, vector<1x2x16x8xf32>
    %27 = vector.shape_cast %26 : vector<1x2x16x8xf32> to vector<2x16x8xf32>
    "tpu.trace_start"() <{level = 10 : i32, message = "bqd,bkd->bqk"}> : () -> ()
    %cst_15 = arith.constant dense<0.000000e+00> : vector<2x8x16xf32>
    %28 = tpu.matmul %21, %24, %cst_15 {dimension_numbers = #tpu.dot_dimension_numbers<[2], [2], [1], [1], [0, 0, 0, 1, 1, 1], [0], [0]>} : vector<2x8x8xf32>, vector<2x16x8xf32>, vector<2x8x16xf32> -> vector<2x8x16xf32>
    "tpu.trace_stop"() : () -> ()
    %cst_16 = arith.constant dense<0xFF800000> : vector<2x8xf32>
    %29 = vector.multi_reduction <maximumf>, %28, %cst_16 [2] : vector<2x8x16xf32> to vector<2x8xf32>
    %30 = vector.shape_cast %29 : vector<2x8xf32> to vector<2x8x1xf32>
    %31 = vector.broadcast %30 : vector<2x8x1xf32> to vector<2x8x16xf32>
    %32 = arith.subf %28, %31 : vector<2x8x16xf32>
    %33 = math.exp %32 : vector<2x8x16xf32>
    %cst_17 = arith.constant dense<0.000000e+00> : vector<2x8xf32>
    %34 = vector.multi_reduction <add>, %33, %cst_17 [2] : vector<2x8x16xf32> to vector<2x8xf32>
    %35 = vector.shape_cast %34 : vector<2x8xf32> to vector<2x8x1xf32>
    %36 = vector.broadcast %35 : vector<2x8x1xf32> to vector<2x8x16xf32>
    %37 = arith.divf %33, %36 : vector<2x8x16xf32>
    "tpu.trace_start"() <{level = 10 : i32, message = "bqk,bkd->bqd"}> : () -> ()
    %cst_18 = arith.constant dense<0.000000e+00> : vector<2x8x8xf32>
    %38 = tpu.matmul %37, %27, %cst_18 {dimension_numbers = #tpu.dot_dimension_numbers<[2], [1], [1], [2], [0, 0, 0, 1, 1, 2], [0], [0]>} : vector<2x8x16xf32>, vector<2x16x8xf32>, vector<2x8x8xf32> -> vector<2x8x8xf32>
    "tpu.trace_stop"() : () -> ()
    %39 = vector.shape_cast %38 : vector<2x8x8xf32> to vector<16x8xf32>
    %40 = arith.index_cast %10 : i32 to index
    %c0_19 = arith.constant 0 : index
    %41 = vector.load %arg9[%40, %c0_19] : memref<32x32xf32, #tpu.memory_space<vmem>>, vector<8x32xf32>
    %cst_20 = arith.constant dense<0.000000e+00> : vector<16x32xf32>
    %42 = tpu.matmul %39, %41, %cst_20 {dimension_numbers = #tpu.dot_dimension_numbers<[1], [0], [0], [1], [0, 0, 1, 1], [], []>} : vector<16x8xf32>, vector<8x32xf32>, vector<16x32xf32> -> vector<16x32xf32>
    %43 = arith.addf %8, %42 : vector<16x32xf32>
    %c1_i32 = arith.constant 1 : i32
    %c8_i32_21 = arith.constant 8 : i32
    %44 = arith.muli %c1_i32, %c8_i32_21 : i32
    %45 = tpu.assume_multiple %44, 8 : i32
    %46 = arith.index_cast %45 : i32 to index
    %c0_22 = arith.constant 0 : index
    %47 = vector.load %arg3[%46, %c0_22] : memref<32x32xf32, #tpu.memory_space<vmem>>, vector<8x32xf32>
    %cst_23 = arith.constant dense<0.000000e+00> : vector<16x8xf32>
    %48 = tpu.matmul %7, %47, %cst_23 {dimension_numbers = #tpu.dot_dimension_numbers<[1], [1], [0], [0], [0, 0, 1, 0], [], []>} : vector<16x32xf32>, vector<8x32xf32>, vector<16x8xf32> -> vector<16x8xf32>
    %49 = arith.index_cast %c1_i32 : i32 to index
    %c0_24 = arith.constant 0 : index
    %c0_25 = arith.constant 0 : index
    %50 = vector.load %arg4[%49, %c0_24, %c0_25] : memref<4x1x8xf32, #tpu.memory_space<vmem>>, vector<1x1x8xf32>
    %51 = vector.shape_cast %50 : vector<1x1x8xf32> to vector<1x8xf32>
    %52 = vector.broadcast %51 : vector<1x8xf32> to vector<16x8xf32>
    %53 = arith.addf %48, %52 : vector<16x8xf32>
    %cst_26 = arith.constant 0.176776692 : f32
    %54 = vector.broadcast %cst_26 : f32 to vector<16x8xf32>
    %55 = arith.mulf %53, %54 : vector<16x8xf32>
    %56 = vector.shape_cast %55 : vector<16x8xf32> to vector<2x8x8xf32>
    %57 = arith.index_cast %c1_i32 : i32 to index
    %c0_27 = arith.constant 0 : index
    %c0_28 = arith.constant 0 : index
    %c0_29 = arith.constant 0 : index
    %58 = vector.load %arg12[%57, %c0_27, %c0_28, %c0_29] : memref<4x2x16x8xf32, #tpu.memory_space<vmem>>, vector<1x2x16x8xf32>
    %59 = vector.shape_cast %58 : vector<1x2x16x8xf32> to vector<2x16x8xf32>
    %60 = arith.index_cast %c1_i32 : i32 to index
    %c0_30 = arith.constant 0 : index
    %c0_31 = arith.constant 0 : index
    %c0_32 = arith.constant 0 : index
    %61 = vector.load %arg13[%60, %c0_30, %c0_31, %c0_32] : memref<4x2x16x8xf32, #tpu.memory_space<vmem>>, vector<1x2x16x8xf32>
    %62 = vector.shape_cast %61 : vector<1x2x16x8xf32> to vector<2x16x8xf32>
    "tpu.trace_start"() <{level = 10 : i32, message = "bqd,bkd->bqk"}> : () -> ()
    %cst_33 = arith.constant dense<0.000000e+00> : vector<2x8x16xf32>
    %63 = tpu.matmul %56, %59, %cst_33 {dimension_numbers = #tpu.dot_dimension_numbers<[2], [2], [1], [1], [0, 0, 0, 1, 1, 1], [0], [0]>} : vector<2x8x8xf32>, vector<2x16x8xf32>, vector<2x8x16xf32> -> vector<2x8x16xf32>
    "tpu.trace_stop"() : () -> ()
    %cst_34 = arith.constant dense<0xFF800000> : vector<2x8xf32>
    %64 = vector.multi_reduction <maximumf>, %63, %cst_34 [2] : vector<2x8x16xf32> to vector<2x8xf32>
    %65 = vector.shape_cast %64 : vector<2x8xf32> to vector<2x8x1xf32>
    %66 = vector.broadcast %65 : vector<2x8x1xf32> to vector<2x8x16xf32>
    %67 = arith.subf %63, %66 : vector<2x8x16xf32>
    %68 = math.exp %67 : vector<2x8x16xf32>
    %cst_35 = arith.constant dense<0.000000e+00> : vector<2x8xf32>
    %69 = vector.multi_reduction <add>, %68, %cst_35 [2] : vector<2x8x16xf32> to vector<2x8xf32>
    %70 = vector.shape_cast %69 : vector<2x8xf32> to vector<2x8x1xf32>
    %71 = vector.broadcast %70 : vector<2x8x1xf32> to vector<2x8x16xf32>
    %72 = arith.divf %68, %71 : vector<2x8x16xf32>
    "tpu.trace_start"() <{level = 10 : i32, message = "bqk,bkd->bqd"}> : () -> ()
    %cst_36 = arith.constant dense<0.000000e+00> : vector<2x8x8xf32>
    %73 = tpu.matmul %72, %62, %cst_36 {dimension_numbers = #tpu.dot_dimension_numbers<[2], [1], [1], [2], [0, 0, 0, 1, 1, 2], [0], [0]>} : vector<2x8x16xf32>, vector<2x16x8xf32>, vector<2x8x8xf32> -> vector<2x8x8xf32>
    "tpu.trace_stop"() : () -> ()
    %74 = vector.shape_cast %73 : vector<2x8x8xf32> to vector<16x8xf32>
    %75 = arith.index_cast %45 : i32 to index
    %c0_37 = arith.constant 0 : index
    %76 = vector.load %arg9[%75, %c0_37] : memref<32x32xf32, #tpu.memory_space<vmem>>, vector<8x32xf32>
    %cst_38 = arith.constant dense<0.000000e+00> : vector<16x32xf32>
    %77 = tpu.matmul %74, %76, %cst_38 {dimension_numbers = #tpu.dot_dimension_numbers<[1], [0], [0], [1], [0, 0, 1, 1], [], []>} : vector<16x8xf32>, vector<8x32xf32>, vector<16x32xf32> -> vector<16x32xf32>
    %78 = arith.addf %43, %77 : vector<16x32xf32>
    %c2_i32 = arith.constant 2 : i32
    %c8_i32_39 = arith.constant 8 : i32
    %79 = arith.muli %c2_i32, %c8_i32_39 : i32
    %80 = tpu.assume_multiple %79, 8 : i32
    %81 = arith.index_cast %80 : i32 to index
    %c0_40 = arith.constant 0 : index
    %82 = vector.load %arg3[%81, %c0_40] : memref<32x32xf32, #tpu.memory_space<vmem>>, vector<8x32xf32>
    %cst_41 = arith.constant dense<0.000000e+00> : vector<16x8xf32>
    %83 = tpu.matmul %7, %82, %cst_41 {dimension_numbers = #tpu.dot_dimension_numbers<[1], [1], [0], [0], [0, 0, 1, 0], [], []>} : vector<16x32xf32>, vector<8x32xf32>, vector<16x8xf32> -> vector<16x8xf32>
    %84 = arith.index_cast %c2_i32 : i32 to index
    %c0_42 = arith.constant 0 : index
    %c0_43 = arith.constant 0 : index
    %85 = vector.load %arg4[%84, %c0_42, %c0_43] : memref<4x1x8xf32, #tpu.memory_space<vmem>>, vector<1x1x8xf32>
    %86 = vector.shape_cast %85 : vector<1x1x8xf32> to vector<1x8xf32>
    %87 = vector.broadcast %86 : vector<1x8xf32> to vector<16x8xf32>
    %88 = arith.addf %83, %87 : vector<16x8xf32>
    %cst_44 = arith.constant 0.176776692 : f32
    %89 = vector.broadcast %cst_44 : f32 to vector<16x8xf32>
    %90 = arith.mulf %88, %89 : vector<16x8xf32>
    %91 = vector.shape_cast %90 : vector<16x8xf32> to vector<2x8x8xf32>
    %92 = arith.index_cast %c2_i32 : i32 to index
    %c0_45 = arith.constant 0 : index
    %c0_46 = arith.constant 0 : index
    %c0_47 = arith.constant 0 : index
    %93 = vector.load %arg12[%92, %c0_45, %c0_46, %c0_47] : memref<4x2x16x8xf32, #tpu.memory_space<vmem>>, vector<1x2x16x8xf32>
    %94 = vector.shape_cast %93 : vector<1x2x16x8xf32> to vector<2x16x8xf32>
    %95 = arith.index_cast %c2_i32 : i32 to index
    %c0_48 = arith.constant 0 : index
    %c0_49 = arith.constant 0 : index
    %c0_50 = arith.constant 0 : index
    %96 = vector.load %arg13[%95, %c0_48, %c0_49, %c0_50] : memref<4x2x16x8xf32, #tpu.memory_space<vmem>>, vector<1x2x16x8xf32>
    %97 = vector.shape_cast %96 : vector<1x2x16x8xf32> to vector<2x16x8xf32>
    "tpu.trace_start"() <{level = 10 : i32, message = "bqd,bkd->bqk"}> : () -> ()
    %cst_51 = arith.constant dense<0.000000e+00> : vector<2x8x16xf32>
    %98 = tpu.matmul %91, %94, %cst_51 {dimension_numbers = #tpu.dot_dimension_numbers<[2], [2], [1], [1], [0, 0, 0, 1, 1, 1], [0], [0]>} : vector<2x8x8xf32>, vector<2x16x8xf32>, vector<2x8x16xf32> -> vector<2x8x16xf32>
    "tpu.trace_stop"() : () -> ()
    %cst_52 = arith.constant dense<0xFF800000> : vector<2x8xf32>
    %99 = vector.multi_reduction <maximumf>, %98, %cst_52 [2] : vector<2x8x16xf32> to vector<2x8xf32>
    %100 = vector.shape_cast %99 : vector<2x8xf32> to vector<2x8x1xf32>
    %101 = vector.broadcast %100 : vector<2x8x1xf32> to vector<2x8x16xf32>
    %102 = arith.subf %98, %101 : vector<2x8x16xf32>
    %103 = math.exp %102 : vector<2x8x16xf32>
    %cst_53 = arith.constant dense<0.000000e+00> : vector<2x8xf32>
    %104 = vector.multi_reduction <add>, %103, %cst_53 [2] : vector<2x8x16xf32> to vector<2x8xf32>
    %105 = vector.shape_cast %104 : vector<2x8xf32> to vector<2x8x1xf32>
    %106 = vector.broadcast %105 : vector<2x8x1xf32> to vector<2x8x16xf32>
    %107 = arith.divf %103, %106 : vector<2x8x16xf32>
    "tpu.trace_start"() <{level = 10 : i32, message = "bqk,bkd->bqd"}> : () -> ()
    %cst_54 = arith.constant dense<0.000000e+00> : vector<2x8x8xf32>
    %108 = tpu.matmul %107, %97, %cst_54 {dimension_numbers = #tpu.dot_dimension_numbers<[2], [1], [1], [2], [0, 0, 0, 1, 1, 2], [0], [0]>} : vector<2x8x16xf32>, vector<2x16x8xf32>, vector<2x8x8xf32> -> vector<2x8x8xf32>
    "tpu.trace_stop"() : () -> ()
    %109 = vector.shape_cast %108 : vector<2x8x8xf32> to vector<16x8xf32>
    %110 = arith.index_cast %80 : i32 to index
    %c0_55 = arith.constant 0 : index
    %111 = vector.load %arg9[%110, %c0_55] : memref<32x32xf32, #tpu.memory_space<vmem>>, vector<8x32xf32>
    %cst_56 = arith.constant dense<0.000000e+00> : vector<16x32xf32>
    %112 = tpu.matmul %109, %111, %cst_56 {dimension_numbers = #tpu.dot_dimension_numbers<[1], [0], [0], [1], [0, 0, 1, 1], [], []>} : vector<16x8xf32>, vector<8x32xf32>, vector<16x32xf32> -> vector<16x32xf32>
    %113 = arith.addf %78, %112 : vector<16x32xf32>
    %c3_i32 = arith.constant 3 : i32
    %c8_i32_57 = arith.constant 8 : i32
    %114 = arith.muli %c3_i32, %c8_i32_57 : i32
    %115 = tpu.assume_multiple %114, 8 : i32
    %116 = arith.index_cast %115 : i32 to index
    %c0_58 = arith.constant 0 : index
    %117 = vector.load %arg3[%116, %c0_58] : memref<32x32xf32, #tpu.memory_space<vmem>>, vector<8x32xf32>
    %cst_59 = arith.constant dense<0.000000e+00> : vector<16x8xf32>
    %118 = tpu.matmul %7, %117, %cst_59 {dimension_numbers = #tpu.dot_dimension_numbers<[1], [1], [0], [0], [0, 0, 1, 0], [], []>} : vector<16x32xf32>, vector<8x32xf32>, vector<16x8xf32> -> vector<16x8xf32>
    %119 = arith.index_cast %c3_i32 : i32 to index
    %c0_60 = arith.constant 0 : index
    %c0_61 = arith.constant 0 : index
    %120 = vector.load %arg4[%119, %c0_60, %c0_61] : memref<4x1x8xf32, #tpu.memory_space<vmem>>, vector<1x1x8xf32>
    %121 = vector.shape_cast %120 : vector<1x1x8xf32> to vector<1x8xf32>
    %122 = vector.broadcast %121 : vector<1x8xf32> to vector<16x8xf32>
    %123 = arith.addf %118, %122 : vector<16x8xf32>
    %cst_62 = arith.constant 0.176776692 : f32
    %124 = vector.broadcast %cst_62 : f32 to vector<16x8xf32>
    %125 = arith.mulf %123, %124 : vector<16x8xf32>
    %126 = vector.shape_cast %125 : vector<16x8xf32> to vector<2x8x8xf32>
    %127 = arith.index_cast %c3_i32 : i32 to index
    %c0_63 = arith.constant 0 : index
    %c0_64 = arith.constant 0 : index
    %c0_65 = arith.constant 0 : index
    %128 = vector.load %arg12[%127, %c0_63, %c0_64, %c0_65] : memref<4x2x16x8xf32, #tpu.memory_space<vmem>>, vector<1x2x16x8xf32>
    %129 = vector.shape_cast %128 : vector<1x2x16x8xf32> to vector<2x16x8xf32>
    %130 = arith.index_cast %c3_i32 : i32 to index
    %c0_66 = arith.constant 0 : index
    %c0_67 = arith.constant 0 : index
    %c0_68 = arith.constant 0 : index
    %131 = vector.load %arg13[%130, %c0_66, %c0_67, %c0_68] : memref<4x2x16x8xf32, #tpu.memory_space<vmem>>, vector<1x2x16x8xf32>
    %132 = vector.shape_cast %131 : vector<1x2x16x8xf32> to vector<2x16x8xf32>
    "tpu.trace_start"() <{level = 10 : i32, message = "bqd,bkd->bqk"}> : () -> ()
    %cst_69 = arith.constant dense<0.000000e+00> : vector<2x8x16xf32>
    %133 = tpu.matmul %126, %129, %cst_69 {dimension_numbers = #tpu.dot_dimension_numbers<[2], [2], [1], [1], [0, 0, 0, 1, 1, 1], [0], [0]>} : vector<2x8x8xf32>, vector<2x16x8xf32>, vector<2x8x16xf32> -> vector<2x8x16xf32>
    "tpu.trace_stop"() : () -> ()
    %cst_70 = arith.constant dense<0xFF800000> : vector<2x8xf32>
    %134 = vector.multi_reduction <maximumf>, %133, %cst_70 [2] : vector<2x8x16xf32> to vector<2x8xf32>
    %135 = vector.shape_cast %134 : vector<2x8xf32> to vector<2x8x1xf32>
    %136 = vector.broadcast %135 : vector<2x8x1xf32> to vector<2x8x16xf32>
    %137 = arith.subf %133, %136 : vector<2x8x16xf32>
    %138 = math.exp %137 : vector<2x8x16xf32>
    %cst_71 = arith.constant dense<0.000000e+00> : vector<2x8xf32>
    %139 = vector.multi_reduction <add>, %138, %cst_71 [2] : vector<2x8x16xf32> to vector<2x8xf32>
    %140 = vector.shape_cast %139 : vector<2x8xf32> to vector<2x8x1xf32>
    %141 = vector.broadcast %140 : vector<2x8x1xf32> to vector<2x8x16xf32>
    %142 = arith.divf %138, %141 : vector<2x8x16xf32>
    "tpu.trace_start"() <{level = 10 : i32, message = "bqk,bkd->bqd"}> : () -> ()
    %cst_72 = arith.constant dense<0.000000e+00> : vector<2x8x8xf32>
    %143 = tpu.matmul %142, %132, %cst_72 {dimension_numbers = #tpu.dot_dimension_numbers<[2], [1], [1], [2], [0, 0, 0, 1, 1, 2], [0], [0]>} : vector<2x8x16xf32>, vector<2x16x8xf32>, vector<2x8x8xf32> -> vector<2x8x8xf32>
    "tpu.trace_stop"() : () -> ()
    %144 = vector.shape_cast %143 : vector<2x8x8xf32> to vector<16x8xf32>
    %145 = arith.index_cast %115 : i32 to index
    %c0_73 = arith.constant 0 : index
    %146 = vector.load %arg9[%145, %c0_73] : memref<32x32xf32, #tpu.memory_space<vmem>>, vector<8x32xf32>
    %cst_74 = arith.constant dense<0.000000e+00> : vector<16x32xf32>
    %147 = tpu.matmul %144, %146, %cst_74 {dimension_numbers = #tpu.dot_dimension_numbers<[1], [0], [0], [1], [0, 0, 1, 1], [], []>} : vector<16x8xf32>, vector<8x32xf32>, vector<16x32xf32> -> vector<16x32xf32>
    %148 = arith.addf %113, %147 : vector<16x32xf32>
    %c4_i32 = arith.constant 4 : i32
    %c0_75 = arith.constant 0 : index
    %c0_76 = arith.constant 0 : index
    %149 = vector.load %arg10[%c0_75, %c0_76] : memref<1x32xf32, #tpu.memory_space<vmem>>, vector<1x32xf32>
    %150 = vector.broadcast %149 : vector<1x32xf32> to vector<16x32xf32>
    %151 = arith.addf %148, %150 : vector<16x32xf32>
    %152 = vector.shape_cast %151 : vector<16x32xf32> to vector<2x8x32xf32>
    %c0_77 = arith.constant 0 : index
    %c0_78 = arith.constant 0 : index
    %c0_79 = arith.constant 0 : index
    %153 = vector.load %arg11[%c0_77, %c0_78, %c0_79] : memref<2x8x32xf32, #tpu.memory_space<vmem>>, vector<2x8x32xf32>
    tpu.vector_store %arg11[%c0_77, %c0_78, %c0_79], %152 {strides = array<i32>} : memref<2x8x32xf32, #tpu.memory_space<vmem>>, vector<2x8x32xf32>,
    return
  }
  func.func @transform_0(%arg0: i32, %arg1: i32) -> (i32, i32, i32) {
    %c0_i32 = arith.constant 0 : i32
    %c0_i32_0 = arith.constant 0 : i32
    %c0_i32_1 = arith.constant 0 : i32
    return %arg0, %c0_i32, %c0_i32_0 : i32, i32, i32
  }
  func.func @transform_1(%arg0: i32, %arg1: i32) -> (i32, i32) {
    %c0_i32 = arith.constant 0 : i32
    %c0_i32_0 = arith.constant 0 : i32
    %c0_i32_1 = arith.constant 0 : i32
    return %c0_i32, %c0_i32_0 : i32, i32
  }
  func.func @transform_2(%arg0: i32, %arg1: i32) -> (i32, i32, i32) {
    %c0_i32 = arith.constant 0 : i32
    %c0_i32_0 = arith.constant 0 : i32
    %c0_i32_1 = arith.constant 0 : i32
    %c0_i32_2 = arith.constant 0 : i32
    return %c0_i32, %c0_i32_0, %c0_i32_1 : i32, i32, i32
  }
  func.func @transform_3(%arg0: i32, %arg1: i32) -> (i32, i32) {
    %c0_i32 = arith.constant 0 : i32
    %c0_i32_0 = arith.constant 0 : i32
    %c0_i32_1 = arith.constant 0 : i32
    return %c0_i32, %c0_i32_0 : i32, i32
  }
  func.func @transform_4(%arg0: i32, %arg1: i32) -> (i32, i32, i32) {
    %c0_i32 = arith.constant 0 : i32
    %c0_i32_0 = arith.constant 0 : i32
    %c0_i32_1 = arith.constant 0 : i32
    %c0_i32_2 = arith.constant 0 : i32
    return %c0_i32, %c0_i32_0, %c0_i32_1 : i32, i32, i32
  }
  func.func @transform_5(%arg0: i32, %arg1: i32) -> (i32, i32) {
    %c0_i32 = arith.constant 0 : i32
    %c0_i32_0 = arith.constant 0 : i32
    %c0_i32_1 = arith.constant 0 : i32
    return %c0_i32, %c0_i32_0 : i32, i32
  }
  func.func @transform_6(%arg0: i32, %arg1: i32) -> (i32, i32, i32) {
    %c0_i32 = arith.constant 0 : i32
    %c0_i32_0 = arith.constant 0 : i32
    %c0_i32_1 = arith.constant 0 : i32
    %c0_i32_2 = arith.constant 0 : i32
    return %c0_i32, %c0_i32_0, %c0_i32_1 : i32, i32, i32
  }
  func.func @transform_7(%arg0: i32, %arg1: i32) -> (i32, i32) {
    %c0_i32 = arith.constant 0 : i32
    %c0_i32_0 = arith.constant 0 : i32
    %c0_i32_1 = arith.constant 0 : i32
    return %c0_i32, %c0_i32_0 : i32, i32
  }
  func.func @transform_8(%arg0: i32, %arg1: i32) -> (i32, i32) {
    %c0_i32 = arith.constant 0 : i32
    %c0_i32_0 = arith.constant 0 : i32
    %c0_i32_1 = arith.constant 0 : i32
    return %c0_i32, %c0_i32_0 : i32, i32
  }
  func.func @transform_9(%arg0: i32, %arg1: i32) -> (i32, i32, i32) {
    %c0_i32 = arith.constant 0 : i32
    %c0_i32_0 = arith.constant 0 : i32
    return %arg0, %arg1, %c0_i32 : i32, i32, i32
  }
}

</mosaic_0001>

<llo_original>
// kernel: tpu_custom_call.1
$region0: #{tpu_custom_call.1}
  #allocation0 [shape = 'u32[]', space=smem, size = 0x4, offset = 0x4, fixed_abs, tag = 'smem constant byte address 0x4 - core index']
  #allocation1 [shape = 'u32[144,128]{1,0:T(1,128)}', space=vmem, size = 0x12000, scoped, tag = 'internal scratch']
  #allocation2 [shape = 'f32[4,2,16,8]{3,2,1,0:T(8,128)}', space=vmem, size = 0x10000, scoped, tag = 'scratch operand']
  #allocation3 [shape = 'f32[4,2,16,8]{3,2,1,0:T(8,128)}', space=vmem, size = 0x10000, scoped, tag = 'scratch operand']
  %s0 = inlined_call_operand.hbm [shape: f32[4,16,32], index: 0, kind: input, shape index: {}]
  %s1 = inlined_call_operand.hbm [shape: f32[32,32], index: 1, kind: input, shape index: {}]
  %s2 = inlined_call_operand.hbm [shape: f32[4,1,8], index: 2, kind: input, shape index: {}]
  %s3 = inlined_call_operand.hbm [shape: f32[32,32], index: 3, kind: input, shape index: {}]
  %s4 = inlined_call_operand.vmem [shape: f32[4,1,8], index: 4, kind: input, shape index: {}]
  %s5 = inlined_call_operand.hbm [shape: f32[32,32], index: 5, kind: input, shape index: {}]
  %s6 = inlined_call_operand.vmem [shape: f32[4,1,8], index: 6, kind: input, shape index: {}]
  %s7 = inlined_call_operand.hbm [shape: f32[32,32], index: 7, kind: input, shape index: {}]
  %s8 = inlined_call_operand.vmem [shape: f32[1,32], index: 8, kind: input, shape index: {}]
  %s9 = inlined_call_operand.hbm [shape: f32[4,16,32], index: 9, kind: output, shape index: {}]
  %s10 = sld [smem:[#allocation0]]
  $region97: #{tpu_custom_call.1} parent=0
    _
  %s12 = ssub.s32 1, %s10
  %s13 = scalar_select 0, %s12, %s10
  $region1: #{tpu_custom_call.1} parent=0
    #allocation4 [shape = 'u8[32768]{0}', space=vmem, size = 0x8000, scoped, tag = 'input window, operand 0']
    #allocation5 [shape = 's32[2]{0}', space=sflag, size = 0x8, scoped, tag = 'scoped memory for tpu_custom_call.1']
    #allocation6 [shape = 's32[2]{0}', space=sflag, size = 0x8, scoped, tag = 'scoped memory for tpu_custom_call.1']
    #allocation7 [shape = 'u8[16384]{0}', space=vmem, size = 0x4000, scoped, tag = 'input window, operand 1, single buffered']
    #allocation8 [shape = 's32[1]{0}', space=sflag, size = 0x4, scoped, tag = 'scoped memory for tpu_custom_call.1']
    #allocation9 [shape = 'u8[2048]{0}', space=vmem, size = 0x800, scoped, tag = 'input window, operand 2, single buffered']
    #allocation10 [shape = 'u8[16384]{0}', space=vmem, size = 0x4000, scoped, tag = 'input window, operand 3, single buffered']
    #allocation11 [shape = 's32[1]{0}', space=sflag, size = 0x4, scoped, tag = 'scoped memory for tpu_custom_call.1']
    #allocation12 [shape = 'u8[16384]{0}', space=vmem, size = 0x4000, scoped, tag = 'input window, operand 5, single buffered']
    #allocation13 [shape = 'u8[16384]{0}', space=vmem, size = 0x4000, scoped, tag = 'input window, operand 7, single buffered']
    #allocation14 [shape = 's32[1]{0}', space=sflag, size = 0x4, scoped, tag = 'scoped memory for tpu_custom_call.1']
    #allocation15 [shape = 'u8[16384]{0}', space=vmem, size = 0x4000, scoped, tag = 'output window, operand 0']
    %14 = vsyncpa [#allocation5], 0
    %s15 = scalar_lea.sflag [#allocation5], 1
    %16 = vsyncpa %s15, 0
    %17 = vsyncpa [#allocation8], 0
    %18 = vsyncpa [#allocation11], 0
    %19 = vsyncpa [#allocation14], 0
    %20 = vsyncpa [#allocation6], 0
    %s21 = scalar_lea.sflag [#allocation6], 1
    %22 = vsyncpa %s21, 0
    loop: start=0, step=1, limit=6
    $region2: #{tpu_custom_call.1} parent=1 // loop_pre_header
      _
    $region3: #{tpu_custom_call.1} parent=1 // loop_header
      %s24 = sphi 0, %s28
      %p25 = scmp.ge.s32.totalorder %s24, 6
      %s31 = sphi 0, %s43
      %s32 = sphi 0, %s39
      %s33 = sphi 0, %s31
      %s34 = sphi 0, %s32
      %s35 = sphi 0, %s33
      %s36 = sphi 0, %s34
      %s46 = sphi 0, %s48
      %s49 = sphi 0, %s46
      %s50 = sphi 0, %s49
      %s66 = sphi 0, %s50
      %s70 = sphi 0, %s70
      %s72 = sphi 0, %s70
      %s73 = sphi 0, %s72
      %s87 = sphi 0, %s73
      %s91 = sphi 0, %s91
      %s93 = sphi 0, %s91
      %s94 = sphi 0, %s93
      %s108 = sphi 0, %s94
      %s112 = sphi 0, %s112
      %s114 = sphi 0, %s112
      %s115 = sphi 0, %s114
      %s129 = sphi 0, %s115
      %s133 = sphi 0, %s133
      %s135 = sphi 0, %s133
      %s136 = sphi 0, %s135
      %s150 = sphi 0, %s136
      %s154 = sphi 0, %s154
      %s156 = sphi 0, %s154
      %s157 = sphi 0, %s156
      %s171 = sphi 0, %s157
      %s175 = sphi 0, %s175
      %s177 = sphi 0, %s175
      %s178 = sphi 0, %s177
      %s192 = sphi 0, %s178
      %s196 = sphi 0, %s196
      %s198 = sphi 0, %s196
      %s199 = sphi 0, %s198
      %s213 = sphi 0, %s199
      %s217 = sphi 0, %s217
      %s219 = sphi 0, %s217
      %s220 = sphi 0, %s219
      %s234 = sphi 0, %s220
      %s242 = sphi 0, %s244
      %s245 = sphi 0, %s242
      %s246 = sphi 0, %s245
      %s262 = sphi 0, %s246
    $region4: #{tpu_custom_call.1} parent=1 // loop_header_branch
      %27 = sbr.rel (%p25) target = $region8
    $region5: #{tpu_custom_call.1} parent=1 // loop_body
      %s29 = ssub.s32 %s24, 1
      %s30 = ssub.s32 %s24, 2
      %s37 = sadd.s32 1, %s32
      %p38 = scmp.ge.s32.totalorder %s37, 2
      %s39 = scalar_select %p38, 0, %s37
      %s40 = sadd.s32 1, %s31
      %s41 = scalar_select %p38, %s40, %s31
      %p42 = scmp.ge.s32.totalorder %s41, 2
      %s43 = scalar_select %p42, 0, %s41
      %s44 = ssub.s32 %s31, %s43
      %p45 = scmp.eq.s32.totalorder %s44, 0
      %s47 = sadd.s32 %s46, 1
      %s48 = scalar_select %p45, %s46, %s47
      %p51 = pneg %p45
      %p52 = scmp.eq.s32.totalorder %s24, 3
      %p53 = por %p51, %p52
      %p54 = scmp.ne.s32.totalorder %s46, %s49
      %p55 = scmp.eq.s32.totalorder %s24, 0
      %p56 = por %p54, %p55
      %p57 = scmp.ne.s32.totalorder %s46, %s49
      %p58 = scmp.eq.s32.totalorder %s29, 3
      %p59 = por %p57, %p58
      %p60 = scmp.ne.s32.totalorder %s49, %s50
      %p61 = scmp.eq.s32.totalorder %s29, 0
      %p62 = por %p60, %p61
      %p63 = scmp.ne.s32.totalorder %s49, %s50
      %p64 = scmp.eq.s32.totalorder %s30, 3
      %p65 = por %p63, %p64
      %p67 = scmp.ne.s32.totalorder %s50, %s66
      %p68 = scmp.eq.s32.totalorder %s30, 0
      %p69 = por %p67, %p68
      %s71 = sadd.s32 %s70, 1
      %p74 = scmp.eq.s32.totalorder %s24, 3
      %p75 = scmp.ne.s32.totalorder %s70, %s72
      %p76 = scmp.eq.s32.totalorder %s24, 0
      %p77 = por %p75, %p76
      %p78 = scmp.ne.s32.totalorder %s70, %s72
      %p79 = scmp.eq.s32.totalorder %s29, 3
      %p80 = por %p78, %p79
      %p81 = scmp.ne.s32.totalorder %s72, %s73
      %p82 = scmp.eq.s32.totalorder %s29, 0
      %p83 = por %p81, %p82
      %p84 = scmp.ne.s32.totalorder %s72, %s73
      %p85 = scmp.eq.s32.totalorder %s30, 3
      %p86 = por %p84, %p85
      %p88 = scmp.ne.s32.totalorder %s73, %s87
      %p89 = scmp.eq.s32.totalorder %s30, 0
      %p90 = por %p88, %p89
      %s92 = sadd.s32 %s91, 1
      %p95 = scmp.eq.s32.totalorder %s24, 3
      %p96 = scmp.ne.s32.totalorder %s91, %s93
      %p97 = scmp.eq.s32.totalorder %s24, 0
      %p98 = por %p96, %p97
      %p99 = scmp.ne.s32.totalorder %s91, %s93
      %p100 = scmp.eq.s32.totalorder %s29, 3
      %p101 = por %p99, %p100
      %p102 = scmp.ne.s32.totalorder %s93, %s94
      %p103 = scmp.eq.s32.totalorder %s29, 0
      %p104 = por %p102, %p103
      %p105 = scmp.ne.s32.totalorder %s93, %s94
      %p106 = scmp.eq.s32.totalorder %s30, 3
      %p107 = por %p105, %p106
      %p109 = scmp.ne.s32.totalorder %s94, %s108
      %p110 = scmp.eq.s32.totalorder %s30, 0
      %p111 = por %p109, %p110
      %s113 = sadd.s32 %s112, 1
      %p116 = scmp.eq.s32.totalorder %s24, 3
      %p117 = scmp.ne.s32.totalorder %s112, %s114
      %p118 = scmp.eq.s32.totalorder %s24, 0
      %p119 = por %p117, %p118
      %p120 = scmp.ne.s32.totalorder %s112, %s114
      %p121 = scmp.eq.s32.totalorder %s29, 3
      %p122 = por %p120, %p121
      %p123 = scmp.ne.s32.totalorder %s114, %s115
      %p124 = scmp.eq.s32.totalorder %s29, 0
      %p125 = por %p123, %p124
      %p126 = scmp.ne.s32.totalorder %s114, %s115
      %p127 = scmp.eq.s32.totalorder %s30, 3
      %p128 = por %p126, %p127
      %p130 = scmp.ne.s32.totalorder %s115, %s129
      %p131 = scmp.eq.s32.totalorder %s30, 0
      %p132 = por %p130, %p131
      %s134 = sadd.s32 %s133, 1
      %p137 = scmp.eq.s32.totalorder %s24, 3
      %p138 = scmp.ne.s32.totalorder %s133, %s135
      %p139 = scmp.eq.s32.totalorder %s24, 0
      %p140 = por %p138, %p139
      %p141 = scmp.ne.s32.totalorder %s133, %s135
      %p142 = scmp.eq.s32.totalorder %s29, 3
      %p143 = por %p141, %p142
      %p144 = scmp.ne.s32.totalorder %s135, %s136
      %p145 = scmp.eq.s32.totalorder %s29, 0
      %p146 = por %p144, %p145
      %p147 = scmp.ne.s32.totalorder %s135, %s136
      %p148 = scmp.eq.s32.totalorder %s30, 3
      %p149 = por %p147, %p148
      %p151 = scmp.ne.s32.totalorder %s136, %s150
      %p152 = scmp.eq.s32.totalorder %s30, 0
      %p153 = por %p151, %p152
      %s155 = sadd.s32 %s154, 1
      %p158 = scmp.eq.s32.totalorder %s24, 3
      %p159 = scmp.ne.s32.totalorder %s154, %s156
      %p160 = scmp.eq.s32.totalorder %s24, 0
      %p161 = por %p159, %p160
      %p162 = scmp.ne.s32.totalorder %s154, %s156
      %p163 = scmp.eq.s32.totalorder %s29, 3
      %p164 = por %p162, %p163
      %p165 = scmp.ne.s32.totalorder %s156, %s157
      %p166 = scmp.eq.s32.totalorder %s29, 0
      %p167 = por %p165, %p166
      %p168 = scmp.ne.s32.totalorder %s156, %s157
      %p169 = scmp.eq.s32.totalorder %s30, 3
      %p170 = por %p168, %p169
      %p172 = scmp.ne.s32.totalorder %s157, %s171
      %p173 = scmp.eq.s32.totalorder %s30, 0
      %p174 = por %p172, %p173
      %s176 = sadd.s32 %s175, 1
      %p179 = scmp.eq.s32.totalorder %s24, 3
      %p180 = scmp.ne.s32.totalorder %s175, %s177
      %p181 = scmp.eq.s32.totalorder %s24, 0
      %p182 = por %p180, %p181
      %p183 = scmp.ne.s32.totalorder %s175, %s177
      %p184 = scmp.eq.s32.totalorder %s29, 3
      %p185 = por %p183, %p184
      %p186 = scmp.ne.s32.totalorder %s177, %s178
      %p187 = scmp.eq.s32.totalorder %s29, 0
      %p188 = por %p186, %p187
      %p189 = scmp.ne.s32.totalorder %s177, %s178
      %p190 = scmp.eq.s32.totalorder %s30, 3
      %p191 = por %p189, %p190
      %p193 = scmp.ne.s32.totalorder %s178, %s192
      %p194 = scmp.eq.s32.totalorder %s30, 0
      %p195 = por %p193, %p194
      %s197 = sadd.s32 %s196, 1
      %p200 = scmp.eq.s32.totalorder %s24, 3
      %p201 = scmp.ne.s32.totalorder %s196, %s198
      %p202 = scmp.eq.s32.totalorder %s24, 0
      %p203 = por %p201, %p202
      %p204 = scmp.ne.s32.totalorder %s196, %s198
      %p205 = scmp.eq.s32.totalorder %s29, 3
      %p206 = por %p204, %p205
      %p207 = scmp.ne.s32.totalorder %s198, %s199
      %p208 = scmp.eq.s32.totalorder %s29, 0
      %p209 = por %p207, %p208
      %p210 = scmp.ne.s32.totalorder %s198, %s199
      %p211 = scmp.eq.s32.totalorder %s30, 3
      %p212 = por %p210, %p211
      %p214 = scmp.ne.s32.totalorder %s199, %s213
      %p215 = scmp.eq.s32.totalorder %s30, 0
      %p216 = por %p214, %p215
      %s218 = sadd.s32 %s217, 1
      %p221 = scmp.eq.s32.totalorder %s24, 3
      %p222 = scmp.ne.s32.totalorder %s217, %s219
      %p223 = scmp.eq.s32.totalorder %s24, 0
      %p224 = por %p222, %p223
      %p225 = scmp.ne.s32.totalorder %s217, %s219
      %p226 = scmp.eq.s32.totalorder %s29, 3
      %p227 = por %p225, %p226
      %p228 = scmp.ne.s32.totalorder %s219, %s220
      %p229 = scmp.eq.s32.totalorder %s29, 0
      %p230 = por %p228, %p229
      %p231 = scmp.ne.s32.totalorder %s219, %s220
      %p232 = scmp.eq.s32.totalorder %s30, 3
      %p233 = por %p231, %p232
      %p235 = scmp.ne.s32.totalorder %s220, %s234
      %p236 = scmp.eq.s32.totalorder %s30, 0
      %p237 = por %p235, %p236
      %s238 = ssub.s32 %s31, %s43
      %s239 = ssub.s32 %s32, %s39
      %s240 = sor.u32 %s238, %s239
      %p241 = scmp.eq.s32.totalorder %s240, 0
      %s243 = sadd.s32 %s242, 1
      %s244 = scalar_select %p241, %s242, %s243
      %p247 = pneg %p241
      %p248 = scmp.eq.s32.totalorder %s24, 3
      %p249 = por %p247, %p248
      %p250 = scmp.ne.s32.totalorder %s242, %s245
      %p251 = scmp.eq.s32.totalorder %s24, 0
      %p252 = por %p250, %p251
      %p253 = scmp.ne.s32.totalorder %s242, %s245
      %p254 = scmp.eq.s32.totalorder %s29, 3
      %p255 = por %p253, %p254
      %p256 = scmp.ne.s32.totalorder %s245, %s246
      %p257 = scmp.eq.s32.totalorder %s29, 0
      %p258 = por %p256, %p257
      %p259 = scmp.ne.s32.totalorder %s245, %s246
      %p260 = scmp.eq.s32.totalorder %s30, 3
      %p261 = por %p259, %p260
      %p263 = scmp.ne.s32.totalorder %s246, %s262
      %p264 = scmp.eq.s32.totalorder %s30, 0
      %p265 = por %p263, %p264
      %p266 = scmp.le.s32.totalorder 1, %s24
      %p267 = scmp.lt.s32.totalorder %s24, 5
      %p268 = pnand %p266, %p267
      %p269 = pneg %p268
      // Predicated region
      $region9: #{tpu_custom_call.1} parent=5 // pred_check
        _
      $region10: #{tpu_custom_call.1} parent=5 // pred_check_branch
        %271 = sbr.rel (%p268) target = $region12
      $region11: #{tpu_custom_call.1} parent=5 // pred_region
        %s272 = ssub.s32 %s24, 1
        // Predicated region
        $region13: #{tpu_custom_call.1} parent=11 // pred_check
          %p273 = pneg %p83
        $region14: #{tpu_custom_call.1} parent=11 // pred_check_branch
          %275 = sbr.rel (%p273) target = $region16
        $region15: #{tpu_custom_call.1} parent=11 // pred_region
          %s277 = ssub.s32 512, 512
          %278 = vsyncadd [#allocation8], %s277
          %s279 = sshll.u32 [#allocation7], 4
          %s280 = int_to_ptr.vmem [resolvable:$true] %s279
          %285 = dma.hbm_to_vmem [thread:$0]  %s1, 512, %s280, [#allocation8], 128, 128, 8
        $region16: #{tpu_custom_call.1} parent=11 // pred_fallthru
          _
        // Predicated region
        $region17: #{tpu_custom_call.1} parent=11 // pred_check
          %p286 = pneg %p104
        $region18: #{tpu_custom_call.1} parent=11 // pred_check_branch
          %288 = sbr.rel (%p286) target = $region20
        $region19: #{tpu_custom_call.1} parent=11 // pred_region
          %s290 = ssub.s32 64, 64
          %291 = vsyncadd [#allocation8], %s290
          %s292 = sshll.u32 [#allocation9], 4
          %s293 = int_to_ptr.vmem [resolvable:$true] %s292
          %298 = dma.hbm_to_vmem [thread:$0]  %s2, 64, %s293, [#allocation8], 16, 16, 1
        $region20: #{tpu_custom_call.1} parent=11 // pred_fallthru
          _
        // Predicated region
        $region21: #{tpu_custom_call.1} parent=11 // pred_check
          %p299 = pneg %p125
        $region22: #{tpu_custom_call.1} parent=11 // pred_check_branch
          %301 = sbr.rel (%p299) target = $region24
        $region23: #{tpu_custom_call.1} parent=11 // pred_region
          %s303 = ssub.s32 512, 512
          %304 = vsyncadd [#allocation11], %s303
          %s305 = sshll.u32 [#allocation10], 4
          %s306 = int_to_ptr.vmem [resolvable:$true] %s305
          %311 = dma.hbm_to_vmem [thread:$0]  %s3, 512, %s306, [#allocation11], 128, 128, 8
        $region24: #{tpu_custom_call.1} parent=11 // pred_fallthru
          _
        // Predicated region
        $region25: #{tpu_custom_call.1} parent=11 // pred_check
          %p312 = pneg %p146
        $region26: #{tpu_custom_call.1} parent=11 // pred_check_branch
          %314 = sbr.rel (%p312) target = $region28
        $region27: #{tpu_custom_call.1} parent=11 // pred_region
          _
        $region28: #{tpu_custom_call.1} parent=11 // pred_fallthru
          _
        // Predicated region
        $region29: #{tpu_custom_call.1} parent=11 // pred_check
          %p315 = pneg %p167
        $region30: #{tpu_custom_call.1} parent=11 // pred_check_branch
          %317 = sbr.rel (%p315) target = $region32
        $region31: #{tpu_custom_call.1} parent=11 // pred_region
          %s319 = ssub.s32 512, 512
          %320 = vsyncadd [#allocation11], %s319
          %s321 = sshll.u32 [#allocation12], 4
          %s322 = int_to_ptr.vmem [resolvable:$true] %s321
          %327 = dma.hbm_to_vmem [thread:$0]  %s5, 512, %s322, [#allocation11], 128, 128, 8
        $region32: #{tpu_custom_call.1} parent=11 // pred_fallthru
          _
        // Predicated region
        $region33: #{tpu_custom_call.1} parent=11 // pred_check
          %p328 = pneg %p188
        $region34: #{tpu_custom_call.1} parent=11 // pred_check_branch
          %330 = sbr.rel (%p328) target = $region36
        $region35: #{tpu_custom_call.1} parent=11 // pred_region
          _
        $region36: #{tpu_custom_call.1} parent=11 // pred_fallthru
          _
        // Predicated region
        $region37: #{tpu_custom_call.1} parent=11 // pred_check
          %p331 = pneg %p209
        $region38: #{tpu_custom_call.1} parent=11 // pred_check_branch
          %333 = sbr.rel (%p331) target = $region40
        $region39: #{tpu_custom_call.1} parent=11 // pred_region
          %s335 = ssub.s32 512, 512
          %336 = vsyncadd [#allocation14], %s335
          %s337 = sshll.u32 [#allocation13], 4
          %s338 = int_to_ptr.vmem [resolvable:$true] %s337
          %343 = dma.hbm_to_vmem [thread:$0]  %s7, 512, %s338, [#allocation14], 128, 128, 8
        $region40: #{tpu_custom_call.1} parent=11 // pred_fallthru
          _
        // Predicated region
        $region41: #{tpu_custom_call.1} parent=11 // pred_check
          %p344 = pneg %p230
        $region42: #{tpu_custom_call.1} parent=11 // pred_check_branch
          %346 = sbr.rel (%p344) target = $region44
        $region43: #{tpu_custom_call.1} parent=11 // pred_region
          _
        $region44: #{tpu_custom_call.1} parent=11 // pred_fallthru
          _
      $region12: #{tpu_custom_call.1} parent=5 // pred_fallthru
        _
      %p347 = scmp.lt.s32.totalorder %s24, 4
      // Predicated region
      $region45: #{tpu_custom_call.1} parent=5 // pred_check
        %p348 = pneg %p347
      $region46: #{tpu_custom_call.1} parent=5 // pred_check_branch
        %350 = sbr.rel (%p348) target = $region48
      $region47: #{tpu_custom_call.1} parent=5 // pred_region
        // Predicated region
        $region49: #{tpu_custom_call.1} parent=47 // pred_check
          %p351 = pneg %p56
        $region50: #{tpu_custom_call.1} parent=47 // pred_check_branch
          %353 = sbr.rel (%p351) target = $region52
        $region51: #{tpu_custom_call.1} parent=47 // pred_region
          %s354 = sand.u32 %s46, 1
          %s355 = scalar_lea.sflag [#allocation5], %s354
          %s356 = sand.u32 %s46, 1
          %s357 = smul.addr %s356, 32
          %s358 = scalar_lea.vmem [#allocation4], %s357
          %s359 = smul.u32 2, %s31
          %s361 = ssub.s32 512, 512
          %362 = vsyncadd %s355, %s361
          %s363 = smul.addr %s359, 2
          %s364 = smul.addr %s363, 128
          %s365 = scalar_lea.hbm %s0, %s364
          %s366 = sshll.u32 %s358, 4
          %s367 = int_to_ptr.vmem [resolvable:$true] %s366
          %372 = dma.hbm_to_vmem [thread:$0]  %s365, 512, %s367, %s355, 128, 128, 8
        $region52: #{tpu_custom_call.1} parent=47 // pred_fallthru
          _
      $region48: #{tpu_custom_call.1} parent=5 // pred_fallthru
        _
      %p373 = scmp.le.s32.totalorder 1, %s24
      %p374 = scmp.lt.s32.totalorder %s24, 5
      %p375 = pnand %p373, %p374
      %p376 = pneg %p375
      // Predicated region
      $region53: #{tpu_custom_call.1} parent=5 // pred_check
        _
      $region54: #{tpu_custom_call.1} parent=5 // pred_check_branch
        %378 = sbr.rel (%p375) target = $region56
      $region55: #{tpu_custom_call.1} parent=5 // pred_region
        %s379 = ssub.s32 %s24, 1
        %s380 = sand.u32 %s49, 1
        %s381 = scalar_lea.sflag [#allocation5], %s380
        %s382 = sand.u32 %s49, 1
        %s383 = smul.addr %s382, 32
        %s384 = scalar_lea.vmem [#allocation4], %s383
        // Predicated region
        $region57: #{tpu_custom_call.1} parent=55 // pred_check
          %p385 = pneg %p62
        $region58: #{tpu_custom_call.1} parent=55 // pred_check_branch
          %387 = sbr.rel (%p385) target = $region60
        $region59: #{tpu_custom_call.1} parent=55 // pred_region
          %388 = dma.done %s381, 512
        $region60: #{tpu_custom_call.1} parent=55 // pred_fallthru
          _
        // Predicated region
        $region61: #{tpu_custom_call.1} parent=55 // pred_check
          %p389 = pneg %p83
        $region62: #{tpu_custom_call.1} parent=55 // pred_check_branch
          %391 = sbr.rel (%p389) target = $region64
        $region63: #{tpu_custom_call.1} parent=55 // pred_region
          %392 = dma.done [#allocation8], 512
        $region64: #{tpu_custom_call.1} parent=55 // pred_fallthru
          _
        // Predicated region
        $region65: #{tpu_custom_call.1} parent=55 // pred_check
          %p393 = pneg %p104
        $region66: #{tpu_custom_call.1} parent=55 // pred_check_branch
          %395 = sbr.rel (%p393) target = $region68
        $region67: #{tpu_custom_call.1} parent=55 // pred_region
          %396 = dma.done [#allocation8], 64
        $region68: #{tpu_custom_call.1} parent=55 // pred_fallthru
          _
        // Predicated region
        $region69: #{tpu_custom_call.1} parent=55 // pred_check
          %p397 = pneg %p125
        $region70: #{tpu_custom_call.1} parent=55 // pred_check_branch
          %399 = sbr.rel (%p397) target = $region72
        $region71: #{tpu_custom_call.1} parent=55 // pred_region
          %400 = dma.done [#allocation11], 512
        $region72: #{tpu_custom_call.1} parent=55 // pred_fallthru
          _
        // Predicated region
        $region73: #{tpu_custom_call.1} parent=55 // pred_check
          %p401 = pneg %p167
        $region74: #{tpu_custom_call.1} parent=55 // pred_check_branch
          %403 = sbr.rel (%p401) target = $region76
        $region75: #{tpu_custom_call.1} parent=55 // pred_region
          %404 = dma.done [#allocation11], 512
        $region76: #{tpu_custom_call.1} parent=55 // pred_fallthru
          _
        // Predicated region
        $region77: #{tpu_custom_call.1} parent=55 // pred_check
          %p405 = pneg %p209
        $region78: #{tpu_custom_call.1} parent=55 // pred_check_branch
          %407 = sbr.rel (%p405) target = $region80
        $region79: #{tpu_custom_call.1} parent=55 // pred_region
          %408 = dma.done [#allocation14], 512
        $region80: #{tpu_custom_call.1} parent=55 // pred_fallthru
          _
        %s409 = sand.u32 %s49, 1
        %s410 = scalar_lea.sflag [#allocation5], %s409
        %s411 = sand.u32 %s49, 1
        %s412 = smul.addr %s411, 32
        %s413 = scalar_lea.vmem [#allocation4], %s412
        %p414 = pneg %p62
        %p415 = pneg %p59
        %p416 = pneg %p83
        %p417 = pneg %p80
        %p418 = pneg %p104
        %p419 = pneg %p101
        %p420 = pneg %p125
        %p421 = pneg %p122
        %p422 = pneg %p146
        %p423 = pneg %p143
        %p424 = pneg %p167
        %p425 = pneg %p164
        %p426 = pneg %p188
        %p427 = pneg %p185
        %p428 = pneg %p209
        %p429 = pneg %p206
        %p430 = pneg %p230
        %p431 = pneg %p227
        %p432 = pneg %p258
        %p433 = pneg %p255
        %s434 = sand.u32 %s245, 1
        %s435 = scalar_lea.sflag [#allocation6], %s434
        %s436 = sand.u32 %s245, 1
        %s437 = smul.addr %s436, 16
        %s438 = scalar_lea.vmem [#allocation15], %s437
        %s439 = smul.u32 2, %s33
        %s440 = smul.u32 2, %s33
        %p441 = scmp.eq.s32.totalorder %s34, 0
        // Predicated region
        $region81: #{tpu_custom_call.1} parent=55 // pred_check
          %p442 = pneg %p441
        $region82: #{tpu_custom_call.1} parent=55 // pred_check_branch
          %444 = sbr.rel (%p442) target = $region84
        $region83: #{tpu_custom_call.1} parent=55 // pred_region
          %v445 = vld [vmem:[%s384] sm:$0xff]
          %v446 = vld [vmem:[%s384 + $0x8] sm:$0xff]
          %v447 = vld [vmem:[%s384 + $0x10] sm:$0xff]
          %v448 = vld [vmem:[%s384 + $0x18] sm:$0xff]
          %v449 = vld [vmem:[#allocation10] sm:$0xff]
          %v450 = vld [vmem:[%s4] sm:$0x1]
          %v452 = vlaneseq
          %v453 = vshrl.u32 %v452, 7
          %v454 = vsub.s32 0, %v453
          %v455 = vrot.slane %v450, %v454
          %vm457 = vcmask 261120
          %v459 = vsel %vm457, %v445, 0
          %v462 = vsel %vm457, %v446, 0
          %v465 = vsel %vm457, %v447, 0
          %v468 = vsel %vm457, %v448, 0
          %v471 = vsel %vm457, %v449, 0
          %473 = vmatprep.subr.mxu0 0.0
          %474 = vmatpush1.xpose.msra.mxu0 0.0
          %475 = vmatprep.subr.mxu0 0.0
          %476 = vmatpush1.xpose.msra.mxu0 0.0
          %477 = vmatprep.subr.mxu0 0.0
          %478 = vmatpush1.xpose.msra.mxu0 0.0
          %479 = vmatprep.subr.mxu0 0.0
          %480 = vmatpush1.xpose.msra.mxu0 0.0
          %481 = vmatprep.subr.mxu0 0.0
          %482 = vmatpush1.xpose.msra.mxu0 0.0
          %483 = vmatprep.subr.mxu0 0.0
          %484 = vmatpush1.xpose.msra.mxu0 0.0
          %485 = vmatprep.subr.mxu0 0.0
          %486 = vmatpush1.xpose.msra.mxu0 0.0
          %487 = vmatprep.subr.mxu0 0.0
          %488 = vmatpush1.xpose.msra.mxu0 0.0
          %489 = vmatprep.subr.mxu0 0.0
          %490 = vmatpush1.xpose.msra.mxu0 0.0
          %491 = vmatprep.subr.mxu0 0.0
          %492 = vmatpush1.xpose.msra.mxu0 0.0
          %493 = vmatprep.subr.mxu0 0.0
          %494 = vmatpush1.xpose.msra.mxu0 0.0
          %495 = vmatprep.subr.mxu0 0.0
          %496 = vmatpush1.xpose.msra.mxu0 0.0
          %497 = vmatprep.subr.mxu0 0.0
          %498 = vmatpush1.xpose.msra.mxu0 0.0
          %499 = vmatprep.subr.mxu0 0.0
          %500 = vmatpush1.xpose.msra.mxu0 0.0
          %501 = vmatprep.subr.mxu0 0.0
          %502 = vmatpush1.xpose.msra.mxu0 0.0
          %503 = vmatprep.subr.mxu0 0.0
          %504 = vmatpush1.xpose.msra.mxu0 %v471
          %505 = vmatprep.subr.mxu0 0.0
          %506 = vmatpush2.xpose.msra.mxu0 0.0
          %507 = vmatprep.subr.mxu0 0.0
          %508 = vmatpush2.xpose.msra.mxu0 0.0
          %509 = vmatprep.subr.mxu0 0.0
          %510 = vmatpush2.xpose.msra.mxu0 0.0
          %511 = vmatprep.subr.mxu0 0.0
          %512 = vmatpush2.xpose.msra.mxu0 0.0
          %513 = vmatprep.subr.mxu0 0.0
          %514 = vmatpush2.xpose.msra.mxu0 0.0
          %515 = vmatprep.subr.mxu0 0.0
          %516 = vmatpush2.xpose.msra.mxu0 0.0
          %517 = vmatprep.subr.mxu0 0.0
          %518 = vmatpush2.xpose.msra.mxu0 0.0
          %519 = vmatprep.subr.mxu0 0.0
          %520 = vmatpush2.xpose.msra.mxu0 0.0
          %521 = vmatprep.subr.mxu0 0.0
          %522 = vmatpush2.xpose.msra.mxu0 0.0
          %523 = vmatprep.subr.mxu0 0.0
          %524 = vmatpush2.xpose.msra.mxu0 0.0
          %525 = vmatprep.subr.mxu0 0.0
          %526 = vmatpush2.xpose.msra.mxu0 0.0
          %527 = vmatprep.subr.mxu0 0.0
          %528 = vmatpush2.xpose.msra.mxu0 0.0
          %529 = vmatprep.subr.mxu0 0.0
          %530 = vmatpush2.xpose.msra.mxu0 0.0
          %531 = vmatprep.subr.mxu0 0.0
          %532 = vmatpush2.xpose.msra.mxu0 0.0
          %533 = vmatprep.subr.mxu0 0.0
          %534 = vmatpush2.xpose.msra.mxu0 0.0
          %535 = vmatprep.subr.mxu0 0.0
          %536 = vmatpush2.xpose.msra.mxu0 0.0
          %537 = vmatprep.mubr.f32.mxu0 0.0
          %538 = vmatmul.mubr.f32.gmra.mxu0 %v459
          %v539 = vpop.f32.mrf.mxu0
          %v540 = vadd.f32 %v455, %v539
          %v541 = vpop.f32.mrf.mxu0
          %542 = vmatprep.mubr.f32.mxu0 0.0
          %543 = vmatmul.mubr.f32.gmra.mxu0 %v462
          %v544 = vpop.f32.mrf.mxu0
          %v545 = vadd.f32 %v455, %v544
          %v546 = vpop.f32.mrf.mxu0
          %547 = vmatprep.mubr.f32.mxu0 0.0
          %548 = vmatmul.mubr.f32.gmra.mxu0 %v465
          %v549 = vpop.f32.mrf.mxu0
          %v550 = vadd.f32 %v455, %v549
          %v551 = vpop.f32.mrf.mxu0
          %552 = vmatprep.mubr.f32.mxu0 0.0
          %553 = vmatmul.mubr.f32.gmra.mxu0 %v468
          %v554 = vpop.f32.mrf.mxu0
          %v555 = vadd.f32 %v455, %v554
          %v556 = vpop.f32.mrf.mxu0
          %557 = vdwg.mxu0
          %v558 = vld [vmem:[#allocation12] sm:$0xff]
          %v559 = vld [vmem:[%s6] sm:$0x1]
          %v561 = vlaneseq
          %v562 = vshrl.u32 %v561, 7
          %v563 = vsub.s32 0, %v562
          %v564 = vrot.slane %v559, %v563
          %v567 = vsel %vm457, %v558, 0
          %569 = vmatprep.subr.mxu0 0.0
          %570 = vmatpush1.xpose.msra.mxu0 0.0
          %571 = vmatprep.subr.mxu0 0.0
          %572 = vmatpush1.xpose.msra.mxu0 0.0
          %573 = vmatprep.subr.mxu0 0.0
          %574 = vmatpush1.xpose.msra.mxu0 0.0
          %575 = vmatprep.subr.mxu0 0.0
          %576 = vmatpush1.xpose.msra.mxu0 0.0
          %577 = vmatprep.subr.mxu0 0.0
          %578 = vmatpush1.xpose.msra.mxu0 0.0
          %579 = vmatprep.subr.mxu0 0.0
          %580 = vmatpush1.xpose.msra.mxu0 0.0
          %581 = vmatprep.subr.mxu0 0.0
          %582 = vmatpush1.xpose.msra.mxu0 0.0
          %583 = vmatprep.subr.mxu0 0.0
          %584 = vmatpush1.xpose.msra.mxu0 0.0
          %585 = vmatprep.subr.mxu0 0.0
          %586 = vmatpush1.xpose.msra.mxu0 0.0
          %587 = vmatprep.subr.mxu0 0.0
          %588 = vmatpush1.xpose.msra.mxu0 0.0
          %589 = vmatprep.subr.mxu0 0.0
          %590 = vmatpush1.xpose.msra.mxu0 0.0
          %591 = vmatprep.subr.mxu0 0.0
          %592 = vmatpush1.xpose.msra.mxu0 0.0
          %593 = vmatprep.subr.mxu0 0.0
          %594 = vmatpush1.xpose.msra.mxu0 0.0
          %595 = vmatprep.subr.mxu0 0.0
          %596 = vmatpush1.xpose.msra.mxu0 0.0
          %597 = vmatprep.subr.mxu0 0.0
          %598 = vmatpush1.xpose.msra.mxu0 0.0
          %599 = vmatprep.subr.mxu0 0.0
          %600 = vmatpush1.xpose.msra.mxu0 %v567
          %601 = vmatprep.subr.mxu0 0.0
          %602 = vmatpush2.xpose.msra.mxu0 0.0
          %603 = vmatprep.subr.mxu0 0.0
          %604 = vmatpush2.xpose.msra.mxu0 0.0
          %605 = vmatprep.subr.mxu0 0.0
          %606 = vmatpush2.xpose.msra.mxu0 0.0
          %607 = vmatprep.subr.mxu0 0.0
          %608 = vmatpush2.xpose.msra.mxu0 0.0
          %609 = vmatprep.subr.mxu0 0.0
          %610 = vmatpush2.xpose.msra.mxu0 0.0
          %611 = vmatprep.subr.mxu0 0.0
          %612 = vmatpush2.xpose.msra.mxu0 0.0
          %613 = vmatprep.subr.mxu0 0.0
          %614 = vmatpush2.xpose.msra.mxu0 0.0
          %615 = vmatprep.subr.mxu0 0.0
          %616 = vmatpush2.xpose.msra.mxu0 0.0
          %617 = vmatprep.subr.mxu0 0.0
          %618 = vmatpush2.xpose.msra.mxu0 0.0
          %619 = vmatprep.subr.mxu0 0.0
          %620 = vmatpush2.xpose.msra.mxu0 0.0
          %621 = vmatprep.subr.mxu0 0.0
          %622 = vmatpush2.xpose.msra.mxu0 0.0
          %623 = vmatprep.subr.mxu0 0.0
          %624 = vmatpush2.xpose.msra.mxu0 0.0
          %625 = vmatprep.subr.mxu0 0.0
          %626 = vmatpush2.xpose.msra.mxu0 0.0
          %627 = vmatprep.subr.mxu0 0.0
          %628 = vmatpush2.xpose.msra.mxu0 0.0
          %629 = vmatprep.subr.mxu0 0.0
          %630 = vmatpush2.xpose.msra.mxu0 0.0
          %631 = vmatprep.subr.mxu0 0.0
          %632 = vmatpush2.xpose.msra.mxu0 0.0
          %633 = vmatprep.mubr.f32.mxu0 0.0
          %634 = vmatmul.mubr.f32.gmra.mxu0 %v459
          %v635 = vpop.f32.mrf.mxu0
          %v636 = vadd.f32 %v564, %v635
          %v637 = vpop.f32.mrf.mxu0
          %638 = vmatprep.mubr.f32.mxu0 0.0
          %639 = vmatmul.mubr.f32.gmra.mxu0 %v462
          %v640 = vpop.f32.mrf.mxu0
          %v641 = vadd.f32 %v564, %v640
          %v642 = vpop.f32.mrf.mxu0
          %643 = vmatprep.mubr.f32.mxu0 0.0
          %644 = vmatmul.mubr.f32.gmra.mxu0 %v465
          %v645 = vpop.f32.mrf.mxu0
          %v646 = vadd.f32 %v564, %v645
          %v647 = vpop.f32.mrf.mxu0
          %648 = vmatprep.mubr.f32.mxu0 0.0
          %649 = vmatmul.mubr.f32.gmra.mxu0 %v468
          %v650 = vpop.f32.mrf.mxu0
          %v651 = vadd.f32 %v564, %v650
          %v652 = vpop.f32.mrf.mxu0
          %653 = vdwg.mxu0
          %vm654 = vcmask 64512
          %655 = vst.msk [vmem:[#allocation2] sm:$0xff] %vm654, %v540
          %656 = vst.msk [vmem:[#allocation2 + $0x8] sm:$0xff] %vm654, %v545
          %657 = vst.msk [vmem:[#allocation2 + $0x10] sm:$0xff] %vm654, %v550
          %658 = vst.msk [vmem:[#allocation2 + $0x18] sm:$0xff] %vm654, %v555
          %659 = vst.msk [vmem:[#allocation3] sm:$0xff] %vm654, %v636
          %660 = vst.msk [vmem:[#allocation3 + $0x8] sm:$0xff] %vm654, %v641
          %661 = vst.msk [vmem:[#allocation3 + $0x10] sm:$0xff] %vm654, %v646
          %662 = vst.msk [vmem:[#allocation3 + $0x18] sm:$0xff] %vm654, %v651
          %s663 = scalar_lea.vmem [#allocation10], 8
          %v664 = vld [vmem:[%s663] sm:$0xff]
          %s665 = scalar_lea.vmem %s4, 1
          %v666 = vld [vmem:[%s665] sm:$0x1]
          %v668 = vlaneseq
          %v669 = vshrl.u32 %v668, 7
          %v670 = vsub.s32 0, %v669
          %v671 = vrot.slane %v666, %v670
          %v674 = vsel %vm457, %v664, 0
          %676 = vmatprep.subr.mxu0 0.0
          %677 = vmatpush1.xpose.msra.mxu0 0.0
          %678 = vmatprep.subr.mxu0 0.0
          %679 = vmatpush1.xpose.msra.mxu0 0.0
          %680 = vmatprep.subr.mxu0 0.0
          %681 = vmatpush1.xpose.msra.mxu0 0.0
          %682 = vmatprep.subr.mxu0 0.0
          %683 = vmatpush1.xpose.msra.mxu0 0.0
          %684 = vmatprep.subr.mxu0 0.0
          %685 = vmatpush1.xpose.msra.mxu0 0.0
          %686 = vmatprep.subr.mxu0 0.0
          %687 = vmatpush1.xpose.msra.mxu0 0.0
          %688 = vmatprep.subr.mxu0 0.0
          %689 = vmatpush1.xpose.msra.mxu0 0.0
          %690 = vmatprep.subr.mxu0 0.0
          %691 = vmatpush1.xpose.msra.mxu0 0.0
          %692 = vmatprep.subr.mxu0 0.0
          %693 = vmatpush1.xpose.msra.mxu0 0.0
          %694 = vmatprep.subr.mxu0 0.0
          %695 = vmatpush1.xpose.msra.mxu0 0.0
          %696 = vmatprep.subr.mxu0 0.0
          %697 = vmatpush1.xpose.msra.mxu0 0.0
          %698 = vmatprep.subr.mxu0 0.0
          %699 = vmatpush1.xpose.msra.mxu0 0.0
          %700 = vmatprep.subr.mxu0 0.0
          %701 = vmatpush1.xpose.msra.mxu0 0.0
          %702 = vmatprep.subr.mxu0 0.0
          %703 = vmatpush1.xpose.msra.mxu0 0.0
          %704 = vmatprep.subr.mxu0 0.0
          %705 = vmatpush1.xpose.msra.mxu0 0.0
          %706 = vmatprep.subr.mxu0 0.0
          %707 = vmatpush1.xpose.msra.mxu0 %v674
          %708 = vmatprep.subr.mxu0 0.0
          %709 = vmatpush2.xpose.msra.mxu0 0.0
          %710 = vmatprep.subr.mxu0 0.0
          %711 = vmatpush2.xpose.msra.mxu0 0.0
          %712 = vmatprep.subr.mxu0 0.0
          %713 = vmatpush2.xpose.msra.mxu0 0.0
          %714 = vmatprep.subr.mxu0 0.0
          %715 = vmatpush2.xpose.msra.mxu0 0.0
          %716 = vmatprep.subr.mxu0 0.0
          %717 = vmatpush2.xpose.msra.mxu0 0.0
          %718 = vmatprep.subr.mxu0 0.0
          %719 = vmatpush2.xpose.msra.mxu0 0.0
          %720 = vmatprep.subr.mxu0 0.0
          %721 = vmatpush2.xpose.msra.mxu0 0.0
          %722 = vmatprep.subr.mxu0 0.0
          %723 = vmatpush2.xpose.msra.mxu0 0.0
          %724 = vmatprep.subr.mxu0 0.0
          %725 = vmatpush2.xpose.msra.mxu0 0.0
          %726 = vmatprep.subr.mxu0 0.0
          %727 = vmatpush2.xpose.msra.mxu0 0.0
          %728 = vmatprep.subr.mxu0 0.0
          %729 = vmatpush2.xpose.msra.mxu0 0.0
          %730 = vmatprep.subr.mxu0 0.0
          %731 = vmatpush2.xpose.msra.mxu0 0.0
          %732 = vmatprep.subr.mxu0 0.0
          %733 = vmatpush2.xpose.msra.mxu0 0.0
          %734 = vmatprep.subr.mxu0 0.0
          %735 = vmatpush2.xpose.msra.mxu0 0.0
          %736 = vmatprep.subr.mxu0 0.0
          %737 = vmatpush2.xpose.msra.mxu0 0.0
          %738 = vmatprep.subr.mxu0 0.0
          %739 = vmatpush2.xpose.msra.mxu0 0.0
          %740 = vmatprep.mubr.f32.mxu0 0.0
          %741 = vmatmul.mubr.f32.gmra.mxu0 %v459
          %v742 = vpop.f32.mrf.mxu0
          %v743 = vadd.f32 %v671, %v742
          %v744 = vpop.f32.mrf.mxu0
          %745 = vmatprep.mubr.f32.mxu0 0.0
          %746 = vmatmul.mubr.f32.gmra.mxu0 %v462
          %v747 = vpop.f32.mrf.mxu0
          %v748 = vadd.f32 %v671, %v747
          %v749 = vpop.f32.mrf.mxu0
          %750 = vmatprep.mubr.f32.mxu0 0.0
          %751 = vmatmul.mubr.f32.gmra.mxu0 %v465
          %v752 = vpop.f32.mrf.mxu0
          %v753 = vadd.f32 %v671, %v752
          %v754 = vpop.f32.mrf.mxu0
          %755 = vmatprep.mubr.f32.mxu0 0.0
          %756 = vmatmul.mubr.f32.gmra.mxu0 %v468
          %v757 = vpop.f32.mrf.mxu0
          %v758 = vadd.f32 %v671, %v757
          %v759 = vpop.f32.mrf.mxu0
          %760 = vdwg.mxu0
          %s761 = scalar_lea.vmem [#allocation12], 8
          %v762 = vld [vmem:[%s761] sm:$0xff]
          %s763 = scalar_lea.vmem %s6, 1
          %v764 = vld [vmem:[%s763] sm:$0x1]
          %v766 = vlaneseq
          %v767 = vshrl.u32 %v766, 7
          %v768 = vsub.s32 0, %v767
          %v769 = vrot.slane %v764, %v768
          %v772 = vsel %vm457, %v762, 0
          %774 = vmatprep.subr.mxu0 0.0
          %775 = vmatpush1.xpose.msra.mxu0 0.0
          %776 = vmatprep.subr.mxu0 0.0
          %777 = vmatpush1.xpose.msra.mxu0 0.0
          %778 = vmatprep.subr.mxu0 0.0
          %779 = vmatpush1.xpose.msra.mxu0 0.0
          %780 = vmatprep.subr.mxu0 0.0
          %781 = vmatpush1.xpose.msra.mxu0 0.0
          %782 = vmatprep.subr.mxu0 0.0
          %783 = vmatpush1.xpose.msra.mxu0 0.0
          %784 = vmatprep.subr.mxu0 0.0
          %785 = vmatpush1.xpose.msra.mxu0 0.0
          %786 = vmatprep.subr.mxu0 0.0
          %787 = vmatpush1.xpose.msra.mxu0 0.0
          %788 = vmatprep.subr.mxu0 0.0
          %789 = vmatpush1.xpose.msra.mxu0 0.0
          %790 = vmatprep.subr.mxu0 0.0
          %791 = vmatpush1.xpose.msra.mxu0 0.0
          %792 = vmatprep.subr.mxu0 0.0
          %793 = vmatpush1.xpose.msra.mxu0 0.0
          %794 = vmatprep.subr.mxu0 0.0
          %795 = vmatpush1.xpose.msra.mxu0 0.0
          %796 = vmatprep.subr.mxu0 0.0
          %797 = vmatpush1.xpose.msra.mxu0 0.0
          %798 = vmatprep.subr.mxu0 0.0
          %799 = vmatpush1.xpose.msra.mxu0 0.0
          %800 = vmatprep.subr.mxu0 0.0
          %801 = vmatpush1.xpose.msra.mxu0 0.0
          %802 = vmatprep.subr.mxu0 0.0
          %803 = vmatpush1.xpose.msra.mxu0 0.0
          %804 = vmatprep.subr.mxu0 0.0
          %805 = vmatpush1.xpose.msra.mxu0 %v772
          %806 = vmatprep.subr.mxu0 0.0
          %807 = vmatpush2.xpose.msra.mxu0 0.0
          %808 = vmatprep.subr.mxu0 0.0
          %809 = vmatpush2.xpose.msra.mxu0 0.0
          %810 = vmatprep.subr.mxu0 0.0
          %811 = vmatpush2.xpose.msra.mxu0 0.0
          %812 = vmatprep.subr.mxu0 0.0
          %813 = vmatpush2.xpose.msra.mxu0 0.0
          %814 = vmatprep.subr.mxu0 0.0
          %815 = vmatpush2.xpose.msra.mxu0 0.0
          %816 = vmatprep.subr.mxu0 0.0
          %817 = vmatpush2.xpose.msra.mxu0 0.0
          %818 = vmatprep.subr.mxu0 0.0
          %819 = vmatpush2.xpose.msra.mxu0 0.0
          %820 = vmatprep.subr.mxu0 0.0
          %821 = vmatpush2.xpose.msra.mxu0 0.0
          %822 = vmatprep.subr.mxu0 0.0
          %823 = vmatpush2.xpose.msra.mxu0 0.0
          %824 = vmatprep.subr.mxu0 0.0
          %825 = vmatpush2.xpose.msra.mxu0 0.0
          %826 = vmatprep.subr.mxu0 0.0
          %827 = vmatpush2.xpose.msra.mxu0 0.0
          %828 = vmatprep.subr.mxu0 0.0
          %829 = vmatpush2.xpose.msra.mxu0 0.0
          %830 = vmatprep.subr.mxu0 0.0
          %831 = vmatpush2.xpose.msra.mxu0 0.0
          %832 = vmatprep.subr.mxu0 0.0
          %833 = vmatpush2.xpose.msra.mxu0 0.0
          %834 = vmatprep.subr.mxu0 0.0
          %835 = vmatpush2.xpose.msra.mxu0 0.0
          %836 = vmatprep.subr.mxu0 0.0
          %837 = vmatpush2.xpose.msra.mxu0 0.0
          %838 = vmatprep.mubr.f32.mxu0 0.0
          %839 = vmatmul.mubr.f32.gmra.mxu0 %v459
          %v840 = vpop.f32.mrf.mxu0
          %v841 = vadd.f32 %v769, %v840
          %v842 = vpop.f32.mrf.mxu0
          %843 = vmatprep.mubr.f32.mxu0 0.0
          %844 = vmatmul.mubr.f32.gmra.mxu0 %v462
          %v845 = vpop.f32.mrf.mxu0
          %v846 = vadd.f32 %v769, %v845
          %v847 = vpop.f32.mrf.mxu0
          %848 = vmatprep.mubr.f32.mxu0 0.0
          %849 = vmatmul.mubr.f32.gmra.mxu0 %v465
          %v850 = vpop.f32.mrf.mxu0
          %v851 = vadd.f32 %v769, %v850
          %v852 = vpop.f32.mrf.mxu0
          %853 = vmatprep.mubr.f32.mxu0 0.0
          %854 = vmatmul.mubr.f32.gmra.mxu0 %v468
          %v855 = vpop.f32.mrf.mxu0
          %v856 = vadd.f32 %v769, %v855
          %v857 = vpop.f32.mrf.mxu0
          %858 = vdwg.mxu0
          %s859 = scalar_lea.vmem [#allocation2], 32
          %860 = vst.msk [vmem:[%s859] sm:$0xff] %vm654, %v743
          %861 = vst.msk [vmem:[%s859 + $0x8] sm:$0xff] %vm654, %v748
          %862 = vst.msk [vmem:[%s859 + $0x10] sm:$0xff] %vm654, %v753
          %863 = vst.msk [vmem:[%s859 + $0x18] sm:$0xff] %vm654, %v758
          %s864 = scalar_lea.vmem [#allocation3], 32
          %865 = vst.msk [vmem:[%s864] sm:$0xff] %vm654, %v841
          %866 = vst.msk [vmem:[%s864 + $0x8] sm:$0xff] %vm654, %v846
          %867 = vst.msk [vmem:[%s864 + $0x10] sm:$0xff] %vm654, %v851
          %868 = vst.msk [vmem:[%s864 + $0x18] sm:$0xff] %vm654, %v856
          %s869 = scalar_lea.vmem [#allocation10], 16
          %v870 = vld [vmem:[%s869] sm:$0xff]
          %s871 = scalar_lea.vmem %s4, 2
          %v872 = vld [vmem:[%s871] sm:$0x1]
          %v874 = vlaneseq
          %v875 = vshrl.u32 %v874, 7
          %v876 = vsub.s32 0, %v875
          %v877 = vrot.slane %v872, %v876
          %v880 = vsel %vm457, %v870, 0
          %882 = vmatprep.subr.mxu0 0.0
          %883 = vmatpush1.xpose.msra.mxu0 0.0
          %884 = vmatprep.subr.mxu0 0.0
          %885 = vmatpush1.xpose.msra.mxu0 0.0
          %886 = vmatprep.subr.mxu0 0.0
          %887 = vmatpush1.xpose.msra.mxu0 0.0
          %888 = vmatprep.subr.mxu0 0.0
          %889 = vmatpush1.xpose.msra.mxu0 0.0
          %890 = vmatprep.subr.mxu0 0.0
          %891 = vmatpush1.xpose.msra.mxu0 0.0
          %892 = vmatprep.subr.mxu0 0.0
          %893 = vmatpush1.xpose.msra.mxu0 0.0
          %894 = vmatprep.subr.mxu0 0.0
          %895 = vmatpush1.xpose.msra.mxu0 0.0
          %896 = vmatprep.subr.mxu0 0.0
          %897 = vmatpush1.xpose.msra.mxu0 0.0
          %898 = vmatprep.subr.mxu0 0.0
          %899 = vmatpush1.xpose.msra.mxu0 0.0
          %900 = vmatprep.subr.mxu0 0.0
          %901 = vmatpush1.xpose.msra.mxu0 0.0
          %902 = vmatprep.subr.mxu0 0.0
          %903 = vmatpush1.xpose.msra.mxu0 0.0
          %904 = vmatprep.subr.mxu0 0.0
          %905 = vmatpush1.xpose.msra.mxu0 0.0
          %906 = vmatprep.subr.mxu0 0.0
          %907 = vmatpush1.xpose.msra.mxu0 0.0
          %908 = vmatprep.subr.mxu0 0.0
          %909 = vmatpush1.xpose.msra.mxu0 0.0
          %910 = vmatprep.subr.mxu0 0.0
          %911 = vmatpush1.xpose.msra.mxu0 0.0
          %912 = vmatprep.subr.mxu0 0.0
          %913 = vmatpush1.xpose.msra.mxu0 %v880
          %914 = vmatprep.subr.mxu0 0.0
          %915 = vmatpush2.xpose.msra.mxu0 0.0
          %916 = vmatprep.subr.mxu0 0.0
          %917 = vmatpush2.xpose.msra.mxu0 0.0
          %918 = vmatprep.subr.mxu0 0.0
          %919 = vmatpush2.xpose.msra.mxu0 0.0
          %920 = vmatprep.subr.mxu0 0.0
          %921 = vmatpush2.xpose.msra.mxu0 0.0
          %922 = vmatprep.subr.mxu0 0.0
          %923 = vmatpush2.xpose.msra.mxu0 0.0
          %924 = vmatprep.subr.mxu0 0.0
          %925 = vmatpush2.xpose.msra.mxu0 0.0
          %926 = vmatprep.subr.mxu0 0.0
          %927 = vmatpush2.xpose.msra.mxu0 0.0
          %928 = vmatprep.subr.mxu0 0.0
          %929 = vmatpush2.xpose.msra.mxu0 0.0
          %930 = vmatprep.subr.mxu0 0.0
          %931 = vmatpush2.xpose.msra.mxu0 0.0
          %932 = vmatprep.subr.mxu0 0.0
          %933 = vmatpush2.xpose.msra.mxu0 0.0
          %934 = vmatprep.subr.mxu0 0.0
          %935 = vmatpush2.xpose.msra.mxu0 0.0
          %936 = vmatprep.subr.mxu0 0.0
          %937 = vmatpush2.xpose.msra.mxu0 0.0
          %938 = vmatprep.subr.mxu0 0.0
          %939 = vmatpush2.xpose.msra.mxu0 0.0
          %940 = vmatprep.subr.mxu0 0.0
          %941 = vmatpush2.xpose.msra.mxu0 0.0
          %942 = vmatprep.subr.mxu0 0.0
          %943 = vmatpush2.xpose.msra.mxu0 0.0
          %944 = vmatprep.subr.mxu0 0.0
          %945 = vmatpush2.xpose.msra.mxu0 0.0
          %946 = vmatprep.mubr.f32.mxu0 0.0
          %947 = vmatmul.mubr.f32.gmra.mxu0 %v459
          %v948 = vpop.f32.mrf.mxu0
          %v949 = vadd.f32 %v877, %v948
          %v950 = vpop.f32.mrf.mxu0
          %951 = vmatprep.mubr.f32.mxu0 0.0
          %952 = vmatmul.mubr.f32.gmra.mxu0 %v462
          %v953 = vpop.f32.mrf.mxu0
          %v954 = vadd.f32 %v877, %v953
          %v955 = vpop.f32.mrf.mxu0
          %956 = vmatprep.mubr.f32.mxu0 0.0
          %957 = vmatmul.mubr.f32.gmra.mxu0 %v465
          %v958 = vpop.f32.mrf.mxu0
          %v959 = vadd.f32 %v877, %v958
          %v960 = vpop.f32.mrf.mxu0
          %961 = vmatprep.mubr.f32.mxu0 0.0
          %962 = vmatmul.mubr.f32.gmra.mxu0 %v468
          %v963 = vpop.f32.mrf.mxu0
          %v964 = vadd.f32 %v877, %v963
          %v965 = vpop.f32.mrf.mxu0
          %966 = vdwg.mxu0
          %s967 = scalar_lea.vmem [#allocation12], 16
          %v968 = vld [vmem:[%s967] sm:$0xff]
          %s969 = scalar_lea.vmem %s6, 2
          %v970 = vld [vmem:[%s969] sm:$0x1]
          %v972 = vlaneseq
          %v973 = vshrl.u32 %v972, 7
          %v974 = vsub.s32 0, %v973
          %v975 = vrot.slane %v970, %v974
          %v978 = vsel %vm457, %v968, 0
          %980 = vmatprep.subr.mxu0 0.0
          %981 = vmatpush1.xpose.msra.mxu0 0.0
          %982 = vmatprep.subr.mxu0 0.0
          %983 = vmatpush1.xpose.msra.mxu0 0.0
          %984 = vmatprep.subr.mxu0 0.0
          %985 = vmatpush1.xpose.msra.mxu0 0.0
          %986 = vmatprep.subr.mxu0 0.0
          %987 = vmatpush1.xpose.msra.mxu0 0.0
          %988 = vmatprep.subr.mxu0 0.0
          %989 = vmatpush1.xpose.msra.mxu0 0.0
          %990 = vmatprep.subr.mxu0 0.0
          %991 = vmatpush1.xpose.msra.mxu0 0.0
          %992 = vmatprep.subr.mxu0 0.0
          %993 = vmatpush1.xpose.msra.mxu0 0.0
          %994 = vmatprep.subr.mxu0 0.0
          %995 = vmatpush1.xpose.msra.mxu0 0.0
          %996 = vmatprep.subr.mxu0 0.0
          %997 = vmatpush1.xpose.msra.mxu0 0.0
          %998 = vmatprep.subr.mxu0 0.0
          %999 = vmatpush1.xpose.msra.mxu0 0.0
          %1000 = vmatprep.subr.mxu0 0.0
          %1001 = vmatpush1.xpose.msra.mxu0 0.0
          %1002 = vmatprep.subr.mxu0 0.0
          %1003 = vmatpush1.xpose.msra.mxu0 0.0
          %1004 = vmatprep.subr.mxu0 0.0
          %1005 = vmatpush1.xpose.msra.mxu0 0.0
          %1006 = vmatprep.subr.mxu0 0.0
          %1007 = vmatpush1.xpose.msra.mxu0 0.0
          %1008 = vmatprep.subr.mxu0 0.0
          %1009 = vmatpush1.xpose.msra.mxu0 0.0
          %1010 = vmatprep.subr.mxu0 0.0
          %1011 = vmatpush1.xpose.msra.mxu0 %v978
          %1012 = vmatprep.subr.mxu0 0.0
          %1013 = vmatpush2.xpose.msra.mxu0 0.0
          %1014 = vmatprep.subr.mxu0 0.0
          %1015 = vmatpush2.xpose.msra.mxu0 0.0
          %1016 = vmatprep.subr.mxu0 0.0
          %1017 = vmatpush2.xpose.msra.mxu0 0.0
          %1018 = vmatprep.subr.mxu0 0.0
          %1019 = vmatpush2.xpose.msra.mxu0 0.0
          %1020 = vmatprep.subr.mxu0 0.0
          %1021 = vmatpush2.xpose.msra.mxu0 0.0
          %1022 = vmatprep.subr.mxu0 0.0
          %1023 = vmatpush2.xpose.msra.mxu0 0.0
          %1024 = vmatprep.subr.mxu0 0.0
          %1025 = vmatpush2.xpose.msra.mxu0 0.0
          %1026 = vmatprep.subr.mxu0 0.0
          %1027 = vmatpush2.xpose.msra.mxu0 0.0
          %1028 = vmatprep.subr.mxu0 0.0
          %1029 = vmatpush2.xpose.msra.mxu0 0.0
          %1030 = vmatprep.subr.mxu0 0.0
          %1031 = vmatpush2.xpose.msra.mxu0 0.0
          %1032 = vmatprep.subr.mxu0 0.0
          %1033 = vmatpush2.xpose.msra.mxu0 0.0
          %1034 = vmatprep.subr.mxu0 0.0
          %1035 = vmatpush2.xpose.msra.mxu0 0.0
          %1036 = vmatprep.subr.mxu0 0.0
          %1037 = vmatpush2.xpose.msra.mxu0 0.0
          %1038 = vmatprep.subr.mxu0 0.0
          %1039 = vmatpush2.xpose.msra.mxu0 0.0
          %1040 = vmatprep.subr.mxu0 0.0
          %1041 = vmatpush2.xpose.msra.mxu0 0.0
          %1042 = vmatprep.subr.mxu0 0.0
          %1043 = vmatpush2.xpose.msra.mxu0 0.0
          %1044 = vmatprep.mubr.f32.mxu0 0.0
          %1045 = vmatmul.mubr.f32.gmra.mxu0 %v459
          %v1046 = vpop.f32.mrf.mxu0
          %v1047 = vadd.f32 %v975, %v1046
          %v1048 = vpop.f32.mrf.mxu0
          %1049 = vmatprep.mubr.f32.mxu0 0.0
          %1050 = vmatmul.mubr.f32.gmra.mxu0 %v462
          %v1051 = vpop.f32.mrf.mxu0
          %v1052 = vadd.f32 %v975, %v1051
          %v1053 = vpop.f32.mrf.mxu0
          %1054 = vmatprep.mubr.f32.mxu0 0.0
          %1055 = vmatmul.mubr.f32.gmra.mxu0 %v465
          %v1056 = vpop.f32.mrf.mxu0
          %v1057 = vadd.f32 %v975, %v1056
          %v1058 = vpop.f32.mrf.mxu0
          %1059 = vmatprep.mubr.f32.mxu0 0.0
          %1060 = vmatmul.mubr.f32.gmra.mxu0 %v468
          %v1061 = vpop.f32.mrf.mxu0
          %v1062 = vadd.f32 %v975, %v1061
          %v1063 = vpop.f32.mrf.mxu0
          %1064 = vdwg.mxu0
          %s1065 = scalar_lea.vmem [#allocation2], 64
          %1066 = vst.msk [vmem:[%s1065] sm:$0xff] %vm654, %v949
          %1067 = vst.msk [vmem:[%s1065 + $0x8] sm:$0xff] %vm654, %v954
          %1068 = vst.msk [vmem:[%s1065 + $0x10] sm:$0xff] %vm654, %v959
          %1069 = vst.msk [vmem:[%s1065 + $0x18] sm:$0xff] %vm654, %v964
          %s1070 = scalar_lea.vmem [#allocation3], 64
          %1071 = vst.msk [vmem:[%s1070] sm:$0xff] %vm654, %v1047
          %1072 = vst.msk [vmem:[%s1070 + $0x8] sm:$0xff] %vm654, %v1052
          %1073 = vst.msk [vmem:[%s1070 + $0x10] sm:$0xff] %vm654, %v1057
          %1074 = vst.msk [vmem:[%s1070 + $0x18] sm:$0xff] %vm654, %v1062
          %s1075 = scalar_lea.vmem [#allocation10], 24
          %v1076 = vld [vmem:[%s1075] sm:$0xff]
          %s1077 = scalar_lea.vmem %s4, 3
          %v1078 = vld [vmem:[%s1077] sm:$0x1]
          %v1080 = vlaneseq
          %v1081 = vshrl.u32 %v1080, 7
          %v1082 = vsub.s32 0, %v1081
          %v1083 = vrot.slane %v1078, %v1082
          %v1086 = vsel %vm457, %v1076, 0
          %1088 = vmatprep.subr.mxu0 0.0
          %1089 = vmatpush1.xpose.msra.mxu0 0.0
          %1090 = vmatprep.subr.mxu0 0.0
          %1091 = vmatpush1.xpose.msra.mxu0 0.0
          %1092 = vmatprep.subr.mxu0 0.0
          %1093 = vmatpush1.xpose.msra.mxu0 0.0
          %1094 = vmatprep.subr.mxu0 0.0
          %1095 = vmatpush1.xpose.msra.mxu0 0.0
          %1096 = vmatprep.subr.mxu0 0.0
          %1097 = vmatpush1.xpose.msra.mxu0 0.0
          %1098 = vmatprep.subr.mxu0 0.0
          %1099 = vmatpush1.xpose.msra.mxu0 0.0
          %1100 = vmatprep.subr.mxu0 0.0
          %1101 = vmatpush1.xpose.msra.mxu0 0.0
          %1102 = vmatprep.subr.mxu0 0.0
          %1103 = vmatpush1.xpose.msra.mxu0 0.0
          %1104 = vmatprep.subr.mxu0 0.0
          %1105 = vmatpush1.xpose.msra.mxu0 0.0
          %1106 = vmatprep.subr.mxu0 0.0
          %1107 = vmatpush1.xpose.msra.mxu0 0.0
          %1108 = vmatprep.subr.mxu0 0.0
          %1109 = vmatpush1.xpose.msra.mxu0 0.0
          %1110 = vmatprep.subr.mxu0 0.0
          %1111 = vmatpush1.xpose.msra.mxu0 0.0
          %1112 = vmatprep.subr.mxu0 0.0
          %1113 = vmatpush1.xpose.msra.mxu0 0.0
          %1114 = vmatprep.subr.mxu0 0.0
          %1115 = vmatpush1.xpose.msra.mxu0 0.0
          %1116 = vmatprep.subr.mxu0 0.0
          %1117 = vmatpush1.xpose.msra.mxu0 0.0
          %1118 = vmatprep.subr.mxu0 0.0
          %1119 = vmatpush1.xpose.msra.mxu0 %v1086
          %1120 = vmatprep.subr.mxu0 0.0
          %1121 = vmatpush2.xpose.msra.mxu0 0.0
          %1122 = vmatprep.subr.mxu0 0.0
          %1123 = vmatpush2.xpose.msra.mxu0 0.0
          %1124 = vmatprep.subr.mxu0 0.0
          %1125 = vmatpush2.xpose.msra.mxu0 0.0
          %1126 = vmatprep.subr.mxu0 0.0
          %1127 = vmatpush2.xpose.msra.mxu0 0.0
          %1128 = vmatprep.subr.mxu0 0.0
          %1129 = vmatpush2.xpose.msra.mxu0 0.0
          %1130 = vmatprep.subr.mxu0 0.0
          %1131 = vmatpush2.xpose.msra.mxu0 0.0
          %1132 = vmatprep.subr.mxu0 0.0
          %1133 = vmatpush2.xpose.msra.mxu0 0.0
          %1134 = vmatprep.subr.mxu0 0.0
          %1135 = vmatpush2.xpose.msra.mxu0 0.0
          %1136 = vmatprep.subr.mxu0 0.0
          %1137 = vmatpush2.xpose.msra.mxu0 0.0
          %1138 = vmatprep.subr.mxu0 0.0
          %1139 = vmatpush2.xpose.msra.mxu0 0.0
          %1140 = vmatprep.subr.mxu0 0.0
          %1141 = vmatpush2.xpose.msra.mxu0 0.0
          %1142 = vmatprep.subr.mxu0 0.0
          %1143 = vmatpush2.xpose.msra.mxu0 0.0
          %1144 = vmatprep.subr.mxu0 0.0
          %1145 = vmatpush2.xpose.msra.mxu0 0.0
          %1146 = vmatprep.subr.mxu0 0.0
          %1147 = vmatpush2.xpose.msra.mxu0 0.0
          %1148 = vmatprep.subr.mxu0 0.0
          %1149 = vmatpush2.xpose.msra.mxu0 0.0
          %1150 = vmatprep.subr.mxu0 0.0
          %1151 = vmatpush2.xpose.msra.mxu0 0.0
          %1152 = vmatprep.mubr.f32.mxu0 0.0
          %1153 = vmatmul.mubr.f32.gmra.mxu0 %v459
          %v1154 = vpop.f32.mrf.mxu0
          %v1155 = vadd.f32 %v1083, %v1154
          %v1156 = vpop.f32.mrf.mxu0
          %1157 = vmatprep.mubr.f32.mxu0 0.0
          %1158 = vmatmul.mubr.f32.gmra.mxu0 %v462
          %v1159 = vpop.f32.mrf.mxu0
          %v1160 = vadd.f32 %v1083, %v1159
          %v1161 = vpop.f32.mrf.mxu0
          %1162 = vmatprep.mubr.f32.mxu0 0.0
          %1163 = vmatmul.mubr.f32.gmra.mxu0 %v465
          %v1164 = vpop.f32.mrf.mxu0
          %v1165 = vadd.f32 %v1083, %v1164
          %v1166 = vpop.f32.mrf.mxu0
          %1167 = vmatprep.mubr.f32.mxu0 0.0
          %1168 = vmatmul.mubr.f32.gmra.mxu0 %v468
          %v1169 = vpop.f32.mrf.mxu0
          %v1170 = vadd.f32 %v1083, %v1169
          %v1171 = vpop.f32.mrf.mxu0
          %1172 = vdwg.mxu0
          %s1173 = scalar_lea.vmem [#allocation12], 24
          %v1174 = vld [vmem:[%s1173] sm:$0xff]
          %s1175 = scalar_lea.vmem %s6, 3
          %v1176 = vld [vmem:[%s1175] sm:$0x1]
          %v1178 = vlaneseq
          %v1179 = vshrl.u32 %v1178, 7
          %v1180 = vsub.s32 0, %v1179
          %v1181 = vrot.slane %v1176, %v1180
          %v1184 = vsel %vm457, %v1174, 0
          %1186 = vmatprep.subr.mxu0 0.0
          %1187 = vmatpush1.xpose.msra.mxu0 0.0
          %1188 = vmatprep.subr.mxu0 0.0
          %1189 = vmatpush1.xpose.msra.mxu0 0.0
          %1190 = vmatprep.subr.mxu0 0.0
          %1191 = vmatpush1.xpose.msra.mxu0 0.0
          %1192 = vmatprep.subr.mxu0 0.0
          %1193 = vmatpush1.xpose.msra.mxu0 0.0
          %1194 = vmatprep.subr.mxu0 0.0
          %1195 = vmatpush1.xpose.msra.mxu0 0.0
          %1196 = vmatprep.subr.mxu0 0.0
          %1197 = vmatpush1.xpose.msra.mxu0 0.0
          %1198 = vmatprep.subr.mxu0 0.0
          %1199 = vmatpush1.xpose.msra.mxu0 0.0
          %1200 = vmatprep.subr.mxu0 0.0
          %1201 = vmatpush1.xpose.msra.mxu0 0.0
          %1202 = vmatprep.subr.mxu0 0.0
          %1203 = vmatpush1.xpose.msra.mxu0 0.0
          %1204 = vmatprep.subr.mxu0 0.0
          %1205 = vmatpush1.xpose.msra.mxu0 0.0
          %1206 = vmatprep.subr.mxu0 0.0
          %1207 = vmatpush1.xpose.msra.mxu0 0.0
          %1208 = vmatprep.subr.mxu0 0.0
          %1209 = vmatpush1.xpose.msra.mxu0 0.0
          %1210 = vmatprep.subr.mxu0 0.0
          %1211 = vmatpush1.xpose.msra.mxu0 0.0
          %1212 = vmatprep.subr.mxu0 0.0
          %1213 = vmatpush1.xpose.msra.mxu0 0.0
          %1214 = vmatprep.subr.mxu0 0.0
          %1215 = vmatpush1.xpose.msra.mxu0 0.0
          %1216 = vmatprep.subr.mxu0 0.0
          %1217 = vmatpush1.xpose.msra.mxu0 %v1184
          %1218 = vmatprep.subr.mxu0 0.0
          %1219 = vmatpush2.xpose.msra.mxu0 0.0
          %1220 = vmatprep.subr.mxu0 0.0
          %1221 = vmatpush2.xpose.msra.mxu0 0.0
          %1222 = vmatprep.subr.mxu0 0.0
          %1223 = vmatpush2.xpose.msra.mxu0 0.0
          %1224 = vmatprep.subr.mxu0 0.0
          %1225 = vmatpush2.xpose.msra.mxu0 0.0
          %1226 = vmatprep.subr.mxu0 0.0
          %1227 = vmatpush2.xpose.msra.mxu0 0.0
          %1228 = vmatprep.subr.mxu0 0.0
          %1229 = vmatpush2.xpose.msra.mxu0 0.0
          %1230 = vmatprep.subr.mxu0 0.0
          %1231 = vmatpush2.xpose.msra.mxu0 0.0
          %1232 = vmatprep.subr.mxu0 0.0
          %1233 = vmatpush2.xpose.msra.mxu0 0.0
          %1234 = vmatprep.subr.mxu0 0.0
          %1235 = vmatpush2.xpose.msra.mxu0 0.0
          %1236 = vmatprep.subr.mxu0 0.0
          %1237 = vmatpush2.xpose.msra.mxu0 0.0
          %1238 = vmatprep.subr.mxu0 0.0
          %1239 = vmatpush2.xpose.msra.mxu0 0.0
          %1240 = vmatprep.subr.mxu0 0.0
          %1241 = vmatpush2.xpose.msra.mxu0 0.0
          %1242 = vmatprep.subr.mxu0 0.0
          %1243 = vmatpush2.xpose.msra.mxu0 0.0
          %1244 = vmatprep.subr.mxu0 0.0
          %1245 = vmatpush2.xpose.msra.mxu0 0.0
          %1246 = vmatprep.subr.mxu0 0.0
          %1247 = vmatpush2.xpose.msra.mxu0 0.0
          %1248 = vmatprep.subr.mxu0 0.0
          %1249 = vmatpush2.xpose.msra.mxu0 0.0
          %1250 = vmatprep.mubr.f32.mxu0 0.0
          %1251 = vmatmul.mubr.f32.gmra.mxu0 %v459
          %v1252 = vpop.f32.mrf.mxu0
          %v1253 = vadd.f32 %v1181, %v1252
          %v1254 = vpop.f32.mrf.mxu0
          %1255 = vmatprep.mubr.f32.mxu0 0.0
          %1256 = vmatmul.mubr.f32.gmra.mxu0 %v462
          %v1257 = vpop.f32.mrf.mxu0
          %v1258 = vadd.f32 %v1181, %v1257
          %v1259 = vpop.f32.mrf.mxu0
          %1260 = vmatprep.mubr.f32.mxu0 0.0
          %1261 = vmatmul.mubr.f32.gmra.mxu0 %v465
          %v1262 = vpop.f32.mrf.mxu0
          %v1263 = vadd.f32 %v1181, %v1262
          %v1264 = vpop.f32.mrf.mxu0
          %1265 = vmatprep.mubr.f32.mxu0 0.0
          %1266 = vmatmul.mubr.f32.gmra.mxu0 %v468
          %v1267 = vpop.f32.mrf.mxu0
          %v1268 = vadd.f32 %v1181, %v1267
          %v1269 = vpop.f32.mrf.mxu0
          %1270 = vdwg.mxu0
          %s1271 = scalar_lea.vmem [#allocation2], 96
          %1272 = vst.msk [vmem:[%s1271] sm:$0xff] %vm654, %v1155
          %1273 = vst.msk [vmem:[%s1271 + $0x8] sm:$0xff] %vm654, %v1160
          %1274 = vst.msk [vmem:[%s1271 + $0x10] sm:$0xff] %vm654, %v1165
          %1275 = vst.msk [vmem:[%s1271 + $0x18] sm:$0xff] %vm654, %v1170
          %s1276 = scalar_lea.vmem [#allocation3], 96
          %1277 = vst.msk [vmem:[%s1276] sm:$0xff] %vm654, %v1253
          %1278 = vst.msk [vmem:[%s1276 + $0x8] sm:$0xff] %vm654, %v1258
          %1279 = vst.msk [vmem:[%s1276 + $0x10] sm:$0xff] %vm654, %v1263
          %1280 = vst.msk [vmem:[%s1276 + $0x18] sm:$0xff] %vm654, %v1268
        $region84: #{tpu_custom_call.1} parent=55 // pred_fallthru
          _
        %s1281 = smul.u32 %s34, 8
        %s1282 = scalar_lea.vmem %s384, %s1281 [#allocation4]
        %v1283 = vld [vmem:[%s1282] sm:$0xff]
        %v1284 = vld [vmem:[%s1282 + $0x10] sm:$0xff]
        %v1285 = vld [vmem:[#allocation7] sm:$0xff]
        %v1286 = vld [vmem:[#allocation9] sm:$0x1]
        %v1288 = vlaneseq
        %v1289 = vshrl.u32 %v1288, 7
        %v1290 = vsub.s32 0, %v1289
        %v1291 = vrot.slane %v1286, %v1290
        %vm1293 = vcmask 261120
        %v1295 = vsel %vm1293, %v1283, 0
        %v1298 = vsel %vm1293, %v1284, 0
        %v1301 = vsel %vm1293, %v1285, 0
        %1303 = vmatprep.subr.mxu0 0.0
        %1304 = vmatpush1.xpose.msra.mxu0 0.0
        %1305 = vmatprep.subr.mxu0 0.0
        %1306 = vmatpush1.xpose.msra.mxu0 0.0
        %1307 = vmatprep.subr.mxu0 0.0
        %1308 = vmatpush1.xpose.msra.mxu0 0.0
        %1309 = vmatprep.subr.mxu0 0.0
        %1310 = vmatpush1.xpose.msra.mxu0 0.0
        %1311 = vmatprep.subr.mxu0 0.0
        %1312 = vmatpush1.xpose.msra.mxu0 0.0
        %1313 = vmatprep.subr.mxu0 0.0
        %1314 = vmatpush1.xpose.msra.mxu0 0.0
        %1315 = vmatprep.subr.mxu0 0.0
        %1316 = vmatpush1.xpose.msra.mxu0 0.0
        %1317 = vmatprep.subr.mxu0 0.0
        %1318 = vmatpush1.xpose.msra.mxu0 0.0
        %1319 = vmatprep.subr.mxu0 0.0
        %1320 = vmatpush1.xpose.msra.mxu0 0.0
        %1321 = vmatprep.subr.mxu0 0.0
        %1322 = vmatpush1.xpose.msra.mxu0 0.0
        %1323 = vmatprep.subr.mxu0 0.0
        %1324 = vmatpush1.xpose.msra.mxu0 0.0
        %1325 = vmatprep.subr.mxu0 0.0
        %1326 = vmatpush1.xpose.msra.mxu0 0.0
        %1327 = vmatprep.subr.mxu0 0.0
        %1328 = vmatpush1.xpose.msra.mxu0 0.0
        %1329 = vmatprep.subr.mxu0 0.0
        %1330 = vmatpush1.xpose.msra.mxu0 0.0
        %1331 = vmatprep.subr.mxu0 0.0
        %1332 = vmatpush1.xpose.msra.mxu0 0.0
        %1333 = vmatprep.subr.mxu0 0.0
        %1334 = vmatpush1.xpose.msra.mxu0 %v1301
        %1335 = vmatprep.subr.mxu0 0.0
        %1336 = vmatpush2.xpose.msra.mxu0 0.0
        %1337 = vmatprep.subr.mxu0 0.0
        %1338 = vmatpush2.xpose.msra.mxu0 0.0
        %1339 = vmatprep.subr.mxu0 0.0
        %1340 = vmatpush2.xpose.msra.mxu0 0.0
        %1341 = vmatprep.subr.mxu0 0.0
        %1342 = vmatpush2.xpose.msra.mxu0 0.0
        %1343 = vmatprep.subr.mxu0 0.0
        %1344 = vmatpush2.xpose.msra.mxu0 0.0
        %1345 = vmatprep.subr.mxu0 0.0
        %1346 = vmatpush2.xpose.msra.mxu0 0.0
        %1347 = vmatprep.subr.mxu0 0.0
        %1348 = vmatpush2.xpose.msra.mxu0 0.0
        %1349 = vmatprep.subr.mxu0 0.0
        %1350 = vmatpush2.xpose.msra.mxu0 0.0
        %1351 = vmatprep.subr.mxu0 0.0
        %1352 = vmatpush2.xpose.msra.mxu0 0.0
        %1353 = vmatprep.subr.mxu0 0.0
        %1354 = vmatpush2.xpose.msra.mxu0 0.0
        %1355 = vmatprep.subr.mxu0 0.0
        %1356 = vmatpush2.xpose.msra.mxu0 0.0
        %1357 = vmatprep.subr.mxu0 0.0
        %1358 = vmatpush2.xpose.msra.mxu0 0.0
        %1359 = vmatprep.subr.mxu0 0.0
        %1360 = vmatpush2.xpose.msra.mxu0 0.0
        %1361 = vmatprep.subr.mxu0 0.0
        %1362 = vmatpush2.xpose.msra.mxu0 0.0
        %1363 = vmatprep.subr.mxu0 0.0
        %1364 = vmatpush2.xpose.msra.mxu0 0.0
        %1365 = vmatprep.subr.mxu0 0.0
        %1366 = vmatpush2.xpose.msra.mxu0 0.0
        %1367 = vmatprep.mubr.f32.mxu0 0.0
        %1368 = vmatmul.mubr.f32.gmra.mxu0 %v1295
        %v1369 = vpop.f32.mrf.mxu0
        %v1370 = vadd.f32 %v1291, %v1369
        %v1371 = vpop.f32.mrf.mxu0
        %1372 = vmatprep.mubr.f32.mxu0 0.0
        %1373 = vmatmul.mubr.f32.gmra.mxu0 %v1298
        %v1374 = vpop.f32.mrf.mxu0
        %v1375 = vadd.f32 %v1291, %v1374
        %v1376 = vpop.f32.mrf.mxu0
        %1377 = vdwg.mxu0
        %v1378 = vmul.f32 %v1370, 0.17677669
        %v1379 = vmul.f32 %v1375, 0.17677669
        %v1380 = vld [vmem:[#allocation2] sm:$0xff]
        %v1381 = vld [vmem:[#allocation2 + $0x8] sm:$0xff]
        %v1382 = vld [vmem:[#allocation2 + $0x10] sm:$0xff]
        %v1383 = vld [vmem:[#allocation2 + $0x18] sm:$0xff]
        %v1384 = vld [vmem:[#allocation3] sm:$0xff]
        %v1385 = vld [vmem:[#allocation3 + $0x8] sm:$0xff]
        %v1386 = vld [vmem:[#allocation3 + $0x10] sm:$0xff]
        %v1387 = vld [vmem:[#allocation3 + $0x18] sm:$0xff]
        %vm1388 = vcmask 64512
        %v1390 = vsel %vm1388, %v1378, 0
        %v1393 = vsel %vm1388, %v1380, 0
        %v1396 = vsel %vm1388, %v1381, 0
        %1398 = vmatprep.subr.mxu0 0.0
        %1399 = vmatpush1.xpose.msra.mxu0 0.0
        %1400 = vmatprep.subr.mxu0 0.0
        %1401 = vmatpush1.xpose.msra.mxu0 0.0
        %1402 = vmatprep.subr.mxu0 0.0
        %1403 = vmatpush1.xpose.msra.mxu0 0.0
        %1404 = vmatprep.subr.mxu0 0.0
        %1405 = vmatpush1.xpose.msra.mxu0 0.0
        %1406 = vmatprep.subr.mxu0 0.0
        %1407 = vmatpush1.xpose.msra.mxu0 0.0
        %1408 = vmatprep.subr.mxu0 0.0
        %1409 = vmatpush1.xpose.msra.mxu0 0.0
        %1410 = vmatprep.subr.mxu0 0.0
        %1411 = vmatpush1.xpose.msra.mxu0 0.0
        %1412 = vmatprep.subr.mxu0 0.0
        %1413 = vmatpush1.xpose.msra.mxu0 0.0
        %1414 = vmatprep.subr.mxu0 0.0
        %1415 = vmatpush1.xpose.msra.mxu0 0.0
        %1416 = vmatprep.subr.mxu0 0.0
        %1417 = vmatpush1.xpose.msra.mxu0 0.0
        %1418 = vmatprep.subr.mxu0 0.0
        %1419 = vmatpush1.xpose.msra.mxu0 0.0
        %1420 = vmatprep.subr.mxu0 0.0
        %1421 = vmatpush1.xpose.msra.mxu0 0.0
        %1422 = vmatprep.subr.mxu0 0.0
        %1423 = vmatpush1.xpose.msra.mxu0 0.0
        %1424 = vmatprep.subr.mxu0 0.0
        %1425 = vmatpush1.xpose.msra.mxu0 0.0
        %1426 = vmatprep.subr.mxu0 0.0
        %1427 = vmatpush1.xpose.msra.mxu0 %v1396
        %1428 = vmatprep.subr.mxu0 0.0
        %1429 = vmatpush1.xpose.msra.mxu0 %v1393
        %1430 = vmatprep.subr.mxu0 0.0
        %1431 = vmatpush2.xpose.msra.mxu0 0.0
        %1432 = vmatprep.subr.mxu0 0.0
        %1433 = vmatpush2.xpose.msra.mxu0 0.0
        %1434 = vmatprep.subr.mxu0 0.0
        %1435 = vmatpush2.xpose.msra.mxu0 0.0
        %1436 = vmatprep.subr.mxu0 0.0
        %1437 = vmatpush2.xpose.msra.mxu0 0.0
        %1438 = vmatprep.subr.mxu0 0.0
        %1439 = vmatpush2.xpose.msra.mxu0 0.0
        %1440 = vmatprep.subr.mxu0 0.0
        %1441 = vmatpush2.xpose.msra.mxu0 0.0
        %1442 = vmatprep.subr.mxu0 0.0
        %1443 = vmatpush2.xpose.msra.mxu0 0.0
        %1444 = vmatprep.subr.mxu0 0.0
        %1445 = vmatpush2.xpose.msra.mxu0 0.0
        %1446 = vmatprep.subr.mxu0 0.0
        %1447 = vmatpush2.xpose.msra.mxu0 0.0
        %1448 = vmatprep.subr.mxu0 0.0
        %1449 = vmatpush2.xpose.msra.mxu0 0.0
        %1450 = vmatprep.subr.mxu0 0.0
        %1451 = vmatpush2.xpose.msra.mxu0 0.0
        %1452 = vmatprep.subr.mxu0 0.0
        %1453 = vmatpush2.xpose.msra.mxu0 0.0
        %1454 = vmatprep.subr.mxu0 0.0
        %1455 = vmatpush2.xpose.msra.mxu0 0.0
        %1456 = vmatprep.subr.mxu0 0.0
        %1457 = vmatpush2.xpose.msra.mxu0 0.0
        %1458 = vmatprep.subr.mxu0 0.0
        %1459 = vmatpush2.xpose.msra.mxu0 0.0
        %1460 = vmatprep.subr.mxu0 0.0
        %1461 = vmatpush2.xpose.msra.mxu0 0.0
        %1462 = vmatprep.mubr.f32.mxu0 0.0
        %1463 = vmatmul.mubr.f32.gmra.mxu0 %v1390
        %v1464 = vpop.f32.mrf.mxu0
        %v1465 = vadd.f32 0.0, %v1464
        %v1466 = vpop.f32.mrf.mxu0
        %1467 = vdwg.mxu0
        %v1469 = vsel %vm1388, %v1379, 0
        %v1472 = vsel %vm1388, %v1382, 0
        %v1475 = vsel %vm1388, %v1383, 0
        %1477 = vmatprep.subr.mxu0 0.0
        %1478 = vmatpush1.xpose.msra.mxu0 0.0
        %1479 = vmatprep.subr.mxu0 0.0
        %1480 = vmatpush1.xpose.msra.mxu0 0.0
        %1481 = vmatprep.subr.mxu0 0.0
        %1482 = vmatpush1.xpose.msra.mxu0 0.0
        %1483 = vmatprep.subr.mxu0 0.0
        %1484 = vmatpush1.xpose.msra.mxu0 0.0
        %1485 = vmatprep.subr.mxu0 0.0
        %1486 = vmatpush1.xpose.msra.mxu0 0.0
        %1487 = vmatprep.subr.mxu0 0.0
        %1488 = vmatpush1.xpose.msra.mxu0 0.0
        %1489 = vmatprep.subr.mxu0 0.0
        %1490 = vmatpush1.xpose.msra.mxu0 0.0
        %1491 = vmatprep.subr.mxu0 0.0
        %1492 = vmatpush1.xpose.msra.mxu0 0.0
        %1493 = vmatprep.subr.mxu0 0.0
        %1494 = vmatpush1.xpose.msra.mxu0 0.0
        %1495 = vmatprep.subr.mxu0 0.0
        %1496 = vmatpush1.xpose.msra.mxu0 0.0
        %1497 = vmatprep.subr.mxu0 0.0
        %1498 = vmatpush1.xpose.msra.mxu0 0.0
        %1499 = vmatprep.subr.mxu0 0.0
        %1500 = vmatpush1.xpose.msra.mxu0 0.0
        %1501 = vmatprep.subr.mxu0 0.0
        %1502 = vmatpush1.xpose.msra.mxu0 0.0
        %1503 = vmatprep.subr.mxu0 0.0
        %1504 = vmatpush1.xpose.msra.mxu0 0.0
        %1505 = vmatprep.subr.mxu0 0.0
        %1506 = vmatpush1.xpose.msra.mxu0 %v1475
        %1507 = vmatprep.subr.mxu0 0.0
        %1508 = vmatpush1.xpose.msra.mxu0 %v1472
        %1509 = vmatprep.subr.mxu0 0.0
        %1510 = vmatpush2.xpose.msra.mxu0 0.0
        %1511 = vmatprep.subr.mxu0 0.0
        %1512 = vmatpush2.xpose.msra.mxu0 0.0
        %1513 = vmatprep.subr.mxu0 0.0
        %1514 = vmatpush2.xpose.msra.mxu0 0.0
        %1515 = vmatprep.subr.mxu0 0.0
        %1516 = vmatpush2.xpose.msra.mxu0 0.0
        %1517 = vmatprep.subr.mxu0 0.0
        %1518 = vmatpush2.xpose.msra.mxu0 0.0
        %1519 = vmatprep.subr.mxu0 0.0
        %1520 = vmatpush2.xpose.msra.mxu0 0.0
        %1521 = vmatprep.subr.mxu0 0.0
        %1522 = vmatpush2.xpose.msra.mxu0 0.0
        %1523 = vmatprep.subr.mxu0 0.0
        %1524 = vmatpush2.xpose.msra.mxu0 0.0
        %1525 = vmatprep.subr.mxu0 0.0
        %1526 = vmatpush2.xpose.msra.mxu0 0.0
        %1527 = vmatprep.subr.mxu0 0.0
        %1528 = vmatpush2.xpose.msra.mxu0 0.0
        %1529 = vmatprep.subr.mxu0 0.0
        %1530 = vmatpush2.xpose.msra.mxu0 0.0
        %1531 = vmatprep.subr.mxu0 0.0
        %1532 = vmatpush2.xpose.msra.mxu0 0.0
        %1533 = vmatprep.subr.mxu0 0.0
        %1534 = vmatpush2.xpose.msra.mxu0 0.0
        %1535 = vmatprep.subr.mxu0 0.0
        %1536 = vmatpush2.xpose.msra.mxu0 0.0
        %1537 = vmatprep.subr.mxu0 0.0
        %1538 = vmatpush2.xpose.msra.mxu0 0.0
        %1539 = vmatprep.subr.mxu0 0.0
        %1540 = vmatpush2.xpose.msra.mxu0 0.0
        %1541 = vmatprep.mubr.f32.mxu0 0.0
        %1542 = vmatmul.mubr.f32.gmra.mxu0 %v1469
        %v1543 = vpop.f32.mrf.mxu0
        %v1544 = vadd.f32 0.0, %v1543
        %v1545 = vpop.f32.mrf.mxu0
        %1546 = vdwg.mxu0
        %vm1547 = vcmask 130048
        %v1548 = vsel %vm1547, %v1465, -inf
        %1549 = vmax.xlane.f32.xlu0 %v1548
        %v1550 = vpop.xlane.xlu0 %1549
        %v1551 = vsel %vm1547, %v1544, -inf
        %1552 = vmax.xlane.f32.xlu0 %v1551
        %v1553 = vpop.xlane.xlu0 %1552
        %v1554 = vsub.f32 %v1465, %v1550
        %v1555 = vsub.f32 %v1544, %v1553
        %v1556 = vmul.f32 %v1554, 1.442695
        %v1557 = vpow.pop %v1556
        %v1558 = vmul.f32 %v1555, 1.442695
        %v1559 = vpow.pop %v1558
        %v1560 = vsel %vm1547, %v1557, 0.0
        %1561 = vadd.xlane.f32.xlu0 %v1560
        %v1562 = vpop.xlane.xlu0 %1561
        %v1563 = vsel %vm1547, %v1559, 0.0
        %1564 = vadd.xlane.f32.xlu0 %v1563
        %v1565 = vpop.xlane.xlu0 %1564
        %v1566 = vrcp.pop %v1562
        %v1567 = vmul.f32 %v1557, %v1566
        %v1568 = vrcp.pop %v1565
        %v1569 = vmul.f32 %v1559, %v1568
        %v1571 = vsel %vm1547, %v1567, 0
        %1573 = vmatprep.subr.mxu0 0.0
        %1574 = vmatpush1.msra.mxu0 0.0
        %1575 = vmatprep.subr.mxu0 0.0
        %1576 = vmatpush1.msra.mxu0 0.0
        %1577 = vmatprep.subr.mxu0 0.0
        %1578 = vmatpush1.msra.mxu0 0.0
        %1579 = vmatprep.subr.mxu0 0.0
        %1580 = vmatpush1.msra.mxu0 0.0
        %1581 = vmatprep.subr.mxu0 0.0
        %1582 = vmatpush1.msra.mxu0 0.0
        %1583 = vmatprep.subr.mxu0 0.0
        %1584 = vmatpush1.msra.mxu0 0.0
        %1585 = vmatprep.subr.mxu0 0.0
        %1586 = vmatpush1.msra.mxu0 0.0
        %1587 = vmatprep.subr.mxu0 0.0
        %1588 = vmatpush1.msra.mxu0 0.0
        %1589 = vmatprep.subr.mxu0 0.0
        %1590 = vmatpush1.msra.mxu0 0.0
        %1591 = vmatprep.subr.mxu0 0.0
        %1592 = vmatpush1.msra.mxu0 0.0
        %1593 = vmatprep.subr.mxu0 0.0
        %1594 = vmatpush1.msra.mxu0 0.0
        %1595 = vmatprep.subr.mxu0 0.0
        %1596 = vmatpush1.msra.mxu0 0.0
        %1597 = vmatprep.subr.mxu0 0.0
        %1598 = vmatpush1.msra.mxu0 0.0
        %1599 = vmatprep.subr.mxu0 0.0
        %1600 = vmatpush1.msra.mxu0 0.0
        %1601 = vmatprep.subr.mxu0 0.0
        %1602 = vmatpush1.msra.mxu0 %v1385
        %1603 = vmatprep.subr.mxu0 0.0
        %1604 = vmatpush1.msra.mxu0 %v1384
        %1605 = vmatprep.subr.mxu0 0.0
        %1606 = vmatpush2.msra.mxu0 0.0
        %1607 = vmatprep.subr.mxu0 0.0
        %1608 = vmatpush2.msra.mxu0 0.0
        %1609 = vmatprep.subr.mxu0 0.0
        %1610 = vmatpush2.msra.mxu0 0.0
        %1611 = vmatprep.subr.mxu0 0.0
        %1612 = vmatpush2.msra.mxu0 0.0
        %1613 = vmatprep.subr.mxu0 0.0
        %1614 = vmatpush2.msra.mxu0 0.0
        %1615 = vmatprep.subr.mxu0 0.0
        %1616 = vmatpush2.msra.mxu0 0.0
        %1617 = vmatprep.subr.mxu0 0.0
        %1618 = vmatpush2.msra.mxu0 0.0
        %1619 = vmatprep.subr.mxu0 0.0
        %1620 = vmatpush2.msra.mxu0 0.0
        %1621 = vmatprep.subr.mxu0 0.0
        %1622 = vmatpush2.msra.mxu0 0.0
        %1623 = vmatprep.subr.mxu0 0.0
        %1624 = vmatpush2.msra.mxu0 0.0
        %1625 = vmatprep.subr.mxu0 0.0
        %1626 = vmatpush2.msra.mxu0 0.0
        %1627 = vmatprep.subr.mxu0 0.0
        %1628 = vmatpush2.msra.mxu0 0.0
        %1629 = vmatprep.subr.mxu0 0.0
        %1630 = vmatpush2.msra.mxu0 0.0
        %1631 = vmatprep.subr.mxu0 0.0
        %1632 = vmatpush2.msra.mxu0 0.0
        %1633 = vmatprep.subr.mxu0 0.0
        %1634 = vmatpush2.msra.mxu0 0.0
        %1635 = vmatprep.subr.mxu0 0.0
        %1636 = vmatpush2.msra.mxu0 0.0
        %1637 = vmatprep.mubr.f32.mxu0 0.0
        %1638 = vmatmul.mubr.f32.gmra.mxu0 %v1571
        %v1639 = vpop.f32.mrf.mxu0
        %v1640 = vadd.f32 0.0, %v1639
        %v1641 = vpop.f32.mrf.mxu0
        %1642 = vdwg.mxu0
        %v1644 = vsel %vm1547, %v1569, 0
        %1646 = vmatprep.subr.mxu0 0.0
        %1647 = vmatpush1.msra.mxu0 0.0
        %1648 = vmatprep.subr.mxu0 0.0
        %1649 = vmatpush1.msra.mxu0 0.0
        %1650 = vmatprep.subr.mxu0 0.0
        %1651 = vmatpush1.msra.mxu0 0.0
        %1652 = vmatprep.subr.mxu0 0.0
        %1653 = vmatpush1.msra.mxu0 0.0
        %1654 = vmatprep.subr.mxu0 0.0
        %1655 = vmatpush1.msra.mxu0 0.0
        %1656 = vmatprep.subr.mxu0 0.0
        %1657 = vmatpush1.msra.mxu0 0.0
        %1658 = vmatprep.subr.mxu0 0.0
        %1659 = vmatpush1.msra.mxu0 0.0
        %1660 = vmatprep.subr.mxu0 0.0
        %1661 = vmatpush1.msra.mxu0 0.0
        %1662 = vmatprep.subr.mxu0 0.0
        %1663 = vmatpush1.msra.mxu0 0.0
        %1664 = vmatprep.subr.mxu0 0.0
        %1665 = vmatpush1.msra.mxu0 0.0
        %1666 = vmatprep.subr.mxu0 0.0
        %1667 = vmatpush1.msra.mxu0 0.0
        %1668 = vmatprep.subr.mxu0 0.0
        %1669 = vmatpush1.msra.mxu0 0.0
        %1670 = vmatprep.subr.mxu0 0.0
        %1671 = vmatpush1.msra.mxu0 0.0
        %1672 = vmatprep.subr.mxu0 0.0
        %1673 = vmatpush1.msra.mxu0 0.0
        %1674 = vmatprep.subr.mxu0 0.0
        %1675 = vmatpush1.msra.mxu0 %v1387
        %1676 = vmatprep.subr.mxu0 0.0
        %1677 = vmatpush1.msra.mxu0 %v1386
        %1678 = vmatprep.subr.mxu0 0.0
        %1679 = vmatpush2.msra.mxu0 0.0
        %1680 = vmatprep.subr.mxu0 0.0
        %1681 = vmatpush2.msra.mxu0 0.0
        %1682 = vmatprep.subr.mxu0 0.0
        %1683 = vmatpush2.msra.mxu0 0.0
        %1684 = vmatprep.subr.mxu0 0.0
        %1685 = vmatpush2.msra.mxu0 0.0
        %1686 = vmatprep.subr.mxu0 0.0
        %1687 = vmatpush2.msra.mxu0 0.0
        %1688 = vmatprep.subr.mxu0 0.0
        %1689 = vmatpush2.msra.mxu0 0.0
        %1690 = vmatprep.subr.mxu0 0.0
        %1691 = vmatpush2.msra.mxu0 0.0
        %1692 = vmatprep.subr.mxu0 0.0
        %1693 = vmatpush2.msra.mxu0 0.0
        %1694 = vmatprep.subr.mxu0 0.0
        %1695 = vmatpush2.msra.mxu0 0.0
        %1696 = vmatprep.subr.mxu0 0.0
        %1697 = vmatpush2.msra.mxu0 0.0
        %1698 = vmatprep.subr.mxu0 0.0
        %1699 = vmatpush2.msra.mxu0 0.0
        %1700 = vmatprep.subr.mxu0 0.0
        %1701 = vmatpush2.msra.mxu0 0.0
        %1702 = vmatprep.subr.mxu0 0.0
        %1703 = vmatpush2.msra.mxu0 0.0
        %1704 = vmatprep.subr.mxu0 0.0
        %1705 = vmatpush2.msra.mxu0 0.0
        %1706 = vmatprep.subr.mxu0 0.0
        %1707 = vmatpush2.msra.mxu0 0.0
        %1708 = vmatprep.subr.mxu0 0.0
        %1709 = vmatpush2.msra.mxu0 0.0
        %1710 = vmatprep.mubr.f32.mxu0 0.0
        %1711 = vmatmul.mubr.f32.gmra.mxu0 %v1644
        %v1712 = vpop.f32.mrf.mxu0
        %v1713 = vadd.f32 0.0, %v1712
        %v1714 = vpop.f32.mrf.mxu0
        %1715 = vdwg.mxu0
        %v1716 = vld [vmem:[#allocation13] sm:$0xff]
        %s1717 = scalar_lea.vmem [#allocation7], 8
        %v1718 = vld [vmem:[%s1717] sm:$0xff]
        %s1719 = scalar_lea.vmem [#allocation9], 1
        %v1720 = vld [vmem:[%s1719] sm:$0x1]
        %v1722 = vlaneseq
        %v1723 = vshrl.u32 %v1722, 7
        %v1724 = vsub.s32 0, %v1723
        %v1725 = vrot.slane %v1720, %v1724
        %v1728 = vsel %vm1293, %v1718, 0
        %1730 = vmatprep.subr.mxu0 0.0
        %1731 = vmatpush1.xpose.msra.mxu0 0.0
        %1732 = vmatprep.subr.mxu0 0.0
        %1733 = vmatpush1.xpose.msra.mxu0 0.0
        %1734 = vmatprep.subr.mxu0 0.0
        %1735 = vmatpush1.xpose.msra.mxu0 0.0
        %1736 = vmatprep.subr.mxu0 0.0
        %1737 = vmatpush1.xpose.msra.mxu0 0.0
        %1738 = vmatprep.subr.mxu0 0.0
        %1739 = vmatpush1.xpose.msra.mxu0 0.0
        %1740 = vmatprep.subr.mxu0 0.0
        %1741 = vmatpush1.xpose.msra.mxu0 0.0
        %1742 = vmatprep.subr.mxu0 0.0
        %1743 = vmatpush1.xpose.msra.mxu0 0.0
        %1744 = vmatprep.subr.mxu0 0.0
        %1745 = vmatpush1.xpose.msra.mxu0 0.0
        %1746 = vmatprep.subr.mxu0 0.0
        %1747 = vmatpush1.xpose.msra.mxu0 0.0
        %1748 = vmatprep.subr.mxu0 0.0
        %1749 = vmatpush1.xpose.msra.mxu0 0.0
        %1750 = vmatprep.subr.mxu0 0.0
        %1751 = vmatpush1.xpose.msra.mxu0 0.0
        %1752 = vmatprep.subr.mxu0 0.0
        %1753 = vmatpush1.xpose.msra.mxu0 0.0
        %1754 = vmatprep.subr.mxu0 0.0
        %1755 = vmatpush1.xpose.msra.mxu0 0.0
        %1756 = vmatprep.subr.mxu0 0.0
        %1757 = vmatpush1.xpose.msra.mxu0 0.0
        %1758 = vmatprep.subr.mxu0 0.0
        %1759 = vmatpush1.xpose.msra.mxu0 0.0
        %1760 = vmatprep.subr.mxu0 0.0
        %1761 = vmatpush1.xpose.msra.mxu0 %v1728
        %1762 = vmatprep.subr.mxu0 0.0
        %1763 = vmatpush2.xpose.msra.mxu0 0.0
        %1764 = vmatprep.subr.mxu0 0.0
        %1765 = vmatpush2.xpose.msra.mxu0 0.0
        %1766 = vmatprep.subr.mxu0 0.0
        %1767 = vmatpush2.xpose.msra.mxu0 0.0
        %1768 = vmatprep.subr.mxu0 0.0
        %1769 = vmatpush2.xpose.msra.mxu0 0.0
        %1770 = vmatprep.subr.mxu0 0.0
        %1771 = vmatpush2.xpose.msra.mxu0 0.0
        %1772 = vmatprep.subr.mxu0 0.0
        %1773 = vmatpush2.xpose.msra.mxu0 0.0
        %1774 = vmatprep.subr.mxu0 0.0
        %1775 = vmatpush2.xpose.msra.mxu0 0.0
        %1776 = vmatprep.subr.mxu0 0.0
        %1777 = vmatpush2.xpose.msra.mxu0 0.0
        %1778 = vmatprep.subr.mxu0 0.0
        %1779 = vmatpush2.xpose.msra.mxu0 0.0
        %1780 = vmatprep.subr.mxu0 0.0
        %1781 = vmatpush2.xpose.msra.mxu0 0.0
        %1782 = vmatprep.subr.mxu0 0.0
        %1783 = vmatpush2.xpose.msra.mxu0 0.0
        %1784 = vmatprep.subr.mxu0 0.0
        %1785 = vmatpush2.xpose.msra.mxu0 0.0
        %1786 = vmatprep.subr.mxu0 0.0
        %1787 = vmatpush2.xpose.msra.mxu0 0.0
        %1788 = vmatprep.subr.mxu0 0.0
        %1789 = vmatpush2.xpose.msra.mxu0 0.0
        %1790 = vmatprep.subr.mxu0 0.0
        %1791 = vmatpush2.xpose.msra.mxu0 0.0
        %1792 = vmatprep.subr.mxu0 0.0
        %1793 = vmatpush2.xpose.msra.mxu0 0.0
        %1794 = vmatprep.mubr.f32.mxu0 0.0
        %1795 = vmatmul.mubr.f32.gmra.mxu0 %v1295
        %v1796 = vpop.f32.mrf.mxu0
        %v1797 = vadd.f32 %v1725, %v1796
        %v1798 = vpop.f32.mrf.mxu0
        %1799 = vmatprep.mubr.f32.mxu0 0.0
        %1800 = vmatmul.mubr.f32.gmra.mxu0 %v1298
        %v1801 = vpop.f32.mrf.mxu0
        %v1802 = vadd.f32 %v1725, %v1801
        %v1803 = vpop.f32.mrf.mxu0
        %1804 = vdwg.mxu0
        %v1805 = vmul.f32 %v1797, 0.17677669
        %v1806 = vmul.f32 %v1802, 0.17677669
        %s1807 = scalar_lea.vmem [#allocation2], 32
        %v1808 = vld [vmem:[%s1807] sm:$0xff]
        %v1809 = vld [vmem:[%s1807 + $0x8] sm:$0xff]
        %v1810 = vld [vmem:[%s1807 + $0x10] sm:$0xff]
        %v1811 = vld [vmem:[%s1807 + $0x18] sm:$0xff]
        %s1812 = scalar_lea.vmem [#allocation3], 32
        %v1813 = vld [vmem:[%s1812] sm:$0xff]
        %v1814 = vld [vmem:[%s1812 + $0x8] sm:$0xff]
        %v1815 = vld [vmem:[%s1812 + $0x10] sm:$0xff]
        %v1816 = vld [vmem:[%s1812 + $0x18] sm:$0xff]
        %v1818 = vsel %vm1388, %v1805, 0
        %v1821 = vsel %vm1388, %v1808, 0
        %v1824 = vsel %vm1388, %v1809, 0
        %1826 = vmatprep.subr.mxu0 0.0
        %1827 = vmatpush1.xpose.msra.mxu0 0.0
        %1828 = vmatprep.subr.mxu0 0.0
        %1829 = vmatpush1.xpose.msra.mxu0 0.0
        %1830 = vmatprep.subr.mxu0 0.0
        %1831 = vmatpush1.xpose.msra.mxu0 0.0
        %1832 = vmatprep.subr.mxu0 0.0
        %1833 = vmatpush1.xpose.msra.mxu0 0.0
        %1834 = vmatprep.subr.mxu0 0.0
        %1835 = vmatpush1.xpose.msra.mxu0 0.0
        %1836 = vmatprep.subr.mxu0 0.0
        %1837 = vmatpush1.xpose.msra.mxu0 0.0
        %1838 = vmatprep.subr.mxu0 0.0
        %1839 = vmatpush1.xpose.msra.mxu0 0.0
        %1840 = vmatprep.subr.mxu0 0.0
        %1841 = vmatpush1.xpose.msra.mxu0 0.0
        %1842 = vmatprep.subr.mxu0 0.0
        %1843 = vmatpush1.xpose.msra.mxu0 0.0
        %1844 = vmatprep.subr.mxu0 0.0
        %1845 = vmatpush1.xpose.msra.mxu0 0.0
        %1846 = vmatprep.subr.mxu0 0.0
        %1847 = vmatpush1.xpose.msra.mxu0 0.0
        %1848 = vmatprep.subr.mxu0 0.0
        %1849 = vmatpush1.xpose.msra.mxu0 0.0
        %1850 = vmatprep.subr.mxu0 0.0
        %1851 = vmatpush1.xpose.msra.mxu0 0.0
        %1852 = vmatprep.subr.mxu0 0.0
        %1853 = vmatpush1.xpose.msra.mxu0 0.0
        %1854 = vmatprep.subr.mxu0 0.0
        %1855 = vmatpush1.xpose.msra.mxu0 %v1824
        %1856 = vmatprep.subr.mxu0 0.0
        %1857 = vmatpush1.xpose.msra.mxu0 %v1821
        %1858 = vmatprep.subr.mxu0 0.0
        %1859 = vmatpush2.xpose.msra.mxu0 0.0
        %1860 = vmatprep.subr.mxu0 0.0
        %1861 = vmatpush2.xpose.msra.mxu0 0.0
        %1862 = vmatprep.subr.mxu0 0.0
        %1863 = vmatpush2.xpose.msra.mxu0 0.0
        %1864 = vmatprep.subr.mxu0 0.0
        %1865 = vmatpush2.xpose.msra.mxu0 0.0
        %1866 = vmatprep.subr.mxu0 0.0
        %1867 = vmatpush2.xpose.msra.mxu0 0.0
        %1868 = vmatprep.subr.mxu0 0.0
        %1869 = vmatpush2.xpose.msra.mxu0 0.0
        %1870 = vmatprep.subr.mxu0 0.0
        %1871 = vmatpush2.xpose.msra.mxu0 0.0
        %1872 = vmatprep.subr.mxu0 0.0
        %1873 = vmatpush2.xpose.msra.mxu0 0.0
        %1874 = vmatprep.subr.mxu0 0.0
        %1875 = vmatpush2.xpose.msra.mxu0 0.0
        %1876 = vmatprep.subr.mxu0 0.0
        %1877 = vmatpush2.xpose.msra.mxu0 0.0
        %1878 = vmatprep.subr.mxu0 0.0
        %1879 = vmatpush2.xpose.msra.mxu0 0.0
        %1880 = vmatprep.subr.mxu0 0.0
        %1881 = vmatpush2.xpose.msra.mxu0 0.0
        %1882 = vmatprep.subr.mxu0 0.0
        %1883 = vmatpush2.xpose.msra.mxu0 0.0
        %1884 = vmatprep.subr.mxu0 0.0
        %1885 = vmatpush2.xpose.msra.mxu0 0.0
        %1886 = vmatprep.subr.mxu0 0.0
        %1887 = vmatpush2.xpose.msra.mxu0 0.0
        %1888 = vmatprep.subr.mxu0 0.0
        %1889 = vmatpush2.xpose.msra.mxu0 0.0
        %1890 = vmatprep.mubr.f32.mxu0 0.0
        %1891 = vmatmul.mubr.f32.gmra.mxu0 %v1818
        %v1892 = vpop.f32.mrf.mxu0
        %v1893 = vadd.f32 0.0, %v1892
        %v1894 = vpop.f32.mrf.mxu0
        %1895 = vdwg.mxu0
        %v1897 = vsel %vm1388, %v1806, 0
        %v1900 = vsel %vm1388, %v1810, 0
        %v1903 = vsel %vm1388, %v1811, 0
        %1905 = vmatprep.subr.mxu0 0.0
        %1906 = vmatpush1.xpose.msra.mxu0 0.0
        %1907 = vmatprep.subr.mxu0 0.0
        %1908 = vmatpush1.xpose.msra.mxu0 0.0
        %1909 = vmatprep.subr.mxu0 0.0
        %1910 = vmatpush1.xpose.msra.mxu0 0.0
        %1911 = vmatprep.subr.mxu0 0.0
        %1912 = vmatpush1.xpose.msra.mxu0 0.0
        %1913 = vmatprep.subr.mxu0 0.0
        %1914 = vmatpush1.xpose.msra.mxu0 0.0
        %1915 = vmatprep.subr.mxu0 0.0
        %1916 = vmatpush1.xpose.msra.mxu0 0.0
        %1917 = vmatprep.subr.mxu0 0.0
        %1918 = vmatpush1.xpose.msra.mxu0 0.0
        %1919 = vmatprep.subr.mxu0 0.0
        %1920 = vmatpush1.xpose.msra.mxu0 0.0
        %1921 = vmatprep.subr.mxu0 0.0
        %1922 = vmatpush1.xpose.msra.mxu0 0.0
        %1923 = vmatprep.subr.mxu0 0.0
        %1924 = vmatpush1.xpose.msra.mxu0 0.0
        %1925 = vmatprep.subr.mxu0 0.0
        %1926 = vmatpush1.xpose.msra.mxu0 0.0
        %1927 = vmatprep.subr.mxu0 0.0
        %1928 = vmatpush1.xpose.msra.mxu0 0.0
        %1929 = vmatprep.subr.mxu0 0.0
        %1930 = vmatpush1.xpose.msra.mxu0 0.0
        %1931 = vmatprep.subr.mxu0 0.0
        %1932 = vmatpush1.xpose.msra.mxu0 0.0
        %1933 = vmatprep.subr.mxu0 0.0
        %1934 = vmatpush1.xpose.msra.mxu0 %v1903
        %1935 = vmatprep.subr.mxu0 0.0
        %1936 = vmatpush1.xpose.msra.mxu0 %v1900
        %1937 = vmatprep.subr.mxu0 0.0
        %1938 = vmatpush2.xpose.msra.mxu0 0.0
        %1939 = vmatprep.subr.mxu0 0.0
        %1940 = vmatpush2.xpose.msra.mxu0 0.0
        %1941 = vmatprep.subr.mxu0 0.0
        %1942 = vmatpush2.xpose.msra.mxu0 0.0
        %1943 = vmatprep.subr.mxu0 0.0
        %1944 = vmatpush2.xpose.msra.mxu0 0.0
        %1945 = vmatprep.subr.mxu0 0.0
        %1946 = vmatpush2.xpose.msra.mxu0 0.0
        %1947 = vmatprep.subr.mxu0 0.0
        %1948 = vmatpush2.xpose.msra.mxu0 0.0
        %1949 = vmatprep.subr.mxu0 0.0
        %1950 = vmatpush2.xpose.msra.mxu0 0.0
        %1951 = vmatprep.subr.mxu0 0.0
        %1952 = vmatpush2.xpose.msra.mxu0 0.0
        %1953 = vmatprep.subr.mxu0 0.0
        %1954 = vmatpush2.xpose.msra.mxu0 0.0
        %1955 = vmatprep.subr.mxu0 0.0
        %1956 = vmatpush2.xpose.msra.mxu0 0.0
        %1957 = vmatprep.subr.mxu0 0.0
        %1958 = vmatpush2.xpose.msra.mxu0 0.0
        %1959 = vmatprep.subr.mxu0 0.0
        %1960 = vmatpush2.xpose.msra.mxu0 0.0
        %1961 = vmatprep.subr.mxu0 0.0
        %1962 = vmatpush2.xpose.msra.mxu0 0.0
        %1963 = vmatprep.subr.mxu0 0.0
        %1964 = vmatpush2.xpose.msra.mxu0 0.0
        %1965 = vmatprep.subr.mxu0 0.0
        %1966 = vmatpush2.xpose.msra.mxu0 0.0
        %1967 = vmatprep.subr.mxu0 0.0
        %1968 = vmatpush2.xpose.msra.mxu0 0.0
        %1969 = vmatprep.mubr.f32.mxu0 0.0
        %1970 = vmatmul.mubr.f32.gmra.mxu0 %v1897
        %v1971 = vpop.f32.mrf.mxu0
        %v1972 = vadd.f32 0.0, %v1971
        %v1973 = vpop.f32.mrf.mxu0
        %1974 = vdwg.mxu0
        %v1975 = vsel %vm1547, %v1893, -inf
        %1976 = vmax.xlane.f32.xlu0 %v1975
        %v1977 = vpop.xlane.xlu0 %1976
        %v1978 = vsel %vm1547, %v1972, -inf
        %1979 = vmax.xlane.f32.xlu0 %v1978
        %v1980 = vpop.xlane.xlu0 %1979
        %v1981 = vsub.f32 %v1893, %v1977
        %v1982 = vsub.f32 %v1972, %v1980
        %v1983 = vmul.f32 %v1981, 1.442695
        %v1984 = vpow.pop %v1983
        %v1985 = vmul.f32 %v1982, 1.442695
        %v1986 = vpow.pop %v1985
        %v1987 = vsel %vm1547, %v1984, 0.0
        %1988 = vadd.xlane.f32.xlu0 %v1987
        %v1989 = vpop.xlane.xlu0 %1988
        %v1990 = vsel %vm1547, %v1986, 0.0
        %1991 = vadd.xlane.f32.xlu0 %v1990
        %v1992 = vpop.xlane.xlu0 %1991
        %v1993 = vrcp.pop %v1989
        %v1994 = vmul.f32 %v1984, %v1993
        %v1995 = vrcp.pop %v1992
        %v1996 = vmul.f32 %v1986, %v1995
        %v1998 = vsel %vm1547, %v1994, 0
        %2000 = vmatprep.subr.mxu0 0.0
        %2001 = vmatpush1.msra.mxu0 0.0
        %2002 = vmatprep.subr.mxu0 0.0
        %2003 = vmatpush1.msra.mxu0 0.0
        %2004 = vmatprep.subr.mxu0 0.0
        %2005 = vmatpush1.msra.mxu0 0.0
        %2006 = vmatprep.subr.mxu0 0.0
        %2007 = vmatpush1.msra.mxu0 0.0
        %2008 = vmatprep.subr.mxu0 0.0
        %2009 = vmatpush1.msra.mxu0 0.0
        %2010 = vmatprep.subr.mxu0 0.0
        %2011 = vmatpush1.msra.mxu0 0.0
        %2012 = vmatprep.subr.mxu0 0.0
        %2013 = vmatpush1.msra.mxu0 0.0
        %2014 = vmatprep.subr.mxu0 0.0
        %2015 = vmatpush1.msra.mxu0 0.0
        %2016 = vmatprep.subr.mxu0 0.0
        %2017 = vmatpush1.msra.mxu0 0.0
        %2018 = vmatprep.subr.mxu0 0.0
        %2019 = vmatpush1.msra.mxu0 0.0
        %2020 = vmatprep.subr.mxu0 0.0
        %2021 = vmatpush1.msra.mxu0 0.0
        %2022 = vmatprep.subr.mxu0 0.0
        %2023 = vmatpush1.msra.mxu0 0.0
        %2024 = vmatprep.subr.mxu0 0.0
        %2025 = vmatpush1.msra.mxu0 0.0
        %2026 = vmatprep.subr.mxu0 0.0
        %2027 = vmatpush1.msra.mxu0 0.0
        %2028 = vmatprep.subr.mxu0 0.0
        %2029 = vmatpush1.msra.mxu0 %v1814
        %2030 = vmatprep.subr.mxu0 0.0
        %2031 = vmatpush1.msra.mxu0 %v1813
        %2032 = vmatprep.subr.mxu0 0.0
        %2033 = vmatpush2.msra.mxu0 0.0
        %2034 = vmatprep.subr.mxu0 0.0
        %2035 = vmatpush2.msra.mxu0 0.0
        %2036 = vmatprep.subr.mxu0 0.0
        %2037 = vmatpush2.msra.mxu0 0.0
        %2038 = vmatprep.subr.mxu0 0.0
        %2039 = vmatpush2.msra.mxu0 0.0
        %2040 = vmatprep.subr.mxu0 0.0
        %2041 = vmatpush2.msra.mxu0 0.0
        %2042 = vmatprep.subr.mxu0 0.0
        %2043 = vmatpush2.msra.mxu0 0.0
        %2044 = vmatprep.subr.mxu0 0.0
        %2045 = vmatpush2.msra.mxu0 0.0
        %2046 = vmatprep.subr.mxu0 0.0
        %2047 = vmatpush2.msra.mxu0 0.0
        %2048 = vmatprep.subr.mxu0 0.0
        %2049 = vmatpush2.msra.mxu0 0.0
        %2050 = vmatprep.subr.mxu0 0.0
        %2051 = vmatpush2.msra.mxu0 0.0
        %2052 = vmatprep.subr.mxu0 0.0
        %2053 = vmatpush2.msra.mxu0 0.0
        %2054 = vmatprep.subr.mxu0 0.0
        %2055 = vmatpush2.msra.mxu0 0.0
        %2056 = vmatprep.subr.mxu0 0.0
        %2057 = vmatpush2.msra.mxu0 0.0
        %2058 = vmatprep.subr.mxu0 0.0
        %2059 = vmatpush2.msra.mxu0 0.0
        %2060 = vmatprep.subr.mxu0 0.0
        %2061 = vmatpush2.msra.mxu0 0.0
        %2062 = vmatprep.subr.mxu0 0.0
        %2063 = vmatpush2.msra.mxu0 0.0
        %2064 = vmatprep.mubr.f32.mxu0 0.0
        %2065 = vmatmul.mubr.f32.gmra.mxu0 %v1998
        %v2066 = vpop.f32.mrf.mxu0
        %v2067 = vadd.f32 0.0, %v2066
        %v2068 = vpop.f32.mrf.mxu0
        %2069 = vdwg.mxu0
        %v2071 = vsel %vm1547, %v1996, 0
        %2073 = vmatprep.subr.mxu0 0.0
        %2074 = vmatpush1.msra.mxu0 0.0
        %2075 = vmatprep.subr.mxu0 0.0
        %2076 = vmatpush1.msra.mxu0 0.0
        %2077 = vmatprep.subr.mxu0 0.0
        %2078 = vmatpush1.msra.mxu0 0.0
        %2079 = vmatprep.subr.mxu0 0.0
        %2080 = vmatpush1.msra.mxu0 0.0
        %2081 = vmatprep.subr.mxu0 0.0
        %2082 = vmatpush1.msra.mxu0 0.0
        %2083 = vmatprep.subr.mxu0 0.0
        %2084 = vmatpush1.msra.mxu0 0.0
        %2085 = vmatprep.subr.mxu0 0.0
        %2086 = vmatpush1.msra.mxu0 0.0
        %2087 = vmatprep.subr.mxu0 0.0
        %2088 = vmatpush1.msra.mxu0 0.0
        %2089 = vmatprep.subr.mxu0 0.0
        %2090 = vmatpush1.msra.mxu0 0.0
        %2091 = vmatprep.subr.mxu0 0.0
        %2092 = vmatpush1.msra.mxu0 0.0
        %2093 = vmatprep.subr.mxu0 0.0
        %2094 = vmatpush1.msra.mxu0 0.0
        %2095 = vmatprep.subr.mxu0 0.0
        %2096 = vmatpush1.msra.mxu0 0.0
        %2097 = vmatprep.subr.mxu0 0.0
        %2098 = vmatpush1.msra.mxu0 0.0
        %2099 = vmatprep.subr.mxu0 0.0
        %2100 = vmatpush1.msra.mxu0 0.0
        %2101 = vmatprep.subr.mxu0 0.0
        %2102 = vmatpush1.msra.mxu0 %v1816
        %2103 = vmatprep.subr.mxu0 0.0
        %2104 = vmatpush1.msra.mxu0 %v1815
        %2105 = vmatprep.subr.mxu0 0.0
        %2106 = vmatpush2.msra.mxu0 0.0
        %2107 = vmatprep.subr.mxu0 0.0
        %2108 = vmatpush2.msra.mxu0 0.0
        %2109 = vmatprep.subr.mxu0 0.0
        %2110 = vmatpush2.msra.mxu0 0.0
        %2111 = vmatprep.subr.mxu0 0.0
        %2112 = vmatpush2.msra.mxu0 0.0
        %2113 = vmatprep.subr.mxu0 0.0
        %2114 = vmatpush2.msra.mxu0 0.0
        %2115 = vmatprep.subr.mxu0 0.0
        %2116 = vmatpush2.msra.mxu0 0.0
        %2117 = vmatprep.subr.mxu0 0.0
        %2118 = vmatpush2.msra.mxu0 0.0
        %2119 = vmatprep.subr.mxu0 0.0
        %2120 = vmatpush2.msra.mxu0 0.0
        %2121 = vmatprep.subr.mxu0 0.0
        %2122 = vmatpush2.msra.mxu0 0.0
        %2123 = vmatprep.subr.mxu0 0.0
        %2124 = vmatpush2.msra.mxu0 0.0
        %2125 = vmatprep.subr.mxu0 0.0
        %2126 = vmatpush2.msra.mxu0 0.0
        %2127 = vmatprep.subr.mxu0 0.0
        %2128 = vmatpush2.msra.mxu0 0.0
        %2129 = vmatprep.subr.mxu0 0.0
        %2130 = vmatpush2.msra.mxu0 0.0
        %2131 = vmatprep.subr.mxu0 0.0
        %2132 = vmatpush2.msra.mxu0 0.0
        %2133 = vmatprep.subr.mxu0 0.0
        %2134 = vmatpush2.msra.mxu0 0.0
        %2135 = vmatprep.subr.mxu0 0.0
        %2136 = vmatpush2.msra.mxu0 0.0
        %2137 = vmatprep.mubr.f32.mxu0 0.0
        %2138 = vmatmul.mubr.f32.gmra.mxu0 %v2071
        %v2139 = vpop.f32.mrf.mxu0
        %v2140 = vadd.f32 0.0, %v2139
        %v2141 = vpop.f32.mrf.mxu0
        %2142 = vdwg.mxu0
        %s2143 = scalar_lea.vmem [#allocation13], 8
        %v2144 = vld [vmem:[%s2143] sm:$0xff]
        %v2146 = vsel %vm1388, %v2067, 0
        %v2149 = vsel %vm1388, %v2140, 0
        %2151 = vmatprep.subr.mxu0 0.0
        %2152 = vmatpush1.msra.mxu0 0.0
        %2153 = vmatprep.subr.mxu0 0.0
        %2154 = vmatpush1.msra.mxu0 0.0
        %2155 = vmatprep.subr.mxu0 0.0
        %2156 = vmatpush1.msra.mxu0 0.0
        %2157 = vmatprep.subr.mxu0 0.0
        %2158 = vmatpush1.msra.mxu0 0.0
        %2159 = vmatprep.subr.mxu0 0.0
        %2160 = vmatpush1.msra.mxu0 0.0
        %2161 = vmatprep.subr.mxu0 0.0
        %2162 = vmatpush1.msra.mxu0 0.0
        %2163 = vmatprep.subr.mxu0 0.0
        %2164 = vmatpush1.msra.mxu0 0.0
        %2165 = vmatprep.subr.mxu0 0.0
        %2166 = vmatpush1.msra.mxu0 0.0
        %2167 = vmatprep.subr.mxu0 0.0
        %2168 = vmatpush1.msra.mxu0 0.0
        %2169 = vmatprep.subr.mxu0 0.0
        %2170 = vmatpush1.msra.mxu0 0.0
        %2171 = vmatprep.subr.mxu0 0.0
        %2172 = vmatpush1.msra.mxu0 0.0
        %2173 = vmatprep.subr.mxu0 0.0
        %2174 = vmatpush1.msra.mxu0 0.0
        %2175 = vmatprep.subr.mxu0 0.0
        %2176 = vmatpush1.msra.mxu0 0.0
        %2177 = vmatprep.subr.mxu0 0.0
        %2178 = vmatpush1.msra.mxu0 0.0
        %2179 = vmatprep.subr.mxu0 0.0
        %2180 = vmatpush1.msra.mxu0 0.0
        %2181 = vmatprep.subr.mxu0 0.0
        %2182 = vmatpush1.msra.mxu0 %v2144
        %2183 = vmatprep.subr.mxu0 0.0
        %2184 = vmatpush2.msra.mxu0 0.0
        %2185 = vmatprep.subr.mxu0 0.0
        %2186 = vmatpush2.msra.mxu0 0.0
        %2187 = vmatprep.subr.mxu0 0.0
        %2188 = vmatpush2.msra.mxu0 0.0
        %2189 = vmatprep.subr.mxu0 0.0
        %2190 = vmatpush2.msra.mxu0 0.0
        %2191 = vmatprep.subr.mxu0 0.0
        %2192 = vmatpush2.msra.mxu0 0.0
        %2193 = vmatprep.subr.mxu0 0.0
        %2194 = vmatpush2.msra.mxu0 0.0
        %2195 = vmatprep.subr.mxu0 0.0
        %2196 = vmatpush2.msra.mxu0 0.0
        %2197 = vmatprep.subr.mxu0 0.0
        %2198 = vmatpush2.msra.mxu0 0.0
        %2199 = vmatprep.subr.mxu0 0.0
        %2200 = vmatpush2.msra.mxu0 0.0
        %2201 = vmatprep.subr.mxu0 0.0
        %2202 = vmatpush2.msra.mxu0 0.0
        %2203 = vmatprep.subr.mxu0 0.0
        %2204 = vmatpush2.msra.mxu0 0.0
        %2205 = vmatprep.subr.mxu0 0.0
        %2206 = vmatpush2.msra.mxu0 0.0
        %2207 = vmatprep.subr.mxu0 0.0
        %2208 = vmatpush2.msra.mxu0 0.0
        %2209 = vmatprep.subr.mxu0 0.0
        %2210 = vmatpush2.msra.mxu0 0.0
        %2211 = vmatprep.subr.mxu0 0.0
        %2212 = vmatpush2.msra.mxu0 0.0
        %2213 = vmatprep.subr.mxu0 0.0
        %2214 = vmatpush2.msra.mxu0 0.0
        %2215 = vmatprep.mubr.f32.mxu0 0.0
        %2216 = vmatmul.mubr.f32.gmra.mxu0 %v2146
        %v2217 = vpop.f32.mrf.mxu0
        %v2218 = vadd.f32 0.0, %v2217
        %v2219 = vpop.f32.mrf.mxu0
        %2220 = vmatprep.mubr.f32.mxu0 0.0
        %2221 = vmatmul.mubr.f32.gmra.mxu0 %v2149
        %v2222 = vpop.f32.mrf.mxu0
        %v2223 = vadd.f32 0.0, %v2222
        %v2224 = vpop.f32.mrf.mxu0
        %2225 = vdwg.mxu0
        %v2227 = vsel %vm1388, %v1640, 0
        %v2230 = vsel %vm1388, %v1713, 0
        %2232 = vmatprep.subr.mxu0 0.0
        %2233 = vmatpush1.msra.mxu0 0.0
        %2234 = vmatprep.subr.mxu0 0.0
        %2235 = vmatpush1.msra.mxu0 0.0
        %2236 = vmatprep.subr.mxu0 0.0
        %2237 = vmatpush1.msra.mxu0 0.0
        %2238 = vmatprep.subr.mxu0 0.0
        %2239 = vmatpush1.msra.mxu0 0.0
        %2240 = vmatprep.subr.mxu0 0.0
        %2241 = vmatpush1.msra.mxu0 0.0
        %2242 = vmatprep.subr.mxu0 0.0
        %2243 = vmatpush1.msra.mxu0 0.0
        %2244 = vmatprep.subr.mxu0 0.0
        %2245 = vmatpush1.msra.mxu0 0.0
        %2246 = vmatprep.subr.mxu0 0.0
        %2247 = vmatpush1.msra.mxu0 0.0
        %2248 = vmatprep.subr.mxu0 0.0
        %2249 = vmatpush1.msra.mxu0 0.0
        %2250 = vmatprep.subr.mxu0 0.0
        %2251 = vmatpush1.msra.mxu0 0.0
        %2252 = vmatprep.subr.mxu0 0.0
        %2253 = vmatpush1.msra.mxu0 0.0
        %2254 = vmatprep.subr.mxu0 0.0
        %2255 = vmatpush1.msra.mxu0 0.0
        %2256 = vmatprep.subr.mxu0 0.0
        %2257 = vmatpush1.msra.mxu0 0.0
        %2258 = vmatprep.subr.mxu0 0.0
        %2259 = vmatpush1.msra.mxu0 0.0
        %2260 = vmatprep.subr.mxu0 0.0
        %2261 = vmatpush1.msra.mxu0 0.0
        %2262 = vmatprep.subr.mxu0 0.0
        %2263 = vmatpush1.msra.mxu0 %v1716
        %2264 = vmatprep.subr.mxu0 0.0
        %2265 = vmatpush2.msra.mxu0 0.0
        %2266 = vmatprep.subr.mxu0 0.0
        %2267 = vmatpush2.msra.mxu0 0.0
        %2268 = vmatprep.subr.mxu0 0.0
        %2269 = vmatpush2.msra.mxu0 0.0
        %2270 = vmatprep.subr.mxu0 0.0
        %2271 = vmatpush2.msra.mxu0 0.0
        %2272 = vmatprep.subr.mxu0 0.0
        %2273 = vmatpush2.msra.mxu0 0.0
        %2274 = vmatprep.subr.mxu0 0.0
        %2275 = vmatpush2.msra.mxu0 0.0
        %2276 = vmatprep.subr.mxu0 0.0
        %2277 = vmatpush2.msra.mxu0 0.0
        %2278 = vmatprep.subr.mxu0 0.0
        %2279 = vmatpush2.msra.mxu0 0.0
        %2280 = vmatprep.subr.mxu0 0.0
        %2281 = vmatpush2.msra.mxu0 0.0
        %2282 = vmatprep.subr.mxu0 0.0
        %2283 = vmatpush2.msra.mxu0 0.0
        %2284 = vmatprep.subr.mxu0 0.0
        %2285 = vmatpush2.msra.mxu0 0.0
        %2286 = vmatprep.subr.mxu0 0.0
        %2287 = vmatpush2.msra.mxu0 0.0
        %2288 = vmatprep.subr.mxu0 0.0
        %2289 = vmatpush2.msra.mxu0 0.0
        %2290 = vmatprep.subr.mxu0 0.0
        %2291 = vmatpush2.msra.mxu0 0.0
        %2292 = vmatprep.subr.mxu0 0.0
        %2293 = vmatpush2.msra.mxu0 0.0
        %2294 = vmatprep.subr.mxu0 0.0
        %2295 = vmatpush2.msra.mxu0 0.0
        %2296 = vmatprep.mubr.f32.mxu0 0.0
        %2297 = vmatmul.mubr.f32.gmra.mxu0 %v2227
        %v2298 = vpop.f32.mrf.mxu0
        %v2299 = vadd.f32 %v2218, %v2298
        %v2300 = vpop.f32.mrf.mxu0
        %2301 = vmatprep.mubr.f32.mxu0 0.0
        %2302 = vmatmul.mubr.f32.gmra.mxu0 %v2230
        %v2303 = vpop.f32.mrf.mxu0
        %v2304 = vadd.f32 %v2223, %v2303
        %v2305 = vpop.f32.mrf.mxu0
        %2306 = vdwg.mxu0
        %s2307 = scalar_lea.vmem [#allocation7], 16
        %v2308 = vld [vmem:[%s2307] sm:$0xff]
        %s2309 = scalar_lea.vmem [#allocation9], 2
        %v2310 = vld [vmem:[%s2309] sm:$0x1]
        %v2312 = vlaneseq
        %v2313 = vshrl.u32 %v2312, 7
        %v2314 = vsub.s32 0, %v2313
        %v2315 = vrot.slane %v2310, %v2314
        %v2318 = vsel %vm1293, %v2308, 0
        %2320 = vmatprep.subr.mxu0 0.0
        %2321 = vmatpush1.xpose.msra.mxu0 0.0
        %2322 = vmatprep.subr.mxu0 0.0
        %2323 = vmatpush1.xpose.msra.mxu0 0.0
        %2324 = vmatprep.subr.mxu0 0.0
        %2325 = vmatpush1.xpose.msra.mxu0 0.0
        %2326 = vmatprep.subr.mxu0 0.0
        %2327 = vmatpush1.xpose.msra.mxu0 0.0
        %2328 = vmatprep.subr.mxu0 0.0
        %2329 = vmatpush1.xpose.msra.mxu0 0.0
        %2330 = vmatprep.subr.mxu0 0.0
        %2331 = vmatpush1.xpose.msra.mxu0 0.0
        %2332 = vmatprep.subr.mxu0 0.0
        %2333 = vmatpush1.xpose.msra.mxu0 0.0
        %2334 = vmatprep.subr.mxu0 0.0
        %2335 = vmatpush1.xpose.msra.mxu0 0.0
        %2336 = vmatprep.subr.mxu0 0.0
        %2337 = vmatpush1.xpose.msra.mxu0 0.0
        %2338 = vmatprep.subr.mxu0 0.0
        %2339 = vmatpush1.xpose.msra.mxu0 0.0
        %2340 = vmatprep.subr.mxu0 0.0
        %2341 = vmatpush1.xpose.msra.mxu0 0.0
        %2342 = vmatprep.subr.mxu0 0.0
        %2343 = vmatpush1.xpose.msra.mxu0 0.0
        %2344 = vmatprep.subr.mxu0 0.0
        %2345 = vmatpush1.xpose.msra.mxu0 0.0
        %2346 = vmatprep.subr.mxu0 0.0
        %2347 = vmatpush1.xpose.msra.mxu0 0.0
        %2348 = vmatprep.subr.mxu0 0.0
        %2349 = vmatpush1.xpose.msra.mxu0 0.0
        %2350 = vmatprep.subr.mxu0 0.0
        %2351 = vmatpush1.xpose.msra.mxu0 %v2318
        %2352 = vmatprep.subr.mxu0 0.0
        %2353 = vmatpush2.xpose.msra.mxu0 0.0
        %2354 = vmatprep.subr.mxu0 0.0
        %2355 = vmatpush2.xpose.msra.mxu0 0.0
        %2356 = vmatprep.subr.mxu0 0.0
        %2357 = vmatpush2.xpose.msra.mxu0 0.0
        %2358 = vmatprep.subr.mxu0 0.0
        %2359 = vmatpush2.xpose.msra.mxu0 0.0
        %2360 = vmatprep.subr.mxu0 0.0
        %2361 = vmatpush2.xpose.msra.mxu0 0.0
        %2362 = vmatprep.subr.mxu0 0.0
        %2363 = vmatpush2.xpose.msra.mxu0 0.0
        %2364 = vmatprep.subr.mxu0 0.0
        %2365 = vmatpush2.xpose.msra.mxu0 0.0
        %2366 = vmatprep.subr.mxu0 0.0
        %2367 = vmatpush2.xpose.msra.mxu0 0.0
        %2368 = vmatprep.subr.mxu0 0.0
        %2369 = vmatpush2.xpose.msra.mxu0 0.0
        %2370 = vmatprep.subr.mxu0 0.0
        %2371 = vmatpush2.xpose.msra.mxu0 0.0
        %2372 = vmatprep.subr.mxu0 0.0
        %2373 = vmatpush2.xpose.msra.mxu0 0.0
        %2374 = vmatprep.subr.mxu0 0.0
        %2375 = vmatpush2.xpose.msra.mxu0 0.0
        %2376 = vmatprep.subr.mxu0 0.0
        %2377 = vmatpush2.xpose.msra.mxu0 0.0
        %2378 = vmatprep.subr.mxu0 0.0
        %2379 = vmatpush2.xpose.msra.mxu0 0.0
        %2380 = vmatprep.subr.mxu0 0.0
        %2381 = vmatpush2.xpose.msra.mxu0 0.0
        %2382 = vmatprep.subr.mxu0 0.0
        %2383 = vmatpush2.xpose.msra.mxu0 0.0
        %2384 = vmatprep.mubr.f32.mxu0 0.0
        %2385 = vmatmul.mubr.f32.gmra.mxu0 %v1295
        %v2386 = vpop.f32.mrf.mxu0
        %v2387 = vadd.f32 %v2315, %v2386
        %v2388 = vpop.f32.mrf.mxu0
        %2389 = vmatprep.mubr.f32.mxu0 0.0
        %2390 = vmatmul.mubr.f32.gmra.mxu0 %v1298
        %v2391 = vpop.f32.mrf.mxu0
        %v2392 = vadd.f32 %v2315, %v2391
        %v2393 = vpop.f32.mrf.mxu0
        %2394 = vdwg.mxu0
        %v2395 = vmul.f32 %v2387, 0.17677669
        %v2396 = vmul.f32 %v2392, 0.17677669
        %s2397 = scalar_lea.vmem [#allocation2], 64
        %v2398 = vld [vmem:[%s2397] sm:$0xff]
        %v2399 = vld [vmem:[%s2397 + $0x8] sm:$0xff]
        %v2400 = vld [vmem:[%s2397 + $0x10] sm:$0xff]
        %v2401 = vld [vmem:[%s2397 + $0x18] sm:$0xff]
        %s2402 = scalar_lea.vmem [#allocation3], 64
        %v2403 = vld [vmem:[%s2402] sm:$0xff]
        %v2404 = vld [vmem:[%s2402 + $0x8] sm:$0xff]
        %v2405 = vld [vmem:[%s2402 + $0x10] sm:$0xff]
        %v2406 = vld [vmem:[%s2402 + $0x18] sm:$0xff]
        %v2408 = vsel %vm1388, %v2395, 0
        %v2411 = vsel %vm1388, %v2398, 0
        %v2414 = vsel %vm1388, %v2399, 0
        %2416 = vmatprep.subr.mxu0 0.0
        %2417 = vmatpush1.xpose.msra.mxu0 0.0
        %2418 = vmatprep.subr.mxu0 0.0
        %2419 = vmatpush1.xpose.msra.mxu0 0.0
        %2420 = vmatprep.subr.mxu0 0.0
        %2421 = vmatpush1.xpose.msra.mxu0 0.0
        %2422 = vmatprep.subr.mxu0 0.0
        %2423 = vmatpush1.xpose.msra.mxu0 0.0
        %2424 = vmatprep.subr.mxu0 0.0
        %2425 = vmatpush1.xpose.msra.mxu0 0.0
        %2426 = vmatprep.subr.mxu0 0.0
        %2427 = vmatpush1.xpose.msra.mxu0 0.0
        %2428 = vmatprep.subr.mxu0 0.0
        %2429 = vmatpush1.xpose.msra.mxu0 0.0
        %2430 = vmatprep.subr.mxu0 0.0
        %2431 = vmatpush1.xpose.msra.mxu0 0.0
        %2432 = vmatprep.subr.mxu0 0.0
        %2433 = vmatpush1.xpose.msra.mxu0 0.0
        %2434 = vmatprep.subr.mxu0 0.0
        %2435 = vmatpush1.xpose.msra.mxu0 0.0
        %2436 = vmatprep.subr.mxu0 0.0
        %2437 = vmatpush1.xpose.msra.mxu0 0.0
        %2438 = vmatprep.subr.mxu0 0.0
        %2439 = vmatpush1.xpose.msra.mxu0 0.0
        %2440 = vmatprep.subr.mxu0 0.0
        %2441 = vmatpush1.xpose.msra.mxu0 0.0
        %2442 = vmatprep.subr.mxu0 0.0
        %2443 = vmatpush1.xpose.msra.mxu0 0.0
        %2444 = vmatprep.subr.mxu0 0.0
        %2445 = vmatpush1.xpose.msra.mxu0 %v2414
        %2446 = vmatprep.subr.mxu0 0.0
        %2447 = vmatpush1.xpose.msra.mxu0 %v2411
        %2448 = vmatprep.subr.mxu0 0.0
        %2449 = vmatpush2.xpose.msra.mxu0 0.0
        %2450 = vmatprep.subr.mxu0 0.0
        %2451 = vmatpush2.xpose.msra.mxu0 0.0
        %2452 = vmatprep.subr.mxu0 0.0
        %2453 = vmatpush2.xpose.msra.mxu0 0.0
        %2454 = vmatprep.subr.mxu0 0.0
        %2455 = vmatpush2.xpose.msra.mxu0 0.0
        %2456 = vmatprep.subr.mxu0 0.0
        %2457 = vmatpush2.xpose.msra.mxu0 0.0
        %2458 = vmatprep.subr.mxu0 0.0
        %2459 = vmatpush2.xpose.msra.mxu0 0.0
        %2460 = vmatprep.subr.mxu0 0.0
        %2461 = vmatpush2.xpose.msra.mxu0 0.0
        %2462 = vmatprep.subr.mxu0 0.0
        %2463 = vmatpush2.xpose.msra.mxu0 0.0
        %2464 = vmatprep.subr.mxu0 0.0
        %2465 = vmatpush2.xpose.msra.mxu0 0.0
        %2466 = vmatprep.subr.mxu0 0.0
        %2467 = vmatpush2.xpose.msra.mxu0 0.0
        %2468 = vmatprep.subr.mxu0 0.0
        %2469 = vmatpush2.xpose.msra.mxu0 0.0
        %2470 = vmatprep.subr.mxu0 0.0
        %2471 = vmatpush2.xpose.msra.mxu0 0.0
        %2472 = vmatprep.subr.mxu0 0.0
        %2473 = vmatpush2.xpose.msra.mxu0 0.0
        %2474 = vmatprep.subr.mxu0 0.0
        %2475 = vmatpush2.xpose.msra.mxu0 0.0
        %2476 = vmatprep.subr.mxu0 0.0
        %2477 = vmatpush2.xpose.msra.mxu0 0.0
        %2478 = vmatprep.subr.mxu0 0.0
        %2479 = vmatpush2.xpose.msra.mxu0 0.0
        %2480 = vmatprep.mubr.f32.mxu0 0.0
        %2481 = vmatmul.mubr.f32.gmra.mxu0 %v2408
        %v2482 = vpop.f32.mrf.mxu0
        %v2483 = vadd.f32 0.0, %v2482
        %v2484 = vpop.f32.mrf.mxu0
        %2485 = vdwg.mxu0
        %v2487 = vsel %vm1388, %v2396, 0
        %v2490 = vsel %vm1388, %v2400, 0
        %v2493 = vsel %vm1388, %v2401, 0
        %2495 = vmatprep.subr.mxu0 0.0
        %2496 = vmatpush1.xpose.msra.mxu0 0.0
        %2497 = vmatprep.subr.mxu0 0.0
        %2498 = vmatpush1.xpose.msra.mxu0 0.0
        %2499 = vmatprep.subr.mxu0 0.0
        %2500 = vmatpush1.xpose.msra.mxu0 0.0
        %2501 = vmatprep.subr.mxu0 0.0
        %2502 = vmatpush1.xpose.msra.mxu0 0.0
        %2503 = vmatprep.subr.mxu0 0.0
        %2504 = vmatpush1.xpose.msra.mxu0 0.0
        %2505 = vmatprep.subr.mxu0 0.0
        %2506 = vmatpush1.xpose.msra.mxu0 0.0
        %2507 = vmatprep.subr.mxu0 0.0
        %2508 = vmatpush1.xpose.msra.mxu0 0.0
        %2509 = vmatprep.subr.mxu0 0.0
        %2510 = vmatpush1.xpose.msra.mxu0 0.0
        %2511 = vmatprep.subr.mxu0 0.0
        %2512 = vmatpush1.xpose.msra.mxu0 0.0
        %2513 = vmatprep.subr.mxu0 0.0
        %2514 = vmatpush1.xpose.msra.mxu0 0.0
        %2515 = vmatprep.subr.mxu0 0.0
        %2516 = vmatpush1.xpose.msra.mxu0 0.0
        %2517 = vmatprep.subr.mxu0 0.0
        %2518 = vmatpush1.xpose.msra.mxu0 0.0
        %2519 = vmatprep.subr.mxu0 0.0
        %2520 = vmatpush1.xpose.msra.mxu0 0.0
        %2521 = vmatprep.subr.mxu0 0.0
        %2522 = vmatpush1.xpose.msra.mxu0 0.0
        %2523 = vmatprep.subr.mxu0 0.0
        %2524 = vmatpush1.xpose.msra.mxu0 %v2493
        %2525 = vmatprep.subr.mxu0 0.0
        %2526 = vmatpush1.xpose.msra.mxu0 %v2490
        %2527 = vmatprep.subr.mxu0 0.0
        %2528 = vmatpush2.xpose.msra.mxu0 0.0
        %2529 = vmatprep.subr.mxu0 0.0
        %2530 = vmatpush2.xpose.msra.mxu0 0.0
        %2531 = vmatprep.subr.mxu0 0.0
        %2532 = vmatpush2.xpose.msra.mxu0 0.0
        %2533 = vmatprep.subr.mxu0 0.0
        %2534 = vmatpush2.xpose.msra.mxu0 0.0
        %2535 = vmatprep.subr.mxu0 0.0
        %2536 = vmatpush2.xpose.msra.mxu0 0.0
        %2537 = vmatprep.subr.mxu0 0.0
        %2538 = vmatpush2.xpose.msra.mxu0 0.0
        %2539 = vmatprep.subr.mxu0 0.0
        %2540 = vmatpush2.xpose.msra.mxu0 0.0
        %2541 = vmatprep.subr.mxu0 0.0
        %2542 = vmatpush2.xpose.msra.mxu0 0.0
        %2543 = vmatprep.subr.mxu0 0.0
        %2544 = vmatpush2.xpose.msra.mxu0 0.0
        %2545 = vmatprep.subr.mxu0 0.0
        %2546 = vmatpush2.xpose.msra.mxu0 0.0
        %2547 = vmatprep.subr.mxu0 0.0
        %2548 = vmatpush2.xpose.msra.mxu0 0.0
        %2549 = vmatprep.subr.mxu0 0.0
        %2550 = vmatpush2.xpose.msra.mxu0 0.0
        %2551 = vmatprep.subr.mxu0 0.0
        %2552 = vmatpush2.xpose.msra.mxu0 0.0
        %2553 = vmatprep.subr.mxu0 0.0
        %2554 = vmatpush2.xpose.msra.mxu0 0.0
        %2555 = vmatprep.subr.mxu0 0.0
        %2556 = vmatpush2.xpose.msra.mxu0 0.0
        %2557 = vmatprep.subr.mxu0 0.0
        %2558 = vmatpush2.xpose.msra.mxu0 0.0
        %2559 = vmatprep.mubr.f32.mxu0 0.0
        %2560 = vmatmul.mubr.f32.gmra.mxu0 %v2487
        %v2561 = vpop.f32.mrf.mxu0
        %v2562 = vadd.f32 0.0, %v2561
        %v2563 = vpop.f32.mrf.mxu0
        %2564 = vdwg.mxu0
        %v2565 = vsel %vm1547, %v2483, -inf
        %2566 = vmax.xlane.f32.xlu0 %v2565
        %v2567 = vpop.xlane.xlu0 %2566
        %v2568 = vsel %vm1547, %v2562, -inf
        %2569 = vmax.xlane.f32.xlu0 %v2568
        %v2570 = vpop.xlane.xlu0 %2569
        %v2571 = vsub.f32 %v2483, %v2567
        %v2572 = vsub.f32 %v2562, %v2570
        %v2573 = vmul.f32 %v2571, 1.442695
        %v2574 = vpow.pop %v2573
        %v2575 = vmul.f32 %v2572, 1.442695
        %v2576 = vpow.pop %v2575
        %v2577 = vsel %vm1547, %v2574, 0.0
        %2578 = vadd.xlane.f32.xlu0 %v2577
        %v2579 = vpop.xlane.xlu0 %2578
        %v2580 = vsel %vm1547, %v2576, 0.0
        %2581 = vadd.xlane.f32.xlu0 %v2580
        %v2582 = vpop.xlane.xlu0 %2581
        %v2583 = vrcp.pop %v2579
        %v2584 = vmul.f32 %v2574, %v2583
        %v2585 = vrcp.pop %v2582
        %v2586 = vmul.f32 %v2576, %v2585
        %v2588 = vsel %vm1547, %v2584, 0
        %2590 = vmatprep.subr.mxu0 0.0
        %2591 = vmatpush1.msra.mxu0 0.0
        %2592 = vmatprep.subr.mxu0 0.0
        %2593 = vmatpush1.msra.mxu0 0.0
        %2594 = vmatprep.subr.mxu0 0.0
        %2595 = vmatpush1.msra.mxu0 0.0
        %2596 = vmatprep.subr.mxu0 0.0
        %2597 = vmatpush1.msra.mxu0 0.0
        %2598 = vmatprep.subr.mxu0 0.0
        %2599 = vmatpush1.msra.mxu0 0.0
        %2600 = vmatprep.subr.mxu0 0.0
        %2601 = vmatpush1.msra.mxu0 0.0
        %2602 = vmatprep.subr.mxu0 0.0
        %2603 = vmatpush1.msra.mxu0 0.0
        %2604 = vmatprep.subr.mxu0 0.0
        %2605 = vmatpush1.msra.mxu0 0.0
        %2606 = vmatprep.subr.mxu0 0.0
        %2607 = vmatpush1.msra.mxu0 0.0
        %2608 = vmatprep.subr.mxu0 0.0
        %2609 = vmatpush1.msra.mxu0 0.0
        %2610 = vmatprep.subr.mxu0 0.0
        %2611 = vmatpush1.msra.mxu0 0.0
        %2612 = vmatprep.subr.mxu0 0.0
        %2613 = vmatpush1.msra.mxu0 0.0
        %2614 = vmatprep.subr.mxu0 0.0
        %2615 = vmatpush1.msra.mxu0 0.0
        %2616 = vmatprep.subr.mxu0 0.0
        %2617 = vmatpush1.msra.mxu0 0.0
        %2618 = vmatprep.subr.mxu0 0.0
        %2619 = vmatpush1.msra.mxu0 %v2404
        %2620 = vmatprep.subr.mxu0 0.0
        %2621 = vmatpush1.msra.mxu0 %v2403
        %2622 = vmatprep.subr.mxu0 0.0
        %2623 = vmatpush2.msra.mxu0 0.0
        %2624 = vmatprep.subr.mxu0 0.0
        %2625 = vmatpush2.msra.mxu0 0.0
        %2626 = vmatprep.subr.mxu0 0.0
        %2627 = vmatpush2.msra.mxu0 0.0
        %2628 = vmatprep.subr.mxu0 0.0
        %2629 = vmatpush2.msra.mxu0 0.0
        %2630 = vmatprep.subr.mxu0 0.0
        %2631 = vmatpush2.msra.mxu0 0.0
        %2632 = vmatprep.subr.mxu0 0.0
        %2633 = vmatpush2.msra.mxu0 0.0
        %2634 = vmatprep.subr.mxu0 0.0
        %2635 = vmatpush2.msra.mxu0 0.0
        %2636 = vmatprep.subr.mxu0 0.0
        %2637 = vmatpush2.msra.mxu0 0.0
        %2638 = vmatprep.subr.mxu0 0.0
        %2639 = vmatpush2.msra.mxu0 0.0
        %2640 = vmatprep.subr.mxu0 0.0
        %2641 = vmatpush2.msra.mxu0 0.0
        %2642 = vmatprep.subr.mxu0 0.0
        %2643 = vmatpush2.msra.mxu0 0.0
        %2644 = vmatprep.subr.mxu0 0.0
        %2645 = vmatpush2.msra.mxu0 0.0
        %2646 = vmatprep.subr.mxu0 0.0
        %2647 = vmatpush2.msra.mxu0 0.0
        %2648 = vmatprep.subr.mxu0 0.0
        %2649 = vmatpush2.msra.mxu0 0.0
        %2650 = vmatprep.subr.mxu0 0.0
        %2651 = vmatpush2.msra.mxu0 0.0
        %2652 = vmatprep.subr.mxu0 0.0
        %2653 = vmatpush2.msra.mxu0 0.0
        %2654 = vmatprep.mubr.f32.mxu0 0.0
        %2655 = vmatmul.mubr.f32.gmra.mxu0 %v2588
        %v2656 = vpop.f32.mrf.mxu0
        %v2657 = vadd.f32 0.0, %v2656
        %v2658 = vpop.f32.mrf.mxu0
        %2659 = vdwg.mxu0
        %v2661 = vsel %vm1547, %v2586, 0
        %2663 = vmatprep.subr.mxu0 0.0
        %2664 = vmatpush1.msra.mxu0 0.0
        %2665 = vmatprep.subr.mxu0 0.0
        %2666 = vmatpush1.msra.mxu0 0.0
        %2667 = vmatprep.subr.mxu0 0.0
        %2668 = vmatpush1.msra.mxu0 0.0
        %2669 = vmatprep.subr.mxu0 0.0
        %2670 = vmatpush1.msra.mxu0 0.0
        %2671 = vmatprep.subr.mxu0 0.0
        %2672 = vmatpush1.msra.mxu0 0.0
        %2673 = vmatprep.subr.mxu0 0.0
        %2674 = vmatpush1.msra.mxu0 0.0
        %2675 = vmatprep.subr.mxu0 0.0
        %2676 = vmatpush1.msra.mxu0 0.0
        %2677 = vmatprep.subr.mxu0 0.0
        %2678 = vmatpush1.msra.mxu0 0.0
        %2679 = vmatprep.subr.mxu0 0.0
        %2680 = vmatpush1.msra.mxu0 0.0
        %2681 = vmatprep.subr.mxu0 0.0
        %2682 = vmatpush1.msra.mxu0 0.0
        %2683 = vmatprep.subr.mxu0 0.0
        %2684 = vmatpush1.msra.mxu0 0.0
        %2685 = vmatprep.subr.mxu0 0.0
        %2686 = vmatpush1.msra.mxu0 0.0
        %2687 = vmatprep.subr.mxu0 0.0
        %2688 = vmatpush1.msra.mxu0 0.0
        %2689 = vmatprep.subr.mxu0 0.0
        %2690 = vmatpush1.msra.mxu0 0.0
        %2691 = vmatprep.subr.mxu0 0.0
        %2692 = vmatpush1.msra.mxu0 %v2406
        %2693 = vmatprep.subr.mxu0 0.0
        %2694 = vmatpush1.msra.mxu0 %v2405
        %2695 = vmatprep.subr.mxu0 0.0
        %2696 = vmatpush2.msra.mxu0 0.0
        %2697 = vmatprep.subr.mxu0 0.0
        %2698 = vmatpush2.msra.mxu0 0.0
        %2699 = vmatprep.subr.mxu0 0.0
        %2700 = vmatpush2.msra.mxu0 0.0
        %2701 = vmatprep.subr.mxu0 0.0
        %2702 = vmatpush2.msra.mxu0 0.0
        %2703 = vmatprep.subr.mxu0 0.0
        %2704 = vmatpush2.msra.mxu0 0.0
        %2705 = vmatprep.subr.mxu0 0.0
        %2706 = vmatpush2.msra.mxu0 0.0
        %2707 = vmatprep.subr.mxu0 0.0
        %2708 = vmatpush2.msra.mxu0 0.0
        %2709 = vmatprep.subr.mxu0 0.0
        %2710 = vmatpush2.msra.mxu0 0.0
        %2711 = vmatprep.subr.mxu0 0.0
        %2712 = vmatpush2.msra.mxu0 0.0
        %2713 = vmatprep.subr.mxu0 0.0
        %2714 = vmatpush2.msra.mxu0 0.0
        %2715 = vmatprep.subr.mxu0 0.0
        %2716 = vmatpush2.msra.mxu0 0.0
        %2717 = vmatprep.subr.mxu0 0.0
        %2718 = vmatpush2.msra.mxu0 0.0
        %2719 = vmatprep.subr.mxu0 0.0
        %2720 = vmatpush2.msra.mxu0 0.0
        %2721 = vmatprep.subr.mxu0 0.0
        %2722 = vmatpush2.msra.mxu0 0.0
        %2723 = vmatprep.subr.mxu0 0.0
        %2724 = vmatpush2.msra.mxu0 0.0
        %2725 = vmatprep.subr.mxu0 0.0
        %2726 = vmatpush2.msra.mxu0 0.0
        %2727 = vmatprep.mubr.f32.mxu0 0.0
        %2728 = vmatmul.mubr.f32.gmra.mxu0 %v2661
        %v2729 = vpop.f32.mrf.mxu0
        %v2730 = vadd.f32 0.0, %v2729
        %v2731 = vpop.f32.mrf.mxu0
        %2732 = vdwg.mxu0
        %s2733 = scalar_lea.vmem [#allocation13], 16
        %v2734 = vld [vmem:[%s2733] sm:$0xff]
        %v2736 = vsel %vm1388, %v2657, 0
        %v2739 = vsel %vm1388, %v2730, 0
        %2741 = vmatprep.subr.mxu0 0.0
        %2742 = vmatpush1.msra.mxu0 0.0
        %2743 = vmatprep.subr.mxu0 0.0
        %2744 = vmatpush1.msra.mxu0 0.0
        %2745 = vmatprep.subr.mxu0 0.0
        %2746 = vmatpush1.msra.mxu0 0.0
        %2747 = vmatprep.subr.mxu0 0.0
        %2748 = vmatpush1.msra.mxu0 0.0
        %2749 = vmatprep.subr.mxu0 0.0
        %2750 = vmatpush1.msra.mxu0 0.0
        %2751 = vmatprep.subr.mxu0 0.0
        %2752 = vmatpush1.msra.mxu0 0.0
        %2753 = vmatprep.subr.mxu0 0.0
        %2754 = vmatpush1.msra.mxu0 0.0
        %2755 = vmatprep.subr.mxu0 0.0
        %2756 = vmatpush1.msra.mxu0 0.0
        %2757 = vmatprep.subr.mxu0 0.0
        %2758 = vmatpush1.msra.mxu0 0.0
        %2759 = vmatprep.subr.mxu0 0.0
        %2760 = vmatpush1.msra.mxu0 0.0
        %2761 = vmatprep.subr.mxu0 0.0
        %2762 = vmatpush1.msra.mxu0 0.0
        %2763 = vmatprep.subr.mxu0 0.0
        %2764 = vmatpush1.msra.mxu0 0.0
        %2765 = vmatprep.subr.mxu0 0.0
        %2766 = vmatpush1.msra.mxu0 0.0
        %2767 = vmatprep.subr.mxu0 0.0
        %2768 = vmatpush1.msra.mxu0 0.0
        %2769 = vmatprep.subr.mxu0 0.0
        %2770 = vmatpush1.msra.mxu0 0.0
        %2771 = vmatprep.subr.mxu0 0.0
        %2772 = vmatpush1.msra.mxu0 %v2734
        %2773 = vmatprep.subr.mxu0 0.0
        %2774 = vmatpush2.msra.mxu0 0.0
        %2775 = vmatprep.subr.mxu0 0.0
        %2776 = vmatpush2.msra.mxu0 0.0
        %2777 = vmatprep.subr.mxu0 0.0
        %2778 = vmatpush2.msra.mxu0 0.0
        %2779 = vmatprep.subr.mxu0 0.0
        %2780 = vmatpush2.msra.mxu0 0.0
        %2781 = vmatprep.subr.mxu0 0.0
        %2782 = vmatpush2.msra.mxu0 0.0
        %2783 = vmatprep.subr.mxu0 0.0
        %2784 = vmatpush2.msra.mxu0 0.0
        %2785 = vmatprep.subr.mxu0 0.0
        %2786 = vmatpush2.msra.mxu0 0.0
        %2787 = vmatprep.subr.mxu0 0.0
        %2788 = vmatpush2.msra.mxu0 0.0
        %2789 = vmatprep.subr.mxu0 0.0
        %2790 = vmatpush2.msra.mxu0 0.0
        %2791 = vmatprep.subr.mxu0 0.0
        %2792 = vmatpush2.msra.mxu0 0.0
        %2793 = vmatprep.subr.mxu0 0.0
        %2794 = vmatpush2.msra.mxu0 0.0
        %2795 = vmatprep.subr.mxu0 0.0
        %2796 = vmatpush2.msra.mxu0 0.0
        %2797 = vmatprep.subr.mxu0 0.0
        %2798 = vmatpush2.msra.mxu0 0.0
        %2799 = vmatprep.subr.mxu0 0.0
        %2800 = vmatpush2.msra.mxu0 0.0
        %2801 = vmatprep.subr.mxu0 0.0
        %2802 = vmatpush2.msra.mxu0 0.0
        %2803 = vmatprep.subr.mxu0 0.0
        %2804 = vmatpush2.msra.mxu0 0.0
        %2805 = vmatprep.mubr.f32.mxu0 0.0
        %2806 = vmatmul.mubr.f32.gmra.mxu0 %v2736
        %v2807 = vpop.f32.mrf.mxu0
        %v2808 = vadd.f32 0.0, %v2807
        %v2809 = vpop.f32.mrf.mxu0
        %2810 = vmatprep.mubr.f32.mxu0 0.0
        %2811 = vmatmul.mubr.f32.gmra.mxu0 %v2739
        %v2812 = vpop.f32.mrf.mxu0
        %v2813 = vadd.f32 0.0, %v2812
        %v2814 = vpop.f32.mrf.mxu0
        %2815 = vdwg.mxu0
        %v2816 = vadd.f32 %v2299, %v2808
        %v2817 = vadd.f32 %v2304, %v2813
        %s2818 = scalar_lea.vmem [#allocation7], 24
        %v2819 = vld [vmem:[%s2818] sm:$0xff]
        %s2820 = scalar_lea.vmem [#allocation9], 3
        %v2821 = vld [vmem:[%s2820] sm:$0x1]
        %v2823 = vlaneseq
        %v2824 = vshrl.u32 %v2823, 7
        %v2825 = vsub.s32 0, %v2824
        %v2826 = vrot.slane %v2821, %v2825
        %v2829 = vsel %vm1293, %v2819, 0
        %2831 = vmatprep.subr.mxu0 0.0
        %2832 = vmatpush1.xpose.msra.mxu0 0.0
        %2833 = vmatprep.subr.mxu0 0.0
        %2834 = vmatpush1.xpose.msra.mxu0 0.0
        %2835 = vmatprep.subr.mxu0 0.0
        %2836 = vmatpush1.xpose.msra.mxu0 0.0
        %2837 = vmatprep.subr.mxu0 0.0
        %2838 = vmatpush1.xpose.msra.mxu0 0.0
        %2839 = vmatprep.subr.mxu0 0.0
        %2840 = vmatpush1.xpose.msra.mxu0 0.0
        %2841 = vmatprep.subr.mxu0 0.0
        %2842 = vmatpush1.xpose.msra.mxu0 0.0
        %2843 = vmatprep.subr.mxu0 0.0
        %2844 = vmatpush1.xpose.msra.mxu0 0.0
        %2845 = vmatprep.subr.mxu0 0.0
        %2846 = vmatpush1.xpose.msra.mxu0 0.0
        %2847 = vmatprep.subr.mxu0 0.0
        %2848 = vmatpush1.xpose.msra.mxu0 0.0
        %2849 = vmatprep.subr.mxu0 0.0
        %2850 = vmatpush1.xpose.msra.mxu0 0.0
        %2851 = vmatprep.subr.mxu0 0.0
        %2852 = vmatpush1.xpose.msra.mxu0 0.0
        %2853 = vmatprep.subr.mxu0 0.0
        %2854 = vmatpush1.xpose.msra.mxu0 0.0
        %2855 = vmatprep.subr.mxu0 0.0
        %2856 = vmatpush1.xpose.msra.mxu0 0.0
        %2857 = vmatprep.subr.mxu0 0.0
        %2858 = vmatpush1.xpose.msra.mxu0 0.0
        %2859 = vmatprep.subr.mxu0 0.0
        %2860 = vmatpush1.xpose.msra.mxu0 0.0
        %2861 = vmatprep.subr.mxu0 0.0
        %2862 = vmatpush1.xpose.msra.mxu0 %v2829
        %2863 = vmatprep.subr.mxu0 0.0
        %2864 = vmatpush2.xpose.msra.mxu0 0.0
        %2865 = vmatprep.subr.mxu0 0.0
        %2866 = vmatpush2.xpose.msra.mxu0 0.0
        %2867 = vmatprep.subr.mxu0 0.0
        %2868 = vmatpush2.xpose.msra.mxu0 0.0
        %2869 = vmatprep.subr.mxu0 0.0
        %2870 = vmatpush2.xpose.msra.mxu0 0.0
        %2871 = vmatprep.subr.mxu0 0.0
        %2872 = vmatpush2.xpose.msra.mxu0 0.0
        %2873 = vmatprep.subr.mxu0 0.0
        %2874 = vmatpush2.xpose.msra.mxu0 0.0
        %2875 = vmatprep.subr.mxu0 0.0
        %2876 = vmatpush2.xpose.msra.mxu0 0.0
        %2877 = vmatprep.subr.mxu0 0.0
        %2878 = vmatpush2.xpose.msra.mxu0 0.0
        %2879 = vmatprep.subr.mxu0 0.0
        %2880 = vmatpush2.xpose.msra.mxu0 0.0
        %2881 = vmatprep.subr.mxu0 0.0
        %2882 = vmatpush2.xpose.msra.mxu0 0.0
        %2883 = vmatprep.subr.mxu0 0.0
        %2884 = vmatpush2.xpose.msra.mxu0 0.0
        %2885 = vmatprep.subr.mxu0 0.0
        %2886 = vmatpush2.xpose.msra.mxu0 0.0
        %2887 = vmatprep.subr.mxu0 0.0
        %2888 = vmatpush2.xpose.msra.mxu0 0.0
        %2889 = vmatprep.subr.mxu0 0.0
        %2890 = vmatpush2.xpose.msra.mxu0 0.0
        %2891 = vmatprep.subr.mxu0 0.0
        %2892 = vmatpush2.xpose.msra.mxu0 0.0
        %2893 = vmatprep.subr.mxu0 0.0
        %2894 = vmatpush2.xpose.msra.mxu0 0.0
        %2895 = vmatprep.mubr.f32.mxu0 0.0
        %2896 = vmatmul.mubr.f32.gmra.mxu0 %v1295
        %v2897 = vpop.f32.mrf.mxu0
        %v2898 = vadd.f32 %v2826, %v2897
        %v2899 = vpop.f32.mrf.mxu0
        %2900 = vmatprep.mubr.f32.mxu0 0.0
        %2901 = vmatmul.mubr.f32.gmra.mxu0 %v1298
        %v2902 = vpop.f32.mrf.mxu0
        %v2903 = vadd.f32 %v2826, %v2902
        %v2904 = vpop.f32.mrf.mxu0
        %2905 = vdwg.mxu0
        %v2906 = vmul.f32 %v2898, 0.17677669
        %v2907 = vmul.f32 %v2903, 0.17677669
        %s2908 = scalar_lea.vmem [#allocation2], 96
        %v2909 = vld [vmem:[%s2908] sm:$0xff]
        %v2910 = vld [vmem:[%s2908 + $0x8] sm:$0xff]
        %v2911 = vld [vmem:[%s2908 + $0x10] sm:$0xff]
        %v2912 = vld [vmem:[%s2908 + $0x18] sm:$0xff]
        %s2913 = scalar_lea.vmem [#allocation3], 96
        %v2914 = vld [vmem:[%s2913] sm:$0xff]
        %v2915 = vld [vmem:[%s2913 + $0x8] sm:$0xff]
        %v2916 = vld [vmem:[%s2913 + $0x10] sm:$0xff]
        %v2917 = vld [vmem:[%s2913 + $0x18] sm:$0xff]
        %v2919 = vsel %vm1388, %v2906, 0
        %v2922 = vsel %vm1388, %v2909, 0
        %v2925 = vsel %vm1388, %v2910, 0
        %2927 = vmatprep.subr.mxu0 0.0
        %2928 = vmatpush1.xpose.msra.mxu0 0.0
        %2929 = vmatprep.subr.mxu0 0.0
        %2930 = vmatpush1.xpose.msra.mxu0 0.0
        %2931 = vmatprep.subr.mxu0 0.0
        %2932 = vmatpush1.xpose.msra.mxu0 0.0
        %2933 = vmatprep.subr.mxu0 0.0
        %2934 = vmatpush1.xpose.msra.mxu0 0.0
        %2935 = vmatprep.subr.mxu0 0.0
        %2936 = vmatpush1.xpose.msra.mxu0 0.0
        %2937 = vmatprep.subr.mxu0 0.0
        %2938 = vmatpush1.xpose.msra.mxu0 0.0
        %2939 = vmatprep.subr.mxu0 0.0
        %2940 = vmatpush1.xpose.msra.mxu0 0.0
        %2941 = vmatprep.subr.mxu0 0.0
        %2942 = vmatpush1.xpose.msra.mxu0 0.0
        %2943 = vmatprep.subr.mxu0 0.0
        %2944 = vmatpush1.xpose.msra.mxu0 0.0
        %2945 = vmatprep.subr.mxu0 0.0
        %2946 = vmatpush1.xpose.msra.mxu0 0.0
        %2947 = vmatprep.subr.mxu0 0.0
        %2948 = vmatpush1.xpose.msra.mxu0 0.0
        %2949 = vmatprep.subr.mxu0 0.0
        %2950 = vmatpush1.xpose.msra.mxu0 0.0
        %2951 = vmatprep.subr.mxu0 0.0
        %2952 = vmatpush1.xpose.msra.mxu0 0.0
        %2953 = vmatprep.subr.mxu0 0.0
        %2954 = vmatpush1.xpose.msra.mxu0 0.0
        %2955 = vmatprep.subr.mxu0 0.0
        %2956 = vmatpush1.xpose.msra.mxu0 %v2925
        %2957 = vmatprep.subr.mxu0 0.0
        %2958 = vmatpush1.xpose.msra.mxu0 %v2922
        %2959 = vmatprep.subr.mxu0 0.0
        %2960 = vmatpush2.xpose.msra.mxu0 0.0
        %2961 = vmatprep.subr.mxu0 0.0
        %2962 = vmatpush2.xpose.msra.mxu0 0.0
        %2963 = vmatprep.subr.mxu0 0.0
        %2964 = vmatpush2.xpose.msra.mxu0 0.0
        %2965 = vmatprep.subr.mxu0 0.0
        %2966 = vmatpush2.xpose.msra.mxu0 0.0
        %2967 = vmatprep.subr.mxu0 0.0
        %2968 = vmatpush2.xpose.msra.mxu0 0.0
        %2969 = vmatprep.subr.mxu0 0.0
        %2970 = vmatpush2.xpose.msra.mxu0 0.0
        %2971 = vmatprep.subr.mxu0 0.0
        %2972 = vmatpush2.xpose.msra.mxu0 0.0
        %2973 = vmatprep.subr.mxu0 0.0
        %2974 = vmatpush2.xpose.msra.mxu0 0.0
        %2975 = vmatprep.subr.mxu0 0.0
        %2976 = vmatpush2.xpose.msra.mxu0 0.0
        %2977 = vmatprep.subr.mxu0 0.0
        %2978 = vmatpush2.xpose.msra.mxu0 0.0
        %2979 = vmatprep.subr.mxu0 0.0
        %2980 = vmatpush2.xpose.msra.mxu0 0.0
        %2981 = vmatprep.subr.mxu0 0.0
        %2982 = vmatpush2.xpose.msra.mxu0 0.0
        %2983 = vmatprep.subr.mxu0 0.0
        %2984 = vmatpush2.xpose.msra.mxu0 0.0
        %2985 = vmatprep.subr.mxu0 0.0
        %2986 = vmatpush2.xpose.msra.mxu0 0.0
        %2987 = vmatprep.subr.mxu0 0.0
        %2988 = vmatpush2.xpose.msra.mxu0 0.0
        %2989 = vmatprep.subr.mxu0 0.0
        %2990 = vmatpush2.xpose.msra.mxu0 0.0
        %2991 = vmatprep.mubr.f32.mxu0 0.0
        %2992 = vmatmul.mubr.f32.gmra.mxu0 %v2919
        %v2993 = vpop.f32.mrf.mxu0
        %v2994 = vadd.f32 0.0, %v2993
        %v2995 = vpop.f32.mrf.mxu0
        %2996 = vdwg.mxu0
        %v2998 = vsel %vm1388, %v2907, 0
        %v3001 = vsel %vm1388, %v2911, 0
        %v3004 = vsel %vm1388, %v2912, 0
        %3006 = vmatprep.subr.mxu0 0.0
        %3007 = vmatpush1.xpose.msra.mxu0 0.0
        %3008 = vmatprep.subr.mxu0 0.0
        %3009 = vmatpush1.xpose.msra.mxu0 0.0
        %3010 = vmatprep.subr.mxu0 0.0
        %3011 = vmatpush1.xpose.msra.mxu0 0.0
        %3012 = vmatprep.subr.mxu0 0.0
        %3013 = vmatpush1.xpose.msra.mxu0 0.0
        %3014 = vmatprep.subr.mxu0 0.0
        %3015 = vmatpush1.xpose.msra.mxu0 0.0
        %3016 = vmatprep.subr.mxu0 0.0
        %3017 = vmatpush1.xpose.msra.mxu0 0.0
        %3018 = vmatprep.subr.mxu0 0.0
        %3019 = vmatpush1.xpose.msra.mxu0 0.0
        %3020 = vmatprep.subr.mxu0 0.0
        %3021 = vmatpush1.xpose.msra.mxu0 0.0
        %3022 = vmatprep.subr.mxu0 0.0
        %3023 = vmatpush1.xpose.msra.mxu0 0.0
        %3024 = vmatprep.subr.mxu0 0.0
        %3025 = vmatpush1.xpose.msra.mxu0 0.0
        %3026 = vmatprep.subr.mxu0 0.0
        %3027 = vmatpush1.xpose.msra.mxu0 0.0
        %3028 = vmatprep.subr.mxu0 0.0
        %3029 = vmatpush1.xpose.msra.mxu0 0.0
        %3030 = vmatprep.subr.mxu0 0.0
        %3031 = vmatpush1.xpose.msra.mxu0 0.0
        %3032 = vmatprep.subr.mxu0 0.0
        %3033 = vmatpush1.xpose.msra.mxu0 0.0
        %3034 = vmatprep.subr.mxu0 0.0
        %3035 = vmatpush1.xpose.msra.mxu0 %v3004
        %3036 = vmatprep.subr.mxu0 0.0
        %3037 = vmatpush1.xpose.msra.mxu0 %v3001
        %3038 = vmatprep.subr.mxu0 0.0
        %3039 = vmatpush2.xpose.msra.mxu0 0.0
        %3040 = vmatprep.subr.mxu0 0.0
        %3041 = vmatpush2.xpose.msra.mxu0 0.0
        %3042 = vmatprep.subr.mxu0 0.0
        %3043 = vmatpush2.xpose.msra.mxu0 0.0
        %3044 = vmatprep.subr.mxu0 0.0
        %3045 = vmatpush2.xpose.msra.mxu0 0.0
        %3046 = vmatprep.subr.mxu0 0.0
        %3047 = vmatpush2.xpose.msra.mxu0 0.0
        %3048 = vmatprep.subr.mxu0 0.0
        %3049 = vmatpush2.xpose.msra.mxu0 0.0
        %3050 = vmatprep.subr.mxu0 0.0
        %3051 = vmatpush2.xpose.msra.mxu0 0.0
        %3052 = vmatprep.subr.mxu0 0.0
        %3053 = vmatpush2.xpose.msra.mxu0 0.0
        %3054 = vmatprep.subr.mxu0 0.0
        %3055 = vmatpush2.xpose.msra.mxu0 0.0
        %3056 = vmatprep.subr.mxu0 0.0
        %3057 = vmatpush2.xpose.msra.mxu0 0.0
        %3058 = vmatprep.subr.mxu0 0.0
        %3059 = vmatpush2.xpose.msra.mxu0 0.0
        %3060 = vmatprep.subr.mxu0 0.0
        %3061 = vmatpush2.xpose.msra.mxu0 0.0
        %3062 = vmatprep.subr.mxu0 0.0
        %3063 = vmatpush2.xpose.msra.mxu0 0.0
        %3064 = vmatprep.subr.mxu0 0.0
        %3065 = vmatpush2.xpose.msra.mxu0 0.0
        %3066 = vmatprep.subr.mxu0 0.0
        %3067 = vmatpush2.xpose.msra.mxu0 0.0
        %3068 = vmatprep.subr.mxu0 0.0
        %3069 = vmatpush2.xpose.msra.mxu0 0.0
        %3070 = vmatprep.mubr.f32.mxu0 0.0
        %3071 = vmatmul.mubr.f32.gmra.mxu0 %v2998
        %v3072 = vpop.f32.mrf.mxu0
        %v3073 = vadd.f32 0.0, %v3072
        %v3074 = vpop.f32.mrf.mxu0
        %3075 = vdwg.mxu0
        %v3076 = vsel %vm1547, %v2994, -inf
        %3077 = vmax.xlane.f32.xlu0 %v3076
        %v3078 = vpop.xlane.xlu0 %3077
        %v3079 = vsel %vm1547, %v3073, -inf
        %3080 = vmax.xlane.f32.xlu0 %v3079
        %v3081 = vpop.xlane.xlu0 %3080
        %v3082 = vsub.f32 %v2994, %v3078
        %v3083 = vsub.f32 %v3073, %v3081
        %v3084 = vmul.f32 %v3082, 1.442695
        %v3085 = vpow.pop %v3084
        %v3086 = vmul.f32 %v3083, 1.442695
        %v3087 = vpow.pop %v3086
        %v3088 = vsel %vm1547, %v3085, 0.0
        %3089 = vadd.xlane.f32.xlu0 %v3088
        %v3090 = vpop.xlane.xlu0 %3089
        %v3091 = vsel %vm1547, %v3087, 0.0
        %3092 = vadd.xlane.f32.xlu0 %v3091
        %v3093 = vpop.xlane.xlu0 %3092
        %v3094 = vrcp.pop %v3090
        %v3095 = vmul.f32 %v3085, %v3094
        %v3096 = vrcp.pop %v3093
        %v3097 = vmul.f32 %v3087, %v3096
        %v3099 = vsel %vm1547, %v3095, 0
        %3101 = vmatprep.subr.mxu0 0.0
        %3102 = vmatpush1.msra.mxu0 0.0
        %3103 = vmatprep.subr.mxu0 0.0
        %3104 = vmatpush1.msra.mxu0 0.0
        %3105 = vmatprep.subr.mxu0 0.0
        %3106 = vmatpush1.msra.mxu0 0.0
        %3107 = vmatprep.subr.mxu0 0.0
        %3108 = vmatpush1.msra.mxu0 0.0
        %3109 = vmatprep.subr.mxu0 0.0
        %3110 = vmatpush1.msra.mxu0 0.0
        %3111 = vmatprep.subr.mxu0 0.0
        %3112 = vmatpush1.msra.mxu0 0.0
        %3113 = vmatprep.subr.mxu0 0.0
        %3114 = vmatpush1.msra.mxu0 0.0
        %3115 = vmatprep.subr.mxu0 0.0
        %3116 = vmatpush1.msra.mxu0 0.0
        %3117 = vmatprep.subr.mxu0 0.0
        %3118 = vmatpush1.msra.mxu0 0.0
        %3119 = vmatprep.subr.mxu0 0.0
        %3120 = vmatpush1.msra.mxu0 0.0
        %3121 = vmatprep.subr.mxu0 0.0
        %3122 = vmatpush1.msra.mxu0 0.0
        %3123 = vmatprep.subr.mxu0 0.0
        %3124 = vmatpush1.msra.mxu0 0.0
        %3125 = vmatprep.subr.mxu0 0.0
        %3126 = vmatpush1.msra.mxu0 0.0
        %3127 = vmatprep.subr.mxu0 0.0
        %3128 = vmatpush1.msra.mxu0 0.0
        %3129 = vmatprep.subr.mxu0 0.0
        %3130 = vmatpush1.msra.mxu0 %v2915
        %3131 = vmatprep.subr.mxu0 0.0
        %3132 = vmatpush1.msra.mxu0 %v2914
        %3133 = vmatprep.subr.mxu0 0.0
        %3134 = vmatpush2.msra.mxu0 0.0
        %3135 = vmatprep.subr.mxu0 0.0
        %3136 = vmatpush2.msra.mxu0 0.0
        %3137 = vmatprep.subr.mxu0 0.0
        %3138 = vmatpush2.msra.mxu0 0.0
        %3139 = vmatprep.subr.mxu0 0.0
        %3140 = vmatpush2.msra.mxu0 0.0
        %3141 = vmatprep.subr.mxu0 0.0
        %3142 = vmatpush2.msra.mxu0 0.0
        %3143 = vmatprep.subr.mxu0 0.0
        %3144 = vmatpush2.msra.mxu0 0.0
        %3145 = vmatprep.subr.mxu0 0.0
        %3146 = vmatpush2.msra.mxu0 0.0
        %3147 = vmatprep.subr.mxu0 0.0
        %3148 = vmatpush2.msra.mxu0 0.0
        %3149 = vmatprep.subr.mxu0 0.0
        %3150 = vmatpush2.msra.mxu0 0.0
        %3151 = vmatprep.subr.mxu0 0.0
        %3152 = vmatpush2.msra.mxu0 0.0
        %3153 = vmatprep.subr.mxu0 0.0
        %3154 = vmatpush2.msra.mxu0 0.0
        %3155 = vmatprep.subr.mxu0 0.0
        %3156 = vmatpush2.msra.mxu0 0.0
        %3157 = vmatprep.subr.mxu0 0.0
        %3158 = vmatpush2.msra.mxu0 0.0
        %3159 = vmatprep.subr.mxu0 0.0
        %3160 = vmatpush2.msra.mxu0 0.0
        %3161 = vmatprep.subr.mxu0 0.0
        %3162 = vmatpush2.msra.mxu0 0.0
        %3163 = vmatprep.subr.mxu0 0.0
        %3164 = vmatpush2.msra.mxu0 0.0
        %3165 = vmatprep.mubr.f32.mxu0 0.0
        %3166 = vmatmul.mubr.f32.gmra.mxu0 %v3099
        %v3167 = vpop.f32.mrf.mxu0
        %v3168 = vadd.f32 0.0, %v3167
        %v3169 = vpop.f32.mrf.mxu0
        %3170 = vdwg.mxu0
        %v3172 = vsel %vm1547, %v3097, 0
        %3174 = vmatprep.subr.mxu0 0.0
        %3175 = vmatpush1.msra.mxu0 0.0
        %3176 = vmatprep.subr.mxu0 0.0
        %3177 = vmatpush1.msra.mxu0 0.0
        %3178 = vmatprep.subr.mxu0 0.0
        %3179 = vmatpush1.msra.mxu0 0.0
        %3180 = vmatprep.subr.mxu0 0.0
        %3181 = vmatpush1.msra.mxu0 0.0
        %3182 = vmatprep.subr.mxu0 0.0
        %3183 = vmatpush1.msra.mxu0 0.0
        %3184 = vmatprep.subr.mxu0 0.0
        %3185 = vmatpush1.msra.mxu0 0.0
        %3186 = vmatprep.subr.mxu0 0.0
        %3187 = vmatpush1.msra.mxu0 0.0
        %3188 = vmatprep.subr.mxu0 0.0
        %3189 = vmatpush1.msra.mxu0 0.0
        %3190 = vmatprep.subr.mxu0 0.0
        %3191 = vmatpush1.msra.mxu0 0.0
        %3192 = vmatprep.subr.mxu0 0.0
        %3193 = vmatpush1.msra.mxu0 0.0
        %3194 = vmatprep.subr.mxu0 0.0
        %3195 = vmatpush1.msra.mxu0 0.0
        %3196 = vmatprep.subr.mxu0 0.0
        %3197 = vmatpush1.msra.mxu0 0.0
        %3198 = vmatprep.subr.mxu0 0.0
        %3199 = vmatpush1.msra.mxu0 0.0
        %3200 = vmatprep.subr.mxu0 0.0
        %3201 = vmatpush1.msra.mxu0 0.0
        %3202 = vmatprep.subr.mxu0 0.0
        %3203 = vmatpush1.msra.mxu0 %v2917
        %3204 = vmatprep.subr.mxu0 0.0
        %3205 = vmatpush1.msra.mxu0 %v2916
        %3206 = vmatprep.subr.mxu0 0.0
        %3207 = vmatpush2.msra.mxu0 0.0
        %3208 = vmatprep.subr.mxu0 0.0
        %3209 = vmatpush2.msra.mxu0 0.0
        %3210 = vmatprep.subr.mxu0 0.0
        %3211 = vmatpush2.msra.mxu0 0.0
        %3212 = vmatprep.subr.mxu0 0.0
        %3213 = vmatpush2.msra.mxu0 0.0
        %3214 = vmatprep.subr.mxu0 0.0
        %3215 = vmatpush2.msra.mxu0 0.0
        %3216 = vmatprep.subr.mxu0 0.0
        %3217 = vmatpush2.msra.mxu0 0.0
        %3218 = vmatprep.subr.mxu0 0.0
        %3219 = vmatpush2.msra.mxu0 0.0
        %3220 = vmatprep.subr.mxu0 0.0
        %3221 = vmatpush2.msra.mxu0 0.0
        %3222 = vmatprep.subr.mxu0 0.0
        %3223 = vmatpush2.msra.mxu0 0.0
        %3224 = vmatprep.subr.mxu0 0.0
        %3225 = vmatpush2.msra.mxu0 0.0
        %3226 = vmatprep.subr.mxu0 0.0
        %3227 = vmatpush2.msra.mxu0 0.0
        %3228 = vmatprep.subr.mxu0 0.0
        %3229 = vmatpush2.msra.mxu0 0.0
        %3230 = vmatprep.subr.mxu0 0.0
        %3231 = vmatpush2.msra.mxu0 0.0
        %3232 = vmatprep.subr.mxu0 0.0
        %3233 = vmatpush2.msra.mxu0 0.0
        %3234 = vmatprep.subr.mxu0 0.0
        %3235 = vmatpush2.msra.mxu0 0.0
        %3236 = vmatprep.subr.mxu0 0.0
        %3237 = vmatpush2.msra.mxu0 0.0
        %3238 = vmatprep.mubr.f32.mxu0 0.0
        %3239 = vmatmul.mubr.f32.gmra.mxu0 %v3172
        %v3240 = vpop.f32.mrf.mxu0
        %v3241 = vadd.f32 0.0, %v3240
        %v3242 = vpop.f32.mrf.mxu0
        %3243 = vdwg.mxu0
        %s3244 = scalar_lea.vmem [#allocation13], 24
        %v3245 = vld [vmem:[%s3244] sm:$0xff]
        %v3247 = vsel %vm1388, %v3168, 0
        %v3250 = vsel %vm1388, %v3241, 0
        %3252 = vmatprep.subr.mxu0 0.0
        %3253 = vmatpush1.msra.mxu0 0.0
        %3254 = vmatprep.subr.mxu0 0.0
        %3255 = vmatpush1.msra.mxu0 0.0
        %3256 = vmatprep.subr.mxu0 0.0
        %3257 = vmatpush1.msra.mxu0 0.0
        %3258 = vmatprep.subr.mxu0 0.0
        %3259 = vmatpush1.msra.mxu0 0.0
        %3260 = vmatprep.subr.mxu0 0.0
        %3261 = vmatpush1.msra.mxu0 0.0
        %3262 = vmatprep.subr.mxu0 0.0
        %3263 = vmatpush1.msra.mxu0 0.0
        %3264 = vmatprep.subr.mxu0 0.0
        %3265 = vmatpush1.msra.mxu0 0.0
        %3266 = vmatprep.subr.mxu0 0.0
        %3267 = vmatpush1.msra.mxu0 0.0
        %3268 = vmatprep.subr.mxu0 0.0
        %3269 = vmatpush1.msra.mxu0 0.0
        %3270 = vmatprep.subr.mxu0 0.0
        %3271 = vmatpush1.msra.mxu0 0.0
        %3272 = vmatprep.subr.mxu0 0.0
        %3273 = vmatpush1.msra.mxu0 0.0
        %3274 = vmatprep.subr.mxu0 0.0
        %3275 = vmatpush1.msra.mxu0 0.0
        %3276 = vmatprep.subr.mxu0 0.0
        %3277 = vmatpush1.msra.mxu0 0.0
        %3278 = vmatprep.subr.mxu0 0.0
        %3279 = vmatpush1.msra.mxu0 0.0
        %3280 = vmatprep.subr.mxu0 0.0
        %3281 = vmatpush1.msra.mxu0 0.0
        %3282 = vmatprep.subr.mxu0 0.0
        %3283 = vmatpush1.msra.mxu0 %v3245
        %3284 = vmatprep.subr.mxu0 0.0
        %3285 = vmatpush2.msra.mxu0 0.0
        %3286 = vmatprep.subr.mxu0 0.0
        %3287 = vmatpush2.msra.mxu0 0.0
        %3288 = vmatprep.subr.mxu0 0.0
        %3289 = vmatpush2.msra.mxu0 0.0
        %3290 = vmatprep.subr.mxu0 0.0
        %3291 = vmatpush2.msra.mxu0 0.0
        %3292 = vmatprep.subr.mxu0 0.0
        %3293 = vmatpush2.msra.mxu0 0.0
        %3294 = vmatprep.subr.mxu0 0.0
        %3295 = vmatpush2.msra.mxu0 0.0
        %3296 = vmatprep.subr.mxu0 0.0
        %3297 = vmatpush2.msra.mxu0 0.0
        %3298 = vmatprep.subr.mxu0 0.0
        %3299 = vmatpush2.msra.mxu0 0.0
        %3300 = vmatprep.subr.mxu0 0.0
        %3301 = vmatpush2.msra.mxu0 0.0
        %3302 = vmatprep.subr.mxu0 0.0
        %3303 = vmatpush2.msra.mxu0 0.0
        %3304 = vmatprep.subr.mxu0 0.0
        %3305 = vmatpush2.msra.mxu0 0.0
        %3306 = vmatprep.subr.mxu0 0.0
        %3307 = vmatpush2.msra.mxu0 0.0
        %3308 = vmatprep.subr.mxu0 0.0
        %3309 = vmatpush2.msra.mxu0 0.0
        %3310 = vmatprep.subr.mxu0 0.0
        %3311 = vmatpush2.msra.mxu0 0.0
        %3312 = vmatprep.subr.mxu0 0.0
        %3313 = vmatpush2.msra.mxu0 0.0
        %3314 = vmatprep.subr.mxu0 0.0
        %3315 = vmatpush2.msra.mxu0 0.0
        %3316 = vmatprep.mubr.f32.mxu0 0.0
        %3317 = vmatmul.mubr.f32.gmra.mxu0 %v3247
        %v3318 = vpop.f32.mrf.mxu0
        %v3319 = vadd.f32 0.0, %v3318
        %v3320 = vpop.f32.mrf.mxu0
        %3321 = vmatprep.mubr.f32.mxu0 0.0
        %3322 = vmatmul.mubr.f32.gmra.mxu0 %v3250
        %v3323 = vpop.f32.mrf.mxu0
        %v3324 = vadd.f32 0.0, %v3323
        %v3325 = vpop.f32.mrf.mxu0
        %3326 = vdwg.mxu0
        %v3327 = vadd.f32 %v2816, %v3319
        %v3328 = vadd.f32 %v2817, %v3324
        %v3329 = vld [vmem:[%s8] sm:$0x1]
        %v3331 = vlaneseq
        %v3332 = vshrl.u32 %v3331, 7
        %v3333 = vsub.s32 0, %v3332
        %v3334 = vrot.slane %v3329, %v3333
        %v3336 = vadd.f32 %v3327, %v3334
        %v3337 = vadd.f32 %v3328, %v3334
        %3338 = vst.msk [vmem:[%s438] sm:$0xff] %vm1293, %v3336
        %3339 = vst.msk [vmem:[%s438 + $0x8] sm:$0xff] %vm1293, %v3337
        %s3340 = sand.u32 %s245, 1
        %s3341 = scalar_lea.sflag [#allocation6], %s3340
        %s3342 = sand.u32 %s245, 1
        %s3343 = smul.addr %s3342, 16
        %s3344 = scalar_lea.vmem [#allocation15], %s3343
        // Predicated region
        $region85: #{tpu_custom_call.1} parent=55 // pred_check
          %p3345 = pneg %p255
        $region86: #{tpu_custom_call.1} parent=55 // pred_check_branch
          %3347 = sbr.rel (%p3345) target = $region88
        $region87: #{tpu_custom_call.1} parent=55 // pred_region
          %s3348 = smul.u32 2, %s33
          %s3350 = ssub.s32 256, 256
          %3351 = vsyncadd %s3341, %s3350
          %s3352 = smul.addr %s3348, 2
          %s3353 = sadd.s32 %s34, %s3352
          %s3354 = smul.addr %s3353, 128
          %s3355 = scalar_lea.hbm %s9, %s3354
          %s3356 = sshll.u32 %s3344, 4
          %s3357 = int_to_ptr.vmem [resolvable:$true] %s3356
          %3362 = dma.vmem_to_hbm [thread:$0]  %s3357, 256, %s3355, %s3341, 128, 256, 8
        $region88: #{tpu_custom_call.1} parent=55 // pred_fallthru
          _
      $region56: #{tpu_custom_call.1} parent=5 // pred_fallthru
        _
      %p3363 = scmp.le.s32.totalorder 2, %s24
      // Predicated region
      $region89: #{tpu_custom_call.1} parent=5 // pred_check
        %p3364 = pneg %p3363
      $region90: #{tpu_custom_call.1} parent=5 // pred_check_branch
        %3366 = sbr.rel (%p3364) target = $region92
      $region91: #{tpu_custom_call.1} parent=5 // pred_region
        %s3367 = ssub.s32 %s24, 2
        // Predicated region
        $region93: #{tpu_custom_call.1} parent=91 // pred_check
          %p3368 = pneg %p261
        $region94: #{tpu_custom_call.1} parent=91 // pred_check_branch
          %3370 = sbr.rel (%p3368) target = $region96
        $region95: #{tpu_custom_call.1} parent=91 // pred_region
          %s3371 = sand.u32 %s246, 1
          %s3372 = scalar_lea.sflag [#allocation6], %s3371
          %s3373 = sand.u32 %s246, 1
          %s3374 = smul.addr %s3373, 16
          %s3375 = scalar_lea.vmem [#allocation15], %s3374
          %3376 = dma.done %s3372, 256
        $region96: #{tpu_custom_call.1} parent=91 // pred_fallthru
          _
      $region92: #{tpu_custom_call.1} parent=5 // pred_fallthru
        _
    $region6: #{tpu_custom_call.1} parent=1 // loop_footer
      %s28 = sadd.s32 1, %s24
    $region7: #{tpu_custom_call.1} parent=1 // loop_footer_branch
      %23 = sbr.rel target = $region3
    $region8: #{tpu_custom_call.1} parent=1 // loop_exit
      _
    %3377 = vsyncpa [#allocation5], 1
    %s3378 = scalar_lea.sflag [#allocation5], 1
    %3379 = vsyncpa %s3378, 1
    %3380 = vsyncpa [#allocation8], 1
    %3381 = vsyncpa [#allocation11], 1
    %3382 = vsyncpa [#allocation14], 1
    %3383 = vsyncpa [#allocation6], 1
    %s3384 = scalar_lea.sflag [#allocation6], 1
    %3385 = vsyncpa %s3384, 1

</llo_original>
